<compile_context>
chip_gen: v7x
topology: tpu7x:2x2x1
jax: 0.10.0
libtpu: 0.0.40
codegen_flags: <defaults>
</compile_context>

<pallas_src>
import jax
import jax.numpy as jnp
from jax.experimental import pallas as pl
from jax.experimental.pallas import tpu as pltpu


# -----------------------------------------------------------------------------
# Kernel: one (batch tile, Lout chunk) grid step.
#   grid = (num_batch_tiles, num_chunks), chunk axis is the reduction axis.
# -----------------------------------------------------------------------------
def _ppi_kernel(ids_ref, cemb_ref, cb_ref, w1_ref, b1_ref, w2_ref, b2_ref,
                out_ref, max_ref, fcin_ref):
    K, _, tb, lc = ids_ref.shape          # (K taps, 2 proteins, batch tile, chunk)
    KVp, C = cemb_ref.shape               # merged (tap, vocab+pad) classes x channels
    c = pl.program_id(1)

    @pl.when(c == 0)
    def _():
        # Post-ReLU features are >= 0, so 0 is the exact identity for the max.
        max_ref[...] = jnp.zeros_like(max_ref)

    # Small (1, 1, KVp) iota; ids are already tap-offset (id + k*Vp) in the
    # wrapper, so ONE multi-hot (K hot lanes per position) feeds ONE matmul.
    iota_u = jax.lax.broadcasted_iota(jnp.int32, (1, 1, KVp), 2)

    for p in range(2):                    # protein 1 / protein 2 (static unroll)
        mh = ids_ref[0, p][:, :, None] == iota_u          # (tb, lc, KVp) bool
        for k in range(1, K):
            mh = jnp.logical_or(mh, ids_ref[k, p][:, :, None] == iota_u)
        mh = mh.astype(jnp.bfloat16)      # exact 0/1 in bf16 -> MXU operand

        # Conv1d == multi-hot gather-matmul against the folded conv embeddings.
        y = jax.lax.dot_general(
            mh, cemb_ref[...],
            dimension_numbers=(((2,), (0,)), ((), ())),
            preferred_element_type=jnp.float32)           # (tb, lc, C) f32

        y = jnp.maximum(y + cb_ref[...], 0.0)             # bias + ReLU (f32, VPU)
        max_ref[p] = jnp.maximum(max_ref[p], jnp.max(y, axis=1))   # running max

    @pl.when(c == pl.num_programs(1) - 1)
    def _():
        # feature_fusion == 'concat': write x1|x2 into a (tb, 2C) bf16 scratch
        # so fc1 is a single contraction-128 MXU matmul with the original w1.
        fcin_ref[:, 0:C] = max_ref[0].astype(jnp.bfloat16)
        fcin_ref[:, C:2 * C] = max_ref[1].astype(jnp.bfloat16)

        h = jnp.dot(fcin_ref[...], w1_ref[...],
                    preferred_element_type=jnp.float32) + b1_ref[...]
        h = jnp.maximum(h, 0.0).astype(jnp.bfloat16)
        out_ref[...] = (jnp.dot(h, w2_ref[...],
                                preferred_element_type=jnp.float32)
                        + b2_ref[...])


# -----------------------------------------------------------------------------
# Wrapper: weight folding / id shifting in plain JAX; hot path in the kernel.
# -----------------------------------------------------------------------------
def ppi_seq_model_forward(prot1, prot2, params, *, batch_tile=64, l_chunk=256):
    hp = jax.lax.Precision.HIGHEST

    emb = params["embedding"].astype(jnp.float32)        # (V, E)
    cw = params["conv_w"].astype(jnp.float32)            # (K, E, C)
    cb = params["conv_b"].astype(jnp.float32)            # (1, C)
    w1 = params["fc1_w"].astype(jnp.float32)             # (2C, H)
    b1 = params["fc1_b"].astype(jnp.float32)             # (1, H)
    w2 = params["fc2_w"].astype(jnp.float32)             # (H, NC)
    b2 = params["fc2_b"].astype(jnp.float32)             # (1, NC)

    B, L = prot1.shape
    V, _E = emb.shape
    K, _, C = cw.shape
    H = w1.shape[1]
    NC = w2.shape[1]
    assert L >= K, "sequence shorter than conv kernel"
    Lout = L - K + 1
    Vp = V + 1                       # +1 "pad" class per tap (see pad_row below)
    KVp = K * Vp

    # --- fold embedding through the conv taps and merge taps (tiny) ----------
    conv_emb = jnp.einsum("ve,kec->kvc", emb, cw, precision=hp)       # (K, V, C)
    # Pad class per tap: -1e30 so a padded output position ReLUs to 0 and can
    # never beat the (>= 0) true max.
    pad_row = jnp.full((K, 1, C), -1e30, jnp.float32)
    cemb_flat = jnp.concatenate([conv_emb, pad_row], axis=1)          # (K, Vp, C)
    cemb_flat = cemb_flat.reshape(KVp, C).astype(jnp.bfloat16)        # MXU operand

    # --- tiling ---------------------------------------------------------------
    def rup(a, m):
        return (a + m - 1) // m * m

    B8 = rup(B, 8)
    tb = min(rup(batch_tile, 8), B8)
    if B8 >= 16:                      # >= 2 batch grid steps so both v7x TCs work
        tb = min(tb, rup(pl.cdiv(B8, 2), 8))
    B_pad = rup(B8, tb)
    nb = B_pad // tb

    if Lout <= l_chunk:
        lc, nch = Lout, 1
    else:
        lc = rup(min(l_chunk, Lout), 128)   # 128-aligned chunk when tiling Lout
        nch = pl.cdiv(Lout, lc)
    Lout_pad = lc * nch

    # --- tap-shifted, tap-offset, padded token ids (all tiny int32 XLA ops) ---
    pad_id = V

    def shifted_ids(prot):                                 # (B, L) -> (K, B_pad, Lout_pad)
        prot = prot.astype(jnp.int32)
        taps = jnp.stack([prot[:, k:k + Lout] for k in range(K)], axis=0)
        taps = jnp.pad(taps, ((0, 0), (0, B_pad - B), (0, Lout_pad - Lout)),
                       constant_values=pad_id)
        return taps + (jnp.arange(K, dtype=jnp.int32) * Vp)[:, None, None]

    ids_all = jnp.stack([shifted_ids(prot1), shifted_ids(prot2)], axis=1)
    # ids_all: (K, 2, B_pad, Lout_pad) int32 -- position axis is lane-dense.

    grid = (nb, nch)

    grid_spec = pltpu.PrefetchScalarGridSpec(
        num_scalar_prefetch=0,
        grid=grid,
        in_specs=[
            pl.BlockSpec((K, 2, tb, lc), lambda i, c: (0, 0, i, c)),   # token ids
            pl.BlockSpec((KVp, C), lambda i, c: (0, 0)),               # folded conv
            pl.BlockSpec((1, C), lambda i, c: (0, 0)),                 # conv bias
            pl.BlockSpec((2 * C, H), lambda i, c: (0, 0)),             # fc1 weight
            pl.BlockSpec((1, H), lambda i, c: (0, 0)),                 # fc1 bias
            pl.BlockSpec((H, NC), lambda i, c: (0, 0)),                # fc2 weight
            pl.BlockSpec((1, NC), lambda i, c: (0, 0)),                # fc2 bias
        ],
        out_specs=pl.BlockSpec((tb, NC), lambda i, c: (i, 0)),
        scratch_shapes=[
            pltpu.VMEM((2, tb, C), jnp.float32),      # running max (both proteins)
            pltpu.VMEM((tb, 2 * C), jnp.bfloat16),    # fused [x1 | x2] fc1 input
        ],
    )

    cost = pl.CostEstimate(
        flops=(2 * 2 * B_pad * Lout_pad * KVp * C          # multi-hot conv matmuls
               + 2 * B_pad * (2 * C) * H                   # fc1
               + 2 * B_pad * H * NC),                      # fc2
        transcendentals=0,
        bytes_accessed=(4 * ids_all.size + 2 * cemb_flat.size + 4 * cb.size
                        + 2 * w1.size + 4 * b1.size + 2 * w2.size + 4 * b2.size
                        + 4 * B_pad * NC),
    )

    out = pl.pallas_call(
        _ppi_kernel,
        out_shape=jax.ShapeDtypeStruct((B_pad, NC), jnp.float32),
        grid_spec=grid_spec,
        compiler_params=pltpu.CompilerParams(
            dimension_semantics=("parallel", "arbitrary"),
            vmem_limit_bytes=48 * 1024 * 1024,   # explicit, < v7x 64 MiB physical
        ),
        cost_estimate=cost,
    )(ids_all, cemb_flat, cb,
      w1.astype(jnp.bfloat16), b1, w2.astype(jnp.bfloat16), b2)

    return out[:B]


# -----------------------------------------------------------------------------
# Pure-JAX f32 reference (same math as the PyTorch module).
# -----------------------------------------------------------------------------
def ppi_seq_model_reference(prot1, prot2, params):
    hp = jax.lax.Precision.HIGHEST

    def encode(prot):
        emb = jnp.take(params["embedding"], prot, axis=0)             # (B, L, E)
        K = params["conv_w"].shape[0]
        Lout = emb.shape[1] - K + 1
        acc = jnp.zeros((emb.shape[0], Lout, params["conv_w"].shape[2]),
                        jnp.float32)
        for k in range(K):
            acc = acc + jnp.einsum("ble,ec->blc",
                                   emb[:, k:k + Lout, :],
                                   params["conv_w"][k], precision=hp)
        acc = jnp.maximum(acc + params["conv_b"], 0.0)
        return jnp.max(acc, axis=1)

    x = jnp.concatenate([encode(prot1), encode(prot2)], axis=1)
    h = jnp.maximum(jnp.dot(x, params["fc1_w"], precision=hp)
                    + params["fc1_b"], 0.0)
    return jnp.dot(h, params["fc2_w"], precision=hp) + params["fc2_b"]


if __name__ == "__main__":
    # Small shapes consistent with the module's forward.
    B, L = 2, 16            # batch, sequence length (amino-acid tokens)
    V, E = 26, 32           # vocab size, embedding dim
    K, C = 3, 64            # conv kernel size, encoder output_dim
    H, NC = 32, 2           # MLP hidden dim, num_classes

    key = jax.random.PRNGKey(0)
    ks = jax.random.split(key, 9)

    params = {
        "embedding": jax.random.normal(ks[0], (V, E), jnp.float32) * 0.1,
        "conv_w":    jax.random.normal(ks[1], (K, E, C), jnp.float32) * 0.1,
        "conv_b":    jax.random.normal(ks[2], (1, C), jnp.float32) * 0.1,
        "fc1_w":     jax.random.normal(ks[3], (2 * C, H), jnp.float32) * 0.1,
        "fc1_b":     jax.random.normal(ks[4], (1, H), jnp.float32) * 0.1,
        "fc2_w":     jax.random.normal(ks[5], (H, NC), jnp.float32) * 0.1,
        "fc2_b":     jax.random.normal(ks[6], (1, NC), jnp.float32) * 0.1,
    }

    prot1 = jax.random.randint(ks[7], (B, L), 0, V, dtype=jnp.int32)
    prot2 = jax.random.randint(ks[8], (B, L), 0, V, dtype=jnp.int32)

    out = jax.block_until_ready(ppi_seq_model_forward(prot1, prot2, params))
    ref = jax.block_until_ready(ppi_seq_model_reference(prot1, prot2, params))

    assert out.shape == (B, NC), out.shape
    # Tolerance loosened vs. the f32 reference because conv_emb / fc weights
    # (and pre-MXU activations) take one bf16 rounding; the one-hot selection
    # itself is exact.
    assert jnp.allclose(out, ref, rtol=3e-2, atol=3e-2), (out, ref)

    print("KERNEL_OK")
</pallas_src>

<mosaic_0001>
module attributes {stable_mosaic.version = 11 : i64} {
  func.func @_ppi_kernel(%arg0: i32, %arg1: i32, %arg2: memref<3x2x8x14xi32, #tpu.memory_space<vmem>>, %arg3: memref<81x64xbf16, #tpu.memory_space<vmem>>, %arg4: memref<1x64xf32, #tpu.memory_space<vmem>>, %arg5: memref<128x32xbf16, #tpu.memory_space<vmem>>, %arg6: memref<1x32xf32, #tpu.memory_space<vmem>>, %arg7: memref<32x2xbf16, #tpu.memory_space<vmem>>, %arg8: memref<1x2xf32, #tpu.memory_space<vmem>>, %arg9: memref<8x2xf32, #tpu.memory_space<vmem>>, %arg10: memref<2x8x64xf32, #tpu.memory_space<vmem>>, %arg11: memref<8x128xbf16, #tpu.memory_space<vmem>>) attributes {dimension_semantics = [#tpu.dimension_semantics<parallel>, #tpu.dimension_semantics<arbitrary>], iteration_bounds = array<i64: 1, 1>, scalar_prefetch = 0 : i64, scratch_operands = 2 : i64, tpu.core_type = #tpu.core_type<tc>, window_params = [{transform_indices = @transform_0, window_bounds = array<i64: 3, 2, 8, 14>}, {pipeline_mode = #tpu.pipeline_mode<synchronous>, transform_indices = @transform_1, window_bounds = array<i64: 81, 64>}, {pipeline_mode = #tpu.pipeline_mode<synchronous>, transform_indices = @transform_2, window_bounds = array<i64: 1, 64>}, {pipeline_mode = #tpu.pipeline_mode<synchronous>, transform_indices = @transform_3, window_bounds = array<i64: 128, 32>}, {pipeline_mode = #tpu.pipeline_mode<synchronous>, transform_indices = @transform_4, window_bounds = array<i64: 1, 32>}, {pipeline_mode = #tpu.pipeline_mode<synchronous>, transform_indices = @transform_5, window_bounds = array<i64: 32, 2>}, {pipeline_mode = #tpu.pipeline_mode<synchronous>, transform_indices = @transform_6, window_bounds = array<i64: 1, 2>}, {transform_indices = @transform_7, window_bounds = array<i64: 8, 2>}]} {
    %c0_i32 = arith.constant 0 : i32
    %0 = arith.cmpi eq, %arg1, %c0_i32 : i32
    %1 = arith.extui %0 : i1 to i32
    %c0_i32_0 = arith.constant 0 : i32
    %2 = arith.cmpi ne, %1, %c0_i32_0 : i32
    scf.if %2 {
      %cst_49 = arith.constant 0.000000e+00 : f32
      %83 = vector.broadcast %cst_49 : f32 to vector<2x8x64xf32>
      %c0_50 = arith.constant 0 : index
      %c0_51 = arith.constant 0 : index
      %c0_52 = arith.constant 0 : index
      %84 = vector.load %arg10[%c0_50, %c0_51, %c0_52] : memref<2x8x64xf32, #tpu.memory_space<vmem>>, vector<2x8x64xf32>
      tpu.vector_store %arg10[%c0_50, %c0_51, %c0_52], %83 {strides = array<i32>} : memref<2x8x64xf32, #tpu.memory_space<vmem>>, vector<2x8x64xf32>,
    } else {
    }
    %3 = tpu.iota {dimensions = array<i32: 2>} : vector<1x1x81xi32>
    %c0 = arith.constant 0 : index
    %c0_1 = arith.constant 0 : index
    %c0_2 = arith.constant 0 : index
    %c0_3 = arith.constant 0 : index
    %4 = vector.load %arg2[%c0, %c0_1, %c0_2, %c0_3] : memref<3x2x8x14xi32, #tpu.memory_space<vmem>>, vector<1x1x8x14xi32>
    %5 = vector.shape_cast %4 : vector<1x1x8x14xi32> to vector<8x14xi32>
    %6 = vector.shape_cast %5 : vector<8x14xi32> to vector<8x14x1xi32>
    %7 = vector.broadcast %6 : vector<8x14x1xi32> to vector<8x14x81xi32>
    %8 = vector.broadcast %3 : vector<1x1x81xi32> to vector<8x14x81xi32>
    %9 = arith.cmpi eq, %7, %8 : vector<8x14x81xi32>
    %c1 = arith.constant 1 : index
    %c0_4 = arith.constant 0 : index
    %c0_5 = arith.constant 0 : index
    %c0_6 = arith.constant 0 : index
    %10 = vector.load %arg2[%c1, %c0_4, %c0_5, %c0_6] : memref<3x2x8x14xi32, #tpu.memory_space<vmem>>, vector<1x1x8x14xi32>
    %11 = vector.shape_cast %10 : vector<1x1x8x14xi32> to vector<8x14xi32>
    %12 = vector.shape_cast %11 : vector<8x14xi32> to vector<8x14x1xi32>
    %13 = vector.broadcast %12 : vector<8x14x1xi32> to vector<8x14x81xi32>
    %14 = vector.broadcast %3 : vector<1x1x81xi32> to vector<8x14x81xi32>
    %15 = arith.cmpi eq, %13, %14 : vector<8x14x81xi32>
    %16 = arith.ori %9, %15 : vector<8x14x81xi1>
    %c2 = arith.constant 2 : index
    %c0_7 = arith.constant 0 : index
    %c0_8 = arith.constant 0 : index
    %c0_9 = arith.constant 0 : index
    %17 = vector.load %arg2[%c2, %c0_7, %c0_8, %c0_9] : memref<3x2x8x14xi32, #tpu.memory_space<vmem>>, vector<1x1x8x14xi32>
    %18 = vector.shape_cast %17 : vector<1x1x8x14xi32> to vector<8x14xi32>
    %19 = vector.shape_cast %18 : vector<8x14xi32> to vector<8x14x1xi32>
    %20 = vector.broadcast %19 : vector<8x14x1xi32> to vector<8x14x81xi32>
    %21 = vector.broadcast %3 : vector<1x1x81xi32> to vector<8x14x81xi32>
    %22 = arith.cmpi eq, %20, %21 : vector<8x14x81xi32>
    %23 = arith.ori %16, %22 : vector<8x14x81xi1>
    %24 = arith.extui %23 : vector<8x14x81xi1> to vector<8x14x81xi32>
    %25 = arith.sitofp %24 : vector<8x14x81xi32> to vector<8x14x81xf32>
    %26 = arith.truncf %25 : vector<8x14x81xf32> to vector<8x14x81xbf16>
    %c0_10 = arith.constant 0 : index
    %c0_11 = arith.constant 0 : index
    %27 = vector.load %arg3[%c0_10, %c0_11] : memref<81x64xbf16, #tpu.memory_space<vmem>>, vector<81x64xbf16>
    %cst = arith.constant dense<0.000000e+00> : vector<8x14x64xf32>
    %28 = tpu.matmul %26, %27, %cst {dimension_numbers = #tpu.dot_dimension_numbers<[2], [0], [0, 1], [1], [0, 0, 0, 1, 1, 1], [], []>} : vector<8x14x81xbf16>, vector<81x64xbf16>, vector<8x14x64xf32> -> vector<8x14x64xf32>
    %c0_12 = arith.constant 0 : index
    %c0_13 = arith.constant 0 : index
    %29 = vector.load %arg4[%c0_12, %c0_13] : memref<1x64xf32, #tpu.memory_space<vmem>>, vector<1x64xf32>
    %30 = vector.shape_cast %29 : vector<1x64xf32> to vector<1x1x64xf32>
    %31 = vector.broadcast %30 : vector<1x1x64xf32> to vector<8x14x64xf32>
    %32 = arith.addf %28, %31 : vector<8x14x64xf32>
    %cst_14 = arith.constant 0.000000e+00 : f32
    %33 = vector.broadcast %cst_14 : f32 to vector<8x14x64xf32>
    %34 = arith.maximumf %32, %33 : vector<8x14x64xf32>
    %c0_15 = arith.constant 0 : index
    %c0_16 = arith.constant 0 : index
    %c0_17 = arith.constant 0 : index
    %35 = vector.load %arg10[%c0_15, %c0_16, %c0_17] : memref<2x8x64xf32, #tpu.memory_space<vmem>>, vector<1x8x64xf32>
    %36 = vector.shape_cast %35 : vector<1x8x64xf32> to vector<8x64xf32>
    %cst_18 = arith.constant dense<0xFF800000> : vector<8x64xf32>
    %37 = vector.multi_reduction <maximumf>, %34, %cst_18 [1] : vector<8x14x64xf32> to vector<8x64xf32>
    %38 = arith.maximumf %36, %37 : vector<8x64xf32>
    %c0_19 = arith.constant 0 : index
    %c0_20 = arith.constant 0 : index
    %c0_21 = arith.constant 0 : index
    %39 = vector.load %arg10[%c0_19, %c0_20, %c0_21] : memref<2x8x64xf32, #tpu.memory_space<vmem>>, vector<1x8x64xf32>
    %40 = vector.shape_cast %39 : vector<1x8x64xf32> to vector<8x64xf32>
    %41 = vector.shape_cast %38 : vector<8x64xf32> to vector<1x8x64xf32>
    tpu.vector_store %arg10[%c0_19, %c0_20, %c0_21], %41 {strides = array<i32>} : memref<2x8x64xf32, #tpu.memory_space<vmem>>, vector<1x8x64xf32>,
    %c0_22 = arith.constant 0 : index
    %c1_23 = arith.constant 1 : index
    %c0_24 = arith.constant 0 : index
    %c0_25 = arith.constant 0 : index
    %42 = vector.load %arg2[%c0_22, %c1_23, %c0_24, %c0_25] : memref<3x2x8x14xi32, #tpu.memory_space<vmem>>, vector<1x1x8x14xi32>
    %43 = vector.shape_cast %42 : vector<1x1x8x14xi32> to vector<8x14xi32>
    %44 = vector.shape_cast %43 : vector<8x14xi32> to vector<8x14x1xi32>
    %45 = vector.broadcast %44 : vector<8x14x1xi32> to vector<8x14x81xi32>
    %46 = vector.broadcast %3 : vector<1x1x81xi32> to vector<8x14x81xi32>
    %47 = arith.cmpi eq, %45, %46 : vector<8x14x81xi32>
    %c1_26 = arith.constant 1 : index
    %c1_27 = arith.constant 1 : index
    %c0_28 = arith.constant 0 : index
    %c0_29 = arith.constant 0 : index
    %48 = vector.load %arg2[%c1_26, %c1_27, %c0_28, %c0_29] : memref<3x2x8x14xi32, #tpu.memory_space<vmem>>, vector<1x1x8x14xi32>
    %49 = vector.shape_cast %48 : vector<1x1x8x14xi32> to vector<8x14xi32>
    %50 = vector.shape_cast %49 : vector<8x14xi32> to vector<8x14x1xi32>
    %51 = vector.broadcast %50 : vector<8x14x1xi32> to vector<8x14x81xi32>
    %52 = vector.broadcast %3 : vector<1x1x81xi32> to vector<8x14x81xi32>
    %53 = arith.cmpi eq, %51, %52 : vector<8x14x81xi32>
    %54 = arith.ori %47, %53 : vector<8x14x81xi1>
    %c2_30 = arith.constant 2 : index
    %c1_31 = arith.constant 1 : index
    %c0_32 = arith.constant 0 : index
    %c0_33 = arith.constant 0 : index
    %55 = vector.load %arg2[%c2_30, %c1_31, %c0_32, %c0_33] : memref<3x2x8x14xi32, #tpu.memory_space<vmem>>, vector<1x1x8x14xi32>
    %56 = vector.shape_cast %55 : vector<1x1x8x14xi32> to vector<8x14xi32>
    %57 = vector.shape_cast %56 : vector<8x14xi32> to vector<8x14x1xi32>
    %58 = vector.broadcast %57 : vector<8x14x1xi32> to vector<8x14x81xi32>
    %59 = vector.broadcast %3 : vector<1x1x81xi32> to vector<8x14x81xi32>
    %60 = arith.cmpi eq, %58, %59 : vector<8x14x81xi32>
    %61 = arith.ori %54, %60 : vector<8x14x81xi1>
    %62 = arith.extui %61 : vector<8x14x81xi1> to vector<8x14x81xi32>
    %63 = arith.sitofp %62 : vector<8x14x81xi32> to vector<8x14x81xf32>
    %64 = arith.truncf %63 : vector<8x14x81xf32> to vector<8x14x81xbf16>
    %c0_34 = arith.constant 0 : index
    %c0_35 = arith.constant 0 : index
    %65 = vector.load %arg3[%c0_34, %c0_35] : memref<81x64xbf16, #tpu.memory_space<vmem>>, vector<81x64xbf16>
    %cst_36 = arith.constant dense<0.000000e+00> : vector<8x14x64xf32>
    %66 = tpu.matmul %64, %65, %cst_36 {dimension_numbers = #tpu.dot_dimension_numbers<[2], [0], [0, 1], [1], [0, 0, 0, 1, 1, 1], [], []>} : vector<8x14x81xbf16>, vector<81x64xbf16>, vector<8x14x64xf32> -> vector<8x14x64xf32>
    %c0_37 = arith.constant 0 : index
    %c0_38 = arith.constant 0 : index
    %67 = vector.load %arg4[%c0_37, %c0_38] : memref<1x64xf32, #tpu.memory_space<vmem>>, vector<1x64xf32>
    %68 = vector.shape_cast %67 : vector<1x64xf32> to vector<1x1x64xf32>
    %69 = vector.broadcast %68 : vector<1x1x64xf32> to vector<8x14x64xf32>
    %70 = arith.addf %66, %69 : vector<8x14x64xf32>
    %cst_39 = arith.constant 0.000000e+00 : f32
    %71 = vector.broadcast %cst_39 : f32 to vector<8x14x64xf32>
    %72 = arith.maximumf %70, %71 : vector<8x14x64xf32>
    %c1_40 = arith.constant 1 : index
    %c0_41 = arith.constant 0 : index
    %c0_42 = arith.constant 0 : index
    %73 = vector.load %arg10[%c1_40, %c0_41, %c0_42] : memref<2x8x64xf32, #tpu.memory_space<vmem>>, vector<1x8x64xf32>
    %74 = vector.shape_cast %73 : vector<1x8x64xf32> to vector<8x64xf32>
    %cst_43 = arith.constant dense<0xFF800000> : vector<8x64xf32>
    %75 = vector.multi_reduction <maximumf>, %72, %cst_43 [1] : vector<8x14x64xf32> to vector<8x64xf32>
    %76 = arith.maximumf %74, %75 : vector<8x64xf32>
    %c1_44 = arith.constant 1 : index
    %c0_45 = arith.constant 0 : index
    %c0_46 = arith.constant 0 : index
    %77 = vector.load %arg10[%c1_44, %c0_45, %c0_46] : memref<2x8x64xf32, #tpu.memory_space<vmem>>, vector<1x8x64xf32>
    %78 = vector.shape_cast %77 : vector<1x8x64xf32> to vector<8x64xf32>
    %79 = vector.shape_cast %76 : vector<8x64xf32> to vector<1x8x64xf32>
    tpu.vector_store %arg10[%c1_44, %c0_45, %c0_46], %79 {strides = array<i32>} : memref<2x8x64xf32, #tpu.memory_space<vmem>>, vector<1x8x64xf32>,
    %c0_i32_47 = arith.constant 0 : i32
    %80 = arith.cmpi eq, %arg1, %c0_i32_47 : i32
    %81 = arith.extui %80 : i1 to i32
    %c0_i32_48 = arith.constant 0 : i32
    %82 = arith.cmpi ne, %81, %c0_i32_48 : i32
    scf.if %82 {
      %c0_49 = arith.constant 0 : index
      %c0_50 = arith.constant 0 : index
      %c0_51 = arith.constant 0 : index
      %83 = vector.load %arg10[%c0_49, %c0_50, %c0_51] : memref<2x8x64xf32, #tpu.memory_space<vmem>>, vector<1x8x64xf32>
      %84 = vector.shape_cast %83 : vector<1x8x64xf32> to vector<8x64xf32>
      %85 = arith.truncf %84 : vector<8x64xf32> to vector<8x64xbf16>
      %c0_52 = arith.constant 0 : index
      %c0_53 = arith.constant 0 : index
      %86 = vector.load %arg11[%c0_52, %c0_53] : memref<8x128xbf16, #tpu.memory_space<vmem>>, vector<8x64xbf16>
      tpu.vector_store %arg11[%c0_52, %c0_53], %85 {strides = array<i32>} : memref<8x128xbf16, #tpu.memory_space<vmem>>, vector<8x64xbf16>,
      %c1_54 = arith.constant 1 : index
      %c0_55 = arith.constant 0 : index
      %c0_56 = arith.constant 0 : index
      %87 = vector.load %arg10[%c1_54, %c0_55, %c0_56] : memref<2x8x64xf32, #tpu.memory_space<vmem>>, vector<1x8x64xf32>
      %88 = vector.shape_cast %87 : vector<1x8x64xf32> to vector<8x64xf32>
      %89 = arith.truncf %88 : vector<8x64xf32> to vector<8x64xbf16>
      %c0_57 = arith.constant 0 : index
      %c64 = arith.constant 64 : index
      %90 = vector.load %arg11[%c0_57, %c64] : memref<8x128xbf16, #tpu.memory_space<vmem>>, vector<8x64xbf16>
      tpu.vector_store %arg11[%c0_57, %c64], %89 {strides = array<i32>} : memref<8x128xbf16, #tpu.memory_space<vmem>>, vector<8x64xbf16>,
      %c0_58 = arith.constant 0 : index
      %c0_59 = arith.constant 0 : index
      %91 = vector.load %arg11[%c0_58, %c0_59] : memref<8x128xbf16, #tpu.memory_space<vmem>>, vector<8x128xbf16>
      %c0_60 = arith.constant 0 : index
      %c0_61 = arith.constant 0 : index
      %92 = vector.load %arg5[%c0_60, %c0_61] : memref<128x32xbf16, #tpu.memory_space<vmem>>, vector<128x32xbf16>
      %cst_62 = arith.constant dense<0.000000e+00> : vector<8x32xf32>
      %93 = tpu.matmul %91, %92, %cst_62 {dimension_numbers = #tpu.dot_dimension_numbers<[1], [0], [0], [1], [0, 0, 1, 1], [], []>} : vector<8x128xbf16>, vector<128x32xbf16>, vector<8x32xf32> -> vector<8x32xf32>
      %c0_63 = arith.constant 0 : index
      %c0_64 = arith.constant 0 : index
      %94 = vector.load %arg6[%c0_63, %c0_64] : memref<1x32xf32, #tpu.memory_space<vmem>>, vector<1x32xf32>
      %95 = vector.broadcast %94 : vector<1x32xf32> to vector<8x32xf32>
      %96 = arith.addf %93, %95 : vector<8x32xf32>
      %cst_65 = arith.constant 0.000000e+00 : f32
      %97 = vector.broadcast %cst_65 : f32 to vector<8x32xf32>
      %98 = arith.maximumf %96, %97 : vector<8x32xf32>
      %99 = arith.truncf %98 : vector<8x32xf32> to vector<8x32xbf16>
      %c0_66 = arith.constant 0 : index
      %c0_67 = arith.constant 0 : index
      %100 = vector.load %arg7[%c0_66, %c0_67] : memref<32x2xbf16, #tpu.memory_space<vmem>>, vector<32x2xbf16>
      %cst_68 = arith.constant dense<0.000000e+00> : vector<8x2xf32>
      %101 = tpu.matmul %99, %100, %cst_68 {dimension_numbers = #tpu.dot_dimension_numbers<[1], [0], [0], [1], [0, 0, 1, 1], [], []>} : vector<8x32xbf16>, vector<32x2xbf16>, vector<8x2xf32> -> vector<8x2xf32>
      %c0_69 = arith.constant 0 : index
      %c0_70 = arith.constant 0 : index
      %102 = vector.load %arg8[%c0_69, %c0_70] : memref<1x2xf32, #tpu.memory_space<vmem>>, vector<1x2xf32>
      %103 = vector.broadcast %102 : vector<1x2xf32> to vector<8x2xf32>
      %104 = arith.addf %101, %103 : vector<8x2xf32>
      %c0_71 = arith.constant 0 : index
      %c0_72 = arith.constant 0 : index
      %105 = vector.load %arg9[%c0_71, %c0_72] : memref<8x2xf32, #tpu.memory_space<vmem>>, vector<8x2xf32>
      tpu.vector_store %arg9[%c0_71, %c0_72], %104 {strides = array<i32>} : memref<8x2xf32, #tpu.memory_space<vmem>>, vector<8x2xf32>,
    } else {
    }
    return
  }
  func.func @transform_0(%arg0: i32, %arg1: i32) -> (i32, i32, i32, i32) {
    %c0_i32 = arith.constant 0 : i32
    %c0_i32_0 = arith.constant 0 : i32
    %c0_i32_1 = arith.constant 0 : i32
    return %c0_i32, %c0_i32_0, %arg0, %arg1 : i32, i32, i32, i32
  }
  func.func @transform_1(%arg0: i32, %arg1: i32) -> (i32, i32) {
    %c0_i32 = arith.constant 0 : i32
    %c0_i32_0 = arith.constant 0 : i32
    %c0_i32_1 = arith.constant 0 : i32
    return %c0_i32, %c0_i32_0 : i32, i32
  }
  func.func @transform_2(%arg0: i32, %arg1: i32) -> (i32, i32) {
    %c0_i32 = arith.constant 0 : i32
    %c0_i32_0 = arith.constant 0 : i32
    %c0_i32_1 = arith.constant 0 : i32
    return %c0_i32, %c0_i32_0 : i32, i32
  }
  func.func @transform_3(%arg0: i32, %arg1: i32) -> (i32, i32) {
    %c0_i32 = arith.constant 0 : i32
    %c0_i32_0 = arith.constant 0 : i32
    %c0_i32_1 = arith.constant 0 : i32
    return %c0_i32, %c0_i32_0 : i32, i32
  }
  func.func @transform_4(%arg0: i32, %arg1: i32) -> (i32, i32) {
    %c0_i32 = arith.constant 0 : i32
    %c0_i32_0 = arith.constant 0 : i32
    %c0_i32_1 = arith.constant 0 : i32
    return %c0_i32, %c0_i32_0 : i32, i32
  }
  func.func @transform_5(%arg0: i32, %arg1: i32) -> (i32, i32) {
    %c0_i32 = arith.constant 0 : i32
    %c0_i32_0 = arith.constant 0 : i32
    %c0_i32_1 = arith.constant 0 : i32
    return %c0_i32, %c0_i32_0 : i32, i32
  }
  func.func @transform_6(%arg0: i32, %arg1: i32) -> (i32, i32) {
    %c0_i32 = arith.constant 0 : i32
    %c0_i32_0 = arith.constant 0 : i32
    %c0_i32_1 = arith.constant 0 : i32
    return %c0_i32, %c0_i32_0 : i32, i32
  }
  func.func @transform_7(%arg0: i32, %arg1: i32) -> (i32, i32) {
    %c0_i32 = arith.constant 0 : i32
    %c0_i32_0 = arith.constant 0 : i32
    return %arg0, %c0_i32 : i32, i32
  }
}

</mosaic_0001>

<llo_original>
// kernel: tpu_custom_call.1
$region0: #{tpu_custom_call.1}
  #allocation0 [shape = 'u32[]', space=smem, size = 0x4, offset = 0x4, fixed_abs, tag = 'smem constant byte address 0x4 - core index']
  #allocation1 [shape = 'u32[144,128]{1,0:T(1,128)}', space=vmem, size = 0x12000, scoped, tag = 'internal scratch']
  #allocation2 [shape = 'f32[2,8,64]{2,1,0:T(8,128)}', space=vmem, size = 0x2000, scoped, tag = 'scratch operand']
  #allocation3 [shape = 'bf16[8,128]{1,0:T(8,128)(2,1)}', space=vmem, size = 0x800, scoped, tag = 'scratch operand']
  %s0 = inlined_call_operand.vmem [shape: s32[3,2,8,14], index: 0, kind: input, shape index: {}]
  %s1 = inlined_call_operand.vmem [shape: bf16[81,64], index: 1, kind: input, shape index: {}]
  %s2 = inlined_call_operand.vmem [shape: f32[1,64], index: 2, kind: input, shape index: {}]
  %s3 = inlined_call_operand.vmem [shape: bf16[128,32], index: 3, kind: input, shape index: {}]
  %s4 = inlined_call_operand.vmem [shape: f32[1,32], index: 4, kind: input, shape index: {}]
  %s5 = inlined_call_operand.vmem [shape: bf16[32,2], index: 5, kind: input, shape index: {}]
  %s6 = inlined_call_operand.vmem [shape: f32[1,2], index: 6, kind: input, shape index: {}]
  %s7 = inlined_call_operand.vmem [shape: f32[8,2], index: 7, kind: output, shape index: {}]
  %s8 = sld [smem:[#allocation0]]
  $region46: #{tpu_custom_call.1} parent=0
    _
  %s10 = ssub.s32 1, %s8
  %s11 = scalar_select 0, %s10, %s8
  // Predicated region
  $region2: #{tpu_custom_call.1} parent=0 // pred_check
    _
  $region3: #{tpu_custom_call.1} parent=0 // pred_check_branch
    %13 = sbr.rel (0) target = $region5
  $region4: #{tpu_custom_call.1} parent=0 // pred_region
    _
  $region5: #{tpu_custom_call.1} parent=0 // pred_fallthru
    _
  // Predicated region
  $region6: #{tpu_custom_call.1} parent=0 // pred_check
    _
  $region7: #{tpu_custom_call.1} parent=0 // pred_check_branch
    %15 = sbr.rel (0) target = $region9
  $region8: #{tpu_custom_call.1} parent=0 // pred_region
    _
  $region9: #{tpu_custom_call.1} parent=0 // pred_fallthru
    _
  // Predicated region
  $region10: #{tpu_custom_call.1} parent=0 // pred_check
    _
  $region11: #{tpu_custom_call.1} parent=0 // pred_check_branch
    %17 = sbr.rel (0) target = $region13
  $region12: #{tpu_custom_call.1} parent=0 // pred_region
    _
  $region13: #{tpu_custom_call.1} parent=0 // pred_fallthru
    _
  // Predicated region
  $region14: #{tpu_custom_call.1} parent=0 // pred_check
    _
  $region15: #{tpu_custom_call.1} parent=0 // pred_check_branch
    %19 = sbr.rel (0) target = $region17
  $region16: #{tpu_custom_call.1} parent=0 // pred_region
    _
  $region17: #{tpu_custom_call.1} parent=0 // pred_fallthru
    _
  // Predicated region
  $region18: #{tpu_custom_call.1} parent=0 // pred_check
    _
  $region19: #{tpu_custom_call.1} parent=0 // pred_check_branch
    %21 = sbr.rel (0) target = $region21
  $region20: #{tpu_custom_call.1} parent=0 // pred_region
    _
  $region21: #{tpu_custom_call.1} parent=0 // pred_fallthru
    _
  // Predicated region
  $region22: #{tpu_custom_call.1} parent=0 // pred_check
    _
  $region23: #{tpu_custom_call.1} parent=0 // pred_check_branch
    %23 = sbr.rel (0) target = $region25
  $region24: #{tpu_custom_call.1} parent=0 // pred_region
    _
  $region25: #{tpu_custom_call.1} parent=0 // pred_fallthru
    _
  // Predicated region
  $region26: #{tpu_custom_call.1} parent=0 // pred_check
    _
  $region27: #{tpu_custom_call.1} parent=0 // pred_check_branch
    %25 = sbr.rel (0) target = $region29
  $region28: #{tpu_custom_call.1} parent=0 // pred_region
    _
  $region29: #{tpu_custom_call.1} parent=0 // pred_fallthru
    _
  %p27 = scmp.eq.s32.totalorder 0, 0
  // Predicated region
  $region30: #{tpu_custom_call.1} parent=0 // pred_check
    %p28 = pneg %p27
  $region31: #{tpu_custom_call.1} parent=0 // pred_check_branch
    %30 = sbr.rel (%p28) target = $region33
  $region32: #{tpu_custom_call.1} parent=0 // pred_region
    %vm31 = vcmask 523264
    %32 = vst.msk [vmem:[#allocation2] sm:$0xff] %vm31, 0.0
    %33 = vst.msk [vmem:[#allocation2 + $0x8] sm:$0xff] %vm31, 0.0
  $region33: #{tpu_custom_call.1} parent=0 // pred_fallthru
    _
  %v34 = vlaneseq
  %v35 = vand.u32 %v34, 127
  %v36 = vld [vmem:[%s0] sm:$0xff]
  %v37 = vlaneseq
  %v38 = vshrl.u32 %v37, 7
  %v39 = vsub.s32 0, %v38
  %v40 = vrot.slane %v36, %v39
  %42 = vbcast.lane.b32.xlu0 %v40, 256
  %v43 = vpop.permute.xlu0 %42
  %s45 = sor.u32 256, 8
  %46 = vbcast.lane.b32.xlu0 %v40, %s45
  %v47 = vpop.permute.xlu0 %46
  %v48 = vlaneseq
  %v49 = vshrl.u32 %v48, 7
  %v50 = vsub.s32 1, %v49
  %v51 = vrot.slane %v36, %v50
  %53 = vbcast.lane.b32.xlu0 %v51, 256
  %v54 = vpop.permute.xlu0 %53
  %s56 = sor.u32 256, 8
  %57 = vbcast.lane.b32.xlu0 %v51, %s56
  %v58 = vpop.permute.xlu0 %57
  %v59 = vlaneseq
  %v60 = vshrl.u32 %v59, 7
  %v61 = vsub.s32 2, %v60
  %v62 = vrot.slane %v36, %v61
  %64 = vbcast.lane.b32.xlu0 %v62, 256
  %v65 = vpop.permute.xlu0 %64
  %s67 = sor.u32 256, 8
  %68 = vbcast.lane.b32.xlu0 %v62, %s67
  %v69 = vpop.permute.xlu0 %68
  %v70 = vlaneseq
  %v71 = vshrl.u32 %v70, 7
  %v72 = vsub.s32 3, %v71
  %v73 = vrot.slane %v36, %v72
  %75 = vbcast.lane.b32.xlu0 %v73, 256
  %v76 = vpop.permute.xlu0 %75
  %s78 = sor.u32 256, 8
  %79 = vbcast.lane.b32.xlu0 %v73, %s78
  %v80 = vpop.permute.xlu0 %79
  %v81 = vlaneseq
  %v82 = vshrl.u32 %v81, 7
  %v83 = vsub.s32 4, %v82
  %v84 = vrot.slane %v36, %v83
  %86 = vbcast.lane.b32.xlu0 %v84, 256
  %v87 = vpop.permute.xlu0 %86
  %s89 = sor.u32 256, 8
  %90 = vbcast.lane.b32.xlu0 %v84, %s89
  %v91 = vpop.permute.xlu0 %90
  %v92 = vlaneseq
  %v93 = vshrl.u32 %v92, 7
  %v94 = vsub.s32 5, %v93
  %v95 = vrot.slane %v36, %v94
  %97 = vbcast.lane.b32.xlu0 %v95, 256
  %v98 = vpop.permute.xlu0 %97
  %s100 = sor.u32 256, 8
  %101 = vbcast.lane.b32.xlu0 %v95, %s100
  %v102 = vpop.permute.xlu0 %101
  %v103 = vlaneseq
  %v104 = vshrl.u32 %v103, 7
  %v105 = vsub.s32 6, %v104
  %v106 = vrot.slane %v36, %v105
  %108 = vbcast.lane.b32.xlu0 %v106, 256
  %v109 = vpop.permute.xlu0 %108
  %s111 = sor.u32 256, 8
  %112 = vbcast.lane.b32.xlu0 %v106, %s111
  %v113 = vpop.permute.xlu0 %112
  %v114 = vlaneseq
  %v115 = vshrl.u32 %v114, 7
  %v116 = vsub.s32 7, %v115
  %v117 = vrot.slane %v36, %v116
  %119 = vbcast.lane.b32.xlu0 %v117, 256
  %v120 = vpop.permute.xlu0 %119
  %s122 = sor.u32 256, 8
  %123 = vbcast.lane.b32.xlu0 %v117, %s122
  %v124 = vpop.permute.xlu0 %123
  %vm125 = vcmp.eq.s32.totalorder %v43, %v35
  %vm126 = vcmp.eq.s32.totalorder %v47, %v35
  %vm127 = vcmp.eq.s32.totalorder %v54, %v35
  %vm128 = vcmp.eq.s32.totalorder %v58, %v35
  %vm129 = vcmp.eq.s32.totalorder %v65, %v35
  %vm130 = vcmp.eq.s32.totalorder %v69, %v35
  %vm131 = vcmp.eq.s32.totalorder %v76, %v35
  %vm132 = vcmp.eq.s32.totalorder %v80, %v35
  %vm133 = vcmp.eq.s32.totalorder %v87, %v35
  %vm134 = vcmp.eq.s32.totalorder %v91, %v35
  %vm135 = vcmp.eq.s32.totalorder %v98, %v35
  %vm136 = vcmp.eq.s32.totalorder %v102, %v35
  %vm137 = vcmp.eq.s32.totalorder %v109, %v35
  %vm138 = vcmp.eq.s32.totalorder %v113, %v35
  %vm139 = vcmp.eq.s32.totalorder %v120, %v35
  %vm140 = vcmp.eq.s32.totalorder %v124, %v35
  %s141 = scalar_lea.vmem %s0, 16
  %v142 = vld [vmem:[%s141] sm:$0xff]
  %v143 = vlaneseq
  %v144 = vshrl.u32 %v143, 7
  %v145 = vsub.s32 0, %v144
  %v146 = vrot.slane %v142, %v145
  %148 = vbcast.lane.b32.xlu0 %v146, 256
  %v149 = vpop.permute.xlu0 %148
  %s151 = sor.u32 256, 8
  %152 = vbcast.lane.b32.xlu0 %v146, %s151
  %v153 = vpop.permute.xlu0 %152
  %v154 = vlaneseq
  %v155 = vshrl.u32 %v154, 7
  %v156 = vsub.s32 1, %v155
  %v157 = vrot.slane %v142, %v156
  %159 = vbcast.lane.b32.xlu0 %v157, 256
  %v160 = vpop.permute.xlu0 %159
  %s162 = sor.u32 256, 8
  %163 = vbcast.lane.b32.xlu0 %v157, %s162
  %v164 = vpop.permute.xlu0 %163
  %v165 = vlaneseq
  %v166 = vshrl.u32 %v165, 7
  %v167 = vsub.s32 2, %v166
  %v168 = vrot.slane %v142, %v167
  %170 = vbcast.lane.b32.xlu0 %v168, 256
  %v171 = vpop.permute.xlu0 %170
  %s173 = sor.u32 256, 8
  %174 = vbcast.lane.b32.xlu0 %v168, %s173
  %v175 = vpop.permute.xlu0 %174
  %v176 = vlaneseq
  %v177 = vshrl.u32 %v176, 7
  %v178 = vsub.s32 3, %v177
  %v179 = vrot.slane %v142, %v178
  %181 = vbcast.lane.b32.xlu0 %v179, 256
  %v182 = vpop.permute.xlu0 %181
  %s184 = sor.u32 256, 8
  %185 = vbcast.lane.b32.xlu0 %v179, %s184
  %v186 = vpop.permute.xlu0 %185
  %v187 = vlaneseq
  %v188 = vshrl.u32 %v187, 7
  %v189 = vsub.s32 4, %v188
  %v190 = vrot.slane %v142, %v189
  %192 = vbcast.lane.b32.xlu0 %v190, 256
  %v193 = vpop.permute.xlu0 %192
  %s195 = sor.u32 256, 8
  %196 = vbcast.lane.b32.xlu0 %v190, %s195
  %v197 = vpop.permute.xlu0 %196
  %v198 = vlaneseq
  %v199 = vshrl.u32 %v198, 7
  %v200 = vsub.s32 5, %v199
  %v201 = vrot.slane %v142, %v200
  %203 = vbcast.lane.b32.xlu0 %v201, 256
  %v204 = vpop.permute.xlu0 %203
  %s206 = sor.u32 256, 8
  %207 = vbcast.lane.b32.xlu0 %v201, %s206
  %v208 = vpop.permute.xlu0 %207
  %v209 = vlaneseq
  %v210 = vshrl.u32 %v209, 7
  %v211 = vsub.s32 6, %v210
  %v212 = vrot.slane %v142, %v211
  %214 = vbcast.lane.b32.xlu0 %v212, 256
  %v215 = vpop.permute.xlu0 %214
  %s217 = sor.u32 256, 8
  %218 = vbcast.lane.b32.xlu0 %v212, %s217
  %v219 = vpop.permute.xlu0 %218
  %v220 = vlaneseq
  %v221 = vshrl.u32 %v220, 7
  %v222 = vsub.s32 7, %v221
  %v223 = vrot.slane %v142, %v222
  %225 = vbcast.lane.b32.xlu0 %v223, 256
  %v226 = vpop.permute.xlu0 %225
  %s228 = sor.u32 256, 8
  %229 = vbcast.lane.b32.xlu0 %v223, %s228
  %v230 = vpop.permute.xlu0 %229
  %vm231 = vcmp.eq.s32.totalorder %v149, %v35
  %vm232 = vcmp.eq.s32.totalorder %v153, %v35
  %vm233 = vcmp.eq.s32.totalorder %v160, %v35
  %vm234 = vcmp.eq.s32.totalorder %v164, %v35
  %vm235 = vcmp.eq.s32.totalorder %v171, %v35
  %vm236 = vcmp.eq.s32.totalorder %v175, %v35
  %vm237 = vcmp.eq.s32.totalorder %v182, %v35
  %vm238 = vcmp.eq.s32.totalorder %v186, %v35
  %vm239 = vcmp.eq.s32.totalorder %v193, %v35
  %vm240 = vcmp.eq.s32.totalorder %v197, %v35
  %vm241 = vcmp.eq.s32.totalorder %v204, %v35
  %vm242 = vcmp.eq.s32.totalorder %v208, %v35
  %vm243 = vcmp.eq.s32.totalorder %v215, %v35
  %vm244 = vcmp.eq.s32.totalorder %v219, %v35
  %vm245 = vcmp.eq.s32.totalorder %v226, %v35
  %vm246 = vcmp.eq.s32.totalorder %v230, %v35
  %vm247 = vmor %vm125, %vm231
  %vm248 = vmor %vm126, %vm232
  %vm249 = vmor %vm127, %vm233
  %vm250 = vmor %vm128, %vm234
  %vm251 = vmor %vm129, %vm235
  %vm252 = vmor %vm130, %vm236
  %vm253 = vmor %vm131, %vm237
  %vm254 = vmor %vm132, %vm238
  %vm255 = vmor %vm133, %vm239
  %vm256 = vmor %vm134, %vm240
  %vm257 = vmor %vm135, %vm241
  %vm258 = vmor %vm136, %vm242
  %vm259 = vmor %vm137, %vm243
  %vm260 = vmor %vm138, %vm244
  %vm261 = vmor %vm139, %vm245
  %vm262 = vmor %vm140, %vm246
  %s263 = scalar_lea.vmem %s0, 32
  %v264 = vld [vmem:[%s263] sm:$0xff]
  %v265 = vlaneseq
  %v266 = vshrl.u32 %v265, 7
  %v267 = vsub.s32 0, %v266
  %v268 = vrot.slane %v264, %v267
  %270 = vbcast.lane.b32.xlu0 %v268, 256
  %v271 = vpop.permute.xlu0 %270
  %s273 = sor.u32 256, 8
  %274 = vbcast.lane.b32.xlu0 %v268, %s273
  %v275 = vpop.permute.xlu0 %274
  %v276 = vlaneseq
  %v277 = vshrl.u32 %v276, 7
  %v278 = vsub.s32 1, %v277
  %v279 = vrot.slane %v264, %v278
  %281 = vbcast.lane.b32.xlu0 %v279, 256
  %v282 = vpop.permute.xlu0 %281
  %s284 = sor.u32 256, 8
  %285 = vbcast.lane.b32.xlu0 %v279, %s284
  %v286 = vpop.permute.xlu0 %285
  %v287 = vlaneseq
  %v288 = vshrl.u32 %v287, 7
  %v289 = vsub.s32 2, %v288
  %v290 = vrot.slane %v264, %v289
  %292 = vbcast.lane.b32.xlu0 %v290, 256
  %v293 = vpop.permute.xlu0 %292
  %s295 = sor.u32 256, 8
  %296 = vbcast.lane.b32.xlu0 %v290, %s295
  %v297 = vpop.permute.xlu0 %296
  %v298 = vlaneseq
  %v299 = vshrl.u32 %v298, 7
  %v300 = vsub.s32 3, %v299
  %v301 = vrot.slane %v264, %v300
  %303 = vbcast.lane.b32.xlu0 %v301, 256
  %v304 = vpop.permute.xlu0 %303
  %s306 = sor.u32 256, 8
  %307 = vbcast.lane.b32.xlu0 %v301, %s306
  %v308 = vpop.permute.xlu0 %307
  %v309 = vlaneseq
  %v310 = vshrl.u32 %v309, 7
  %v311 = vsub.s32 4, %v310
  %v312 = vrot.slane %v264, %v311
  %314 = vbcast.lane.b32.xlu0 %v312, 256
  %v315 = vpop.permute.xlu0 %314
  %s317 = sor.u32 256, 8
  %318 = vbcast.lane.b32.xlu0 %v312, %s317
  %v319 = vpop.permute.xlu0 %318
  %v320 = vlaneseq
  %v321 = vshrl.u32 %v320, 7
  %v322 = vsub.s32 5, %v321
  %v323 = vrot.slane %v264, %v322
  %325 = vbcast.lane.b32.xlu0 %v323, 256
  %v326 = vpop.permute.xlu0 %325
  %s328 = sor.u32 256, 8
  %329 = vbcast.lane.b32.xlu0 %v323, %s328
  %v330 = vpop.permute.xlu0 %329
  %v331 = vlaneseq
  %v332 = vshrl.u32 %v331, 7
  %v333 = vsub.s32 6, %v332
  %v334 = vrot.slane %v264, %v333
  %336 = vbcast.lane.b32.xlu0 %v334, 256
  %v337 = vpop.permute.xlu0 %336
  %s339 = sor.u32 256, 8
  %340 = vbcast.lane.b32.xlu0 %v334, %s339
  %v341 = vpop.permute.xlu0 %340
  %v342 = vlaneseq
  %v343 = vshrl.u32 %v342, 7
  %v344 = vsub.s32 7, %v343
  %v345 = vrot.slane %v264, %v344
  %347 = vbcast.lane.b32.xlu0 %v345, 256
  %v348 = vpop.permute.xlu0 %347
  %s350 = sor.u32 256, 8
  %351 = vbcast.lane.b32.xlu0 %v345, %s350
  %v352 = vpop.permute.xlu0 %351
  %vm353 = vcmp.eq.s32.totalorder %v271, %v35
  %vm354 = vcmp.eq.s32.totalorder %v275, %v35
  %vm355 = vcmp.eq.s32.totalorder %v282, %v35
  %vm356 = vcmp.eq.s32.totalorder %v286, %v35
  %vm357 = vcmp.eq.s32.totalorder %v293, %v35
  %vm358 = vcmp.eq.s32.totalorder %v297, %v35
  %vm359 = vcmp.eq.s32.totalorder %v304, %v35
  %vm360 = vcmp.eq.s32.totalorder %v308, %v35
  %vm361 = vcmp.eq.s32.totalorder %v315, %v35
  %vm362 = vcmp.eq.s32.totalorder %v319, %v35
  %vm363 = vcmp.eq.s32.totalorder %v326, %v35
  %vm364 = vcmp.eq.s32.totalorder %v330, %v35
  %vm365 = vcmp.eq.s32.totalorder %v337, %v35
  %vm366 = vcmp.eq.s32.totalorder %v341, %v35
  %vm367 = vcmp.eq.s32.totalorder %v348, %v35
  %vm368 = vcmp.eq.s32.totalorder %v352, %v35
  %vm369 = vmor %vm247, %vm353
  %vm370 = vmor %vm248, %vm354
  %vm371 = vmor %vm249, %vm355
  %vm372 = vmor %vm250, %vm356
  %vm373 = vmor %vm251, %vm357
  %vm374 = vmor %vm252, %vm358
  %vm375 = vmor %vm253, %vm359
  %vm376 = vmor %vm254, %vm360
  %vm377 = vmor %vm255, %vm361
  %vm378 = vmor %vm256, %vm362
  %vm379 = vmor %vm257, %vm363
  %vm380 = vmor %vm258, %vm364
  %vm381 = vmor %vm259, %vm365
  %vm382 = vmor %vm260, %vm366
  %vm383 = vmor %vm261, %vm367
  %vm384 = vmor %vm262, %vm368
  %v385 = vsel %vm369, 1, 0
  %v386 = vsel %vm370, 1, 0
  %v387 = vsel %vm371, 1, 0
  %v388 = vsel %vm372, 1, 0
  %v389 = vsel %vm373, 1, 0
  %v390 = vsel %vm374, 1, 0
  %v391 = vsel %vm375, 1, 0
  %v392 = vsel %vm376, 1, 0
  %v393 = vsel %vm377, 1, 0
  %v394 = vsel %vm378, 1, 0
  %v395 = vsel %vm379, 1, 0
  %v396 = vsel %vm380, 1, 0
  %v397 = vsel %vm381, 1, 0
  %v398 = vsel %vm382, 1, 0
  %v399 = vsel %vm383, 1, 0
  %v400 = vsel %vm384, 1, 0
  %v401 = vcvt.s32.f32 %v385
  %v402 = vcvt.s32.f32 %v386
  %v403 = vcvt.s32.f32 %v387
  %v404 = vcvt.s32.f32 %v388
  %v405 = vcvt.s32.f32 %v389
  %v406 = vcvt.s32.f32 %v390
  %v407 = vcvt.s32.f32 %v391
  %v408 = vcvt.s32.f32 %v392
  %v409 = vcvt.s32.f32 %v393
  %v410 = vcvt.s32.f32 %v394
  %v411 = vcvt.s32.f32 %v395
  %v412 = vcvt.s32.f32 %v396
  %v413 = vcvt.s32.f32 %v397
  %v414 = vcvt.s32.f32 %v398
  %v415 = vcvt.s32.f32 %v399
  %v416 = vcvt.s32.f32 %v400
  %v417 = vpack.c.bf16 %v402, %v401
  %v418 = vpack.c.bf16 %v404, %v403
  %v419 = vpack.c.bf16 %v406, %v405
  %v420 = vpack.c.bf16 %v408, %v407
  %v421 = vpack.c.bf16 %v410, %v409
  %v422 = vpack.c.bf16 %v412, %v411
  %v423 = vpack.c.bf16 %v414, %v413
  %v424 = vpack.c.bf16 %v416, %v415
  %v425 = vld [vmem:[%s1] sm:$0xf]
  %v426 = vld [vmem:[%s1 + $0x4] sm:$0xf]
  %v427 = vld [vmem:[%s1 + $0x8] sm:$0xf]
  %v428 = vld [vmem:[%s1 + $0xc] sm:$0xf]
  %v429 = vld [vmem:[%s1 + $0x10] sm:$0xf]
  %v430 = vld [vmem:[%s1 + $0x14] sm:$0xf]
  %v431 = vld [vmem:[%s1 + $0x18] sm:$0xf]
  %v432 = vld [vmem:[%s1 + $0x1c] sm:$0xf]
  %v433 = vld [vmem:[%s1 + $0x20] sm:$0xf]
  %v434 = vld [vmem:[%s1 + $0x24] sm:$0xf]
  %v435 = vld [vmem:[%s1 + $0x28] sm:$0x1]
  %v436 = vld [vmem:[%s2] sm:$0x1]
  %v438 = vlaneseq
  %v439 = vshrl.u32 %v438, 7
  %v440 = vsub.s32 0, %v439
  %v441 = vrot.slane %v436, %v440
  %v450 = vcombine.high %v417, %v417
  %v452 = vunpack.c.l.s4 1966171168
  %v453 = vunpack.c.0.s8 %v452
  %v454 = vlaneseq
  %v455 = vshrl.u32 %v454, 7
  %v456 = vsub.s32 %v453, %v455
  %v457 = vrot.slane %v417, %v456
  %v459 = vunpack.c.l.s4 1966171168
  %v460 = vunpack.c.0.s8 %v459
  %v461 = vlaneseq
  %v462 = vshrl.u32 %v461, 7
  %v463 = vsub.s32 %v460, %v462
  %v464 = vrot.slane %v450, %v463
  %v465 = vcombine.high %v457, %v457
  %v466 = vcombine.high %v464, %v464
  %v468 = vunpack.c.l.s4 1966171168
  %v469 = vunpack.c.0.s8 %v468
  %v470 = vlaneseq
  %v471 = vshrl.u32 %v470, 7
  %v472 = vsub.s32 %v469, %v471
  %v473 = vrot.slane %v457, %v472
  %v475 = vunpack.c.l.s4 1966171168
  %v476 = vunpack.c.0.s8 %v475
  %v477 = vlaneseq
  %v478 = vshrl.u32 %v477, 7
  %v479 = vsub.s32 %v476, %v478
  %v480 = vrot.slane %v464, %v479
  %v482 = vunpack.c.l.s4 1966171168
  %v483 = vunpack.c.0.s8 %v482
  %v484 = vlaneseq
  %v485 = vshrl.u32 %v484, 7
  %v486 = vsub.s32 %v483, %v485
  %v487 = vrot.slane %v465, %v486
  %v489 = vunpack.c.l.s4 1966171168
  %v490 = vunpack.c.0.s8 %v489
  %v491 = vlaneseq
  %v492 = vshrl.u32 %v491, 7
  %v493 = vsub.s32 %v490, %v492
  %v494 = vrot.slane %v466, %v493
  %v495 = vcombine.high %v473, %v473
  %v496 = vcombine.high %v480, %v480
  %v497 = vcombine.high %v487, %v487
  %v498 = vcombine.high %v418, %v418
  %v500 = vunpack.c.l.s4 1966171168
  %v501 = vunpack.c.0.s8 %v500
  %v502 = vlaneseq
  %v503 = vshrl.u32 %v502, 7
  %v504 = vsub.s32 %v501, %v503
  %v505 = vrot.slane %v418, %v504
  %v507 = vunpack.c.l.s4 1966171168
  %v508 = vunpack.c.0.s8 %v507
  %v509 = vlaneseq
  %v510 = vshrl.u32 %v509, 7
  %v511 = vsub.s32 %v508, %v510
  %v512 = vrot.slane %v498, %v511
  %v513 = vcombine.high %v505, %v505
  %v514 = vcombine.high %v512, %v512
  %v516 = vunpack.c.l.s4 1966171168
  %v517 = vunpack.c.0.s8 %v516
  %v518 = vlaneseq
  %v519 = vshrl.u32 %v518, 7
  %v520 = vsub.s32 %v517, %v519
  %v521 = vrot.slane %v505, %v520
  %v523 = vunpack.c.l.s4 1966171168
  %v524 = vunpack.c.0.s8 %v523
  %v525 = vlaneseq
  %v526 = vshrl.u32 %v525, 7
  %v527 = vsub.s32 %v524, %v526
  %v528 = vrot.slane %v512, %v527
  %v530 = vunpack.c.l.s4 1966171168
  %v531 = vunpack.c.0.s8 %v530
  %v532 = vlaneseq
  %v533 = vshrl.u32 %v532, 7
  %v534 = vsub.s32 %v531, %v533
  %v535 = vrot.slane %v513, %v534
  %v537 = vunpack.c.l.s4 1966171168
  %v538 = vunpack.c.0.s8 %v537
  %v539 = vlaneseq
  %v540 = vshrl.u32 %v539, 7
  %v541 = vsub.s32 %v538, %v540
  %v542 = vrot.slane %v514, %v541
  %v543 = vcombine.high %v521, %v521
  %v544 = vcombine.high %v528, %v528
  %v545 = vcombine.high %v535, %v535
  %v546 = vcombine.high %v419, %v419
  %v548 = vunpack.c.l.s4 1966171168
  %v549 = vunpack.c.0.s8 %v548
  %v550 = vlaneseq
  %v551 = vshrl.u32 %v550, 7
  %v552 = vsub.s32 %v549, %v551
  %v553 = vrot.slane %v419, %v552
  %v555 = vunpack.c.l.s4 1966171168
  %v556 = vunpack.c.0.s8 %v555
  %v557 = vlaneseq
  %v558 = vshrl.u32 %v557, 7
  %v559 = vsub.s32 %v556, %v558
  %v560 = vrot.slane %v546, %v559
  %v561 = vcombine.high %v553, %v553
  %v562 = vcombine.high %v560, %v560
  %v564 = vunpack.c.l.s4 1966171168
  %v565 = vunpack.c.0.s8 %v564
  %v566 = vlaneseq
  %v567 = vshrl.u32 %v566, 7
  %v568 = vsub.s32 %v565, %v567
  %v569 = vrot.slane %v553, %v568
  %v571 = vunpack.c.l.s4 1966171168
  %v572 = vunpack.c.0.s8 %v571
  %v573 = vlaneseq
  %v574 = vshrl.u32 %v573, 7
  %v575 = vsub.s32 %v572, %v574
  %v576 = vrot.slane %v560, %v575
  %v578 = vunpack.c.l.s4 1966171168
  %v579 = vunpack.c.0.s8 %v578
  %v580 = vlaneseq
  %v581 = vshrl.u32 %v580, 7
  %v582 = vsub.s32 %v579, %v581
  %v583 = vrot.slane %v561, %v582
  %v585 = vunpack.c.l.s4 1966171168
  %v586 = vunpack.c.0.s8 %v585
  %v587 = vlaneseq
  %v588 = vshrl.u32 %v587, 7
  %v589 = vsub.s32 %v586, %v588
  %v590 = vrot.slane %v562, %v589
  %v591 = vcombine.high %v569, %v569
  %v592 = vcombine.high %v576, %v576
  %v593 = vcombine.high %v583, %v583
  %v594 = vcombine.high %v420, %v420
  %v596 = vunpack.c.l.s4 1966171168
  %v597 = vunpack.c.0.s8 %v596
  %v598 = vlaneseq
  %v599 = vshrl.u32 %v598, 7
  %v600 = vsub.s32 %v597, %v599
  %v601 = vrot.slane %v420, %v600
  %v603 = vunpack.c.l.s4 1966171168
  %v604 = vunpack.c.0.s8 %v603
  %v605 = vlaneseq
  %v606 = vshrl.u32 %v605, 7
  %v607 = vsub.s32 %v604, %v606
  %v608 = vrot.slane %v594, %v607
  %v609 = vcombine.high %v601, %v601
  %v610 = vcombine.high %v608, %v608
  %v612 = vunpack.c.l.s4 1966171168
  %v613 = vunpack.c.0.s8 %v612
  %v614 = vlaneseq
  %v615 = vshrl.u32 %v614, 7
  %v616 = vsub.s32 %v613, %v615
  %v617 = vrot.slane %v601, %v616
  %v619 = vunpack.c.l.s4 1966171168
  %v620 = vunpack.c.0.s8 %v619
  %v621 = vlaneseq
  %v622 = vshrl.u32 %v621, 7
  %v623 = vsub.s32 %v620, %v622
  %v624 = vrot.slane %v608, %v623
  %v626 = vunpack.c.l.s4 1966171168
  %v627 = vunpack.c.0.s8 %v626
  %v628 = vlaneseq
  %v629 = vshrl.u32 %v628, 7
  %v630 = vsub.s32 %v627, %v629
  %v631 = vrot.slane %v609, %v630
  %v633 = vunpack.c.l.s4 1966171168
  %v634 = vunpack.c.0.s8 %v633
  %v635 = vlaneseq
  %v636 = vshrl.u32 %v635, 7
  %v637 = vsub.s32 %v634, %v636
  %v638 = vrot.slane %v610, %v637
  %v639 = vcombine.high %v617, %v617
  %v640 = vcombine.high %v624, %v624
  %v641 = vcombine.high %v631, %v631
  %v642 = vcombine.high %v421, %v421
  %v644 = vunpack.c.l.s4 1966171168
  %v645 = vunpack.c.0.s8 %v644
  %v646 = vlaneseq
  %v647 = vshrl.u32 %v646, 7
  %v648 = vsub.s32 %v645, %v647
  %v649 = vrot.slane %v421, %v648
  %v651 = vunpack.c.l.s4 1966171168
  %v652 = vunpack.c.0.s8 %v651
  %v653 = vlaneseq
  %v654 = vshrl.u32 %v653, 7
  %v655 = vsub.s32 %v652, %v654
  %v656 = vrot.slane %v642, %v655
  %v657 = vcombine.high %v649, %v649
  %v658 = vcombine.high %v656, %v656
  %v660 = vunpack.c.l.s4 1966171168
  %v661 = vunpack.c.0.s8 %v660
  %v662 = vlaneseq
  %v663 = vshrl.u32 %v662, 7
  %v664 = vsub.s32 %v661, %v663
  %v665 = vrot.slane %v649, %v664
  %v667 = vunpack.c.l.s4 1966171168
  %v668 = vunpack.c.0.s8 %v667
  %v669 = vlaneseq
  %v670 = vshrl.u32 %v669, 7
  %v671 = vsub.s32 %v668, %v670
  %v672 = vrot.slane %v656, %v671
  %v674 = vunpack.c.l.s4 1966171168
  %v675 = vunpack.c.0.s8 %v674
  %v676 = vlaneseq
  %v677 = vshrl.u32 %v676, 7
  %v678 = vsub.s32 %v675, %v677
  %v679 = vrot.slane %v657, %v678
  %v681 = vunpack.c.l.s4 1966171168
  %v682 = vunpack.c.0.s8 %v681
  %v683 = vlaneseq
  %v684 = vshrl.u32 %v683, 7
  %v685 = vsub.s32 %v682, %v684
  %v686 = vrot.slane %v658, %v685
  %v687 = vcombine.high %v665, %v665
  %v688 = vcombine.high %v672, %v672
  %v689 = vcombine.high %v679, %v679
  %v690 = vcombine.high %v422, %v422
  %v692 = vunpack.c.l.s4 1966171168
  %v693 = vunpack.c.0.s8 %v692
  %v694 = vlaneseq
  %v695 = vshrl.u32 %v694, 7
  %v696 = vsub.s32 %v693, %v695
  %v697 = vrot.slane %v422, %v696
  %v699 = vunpack.c.l.s4 1966171168
  %v700 = vunpack.c.0.s8 %v699
  %v701 = vlaneseq
  %v702 = vshrl.u32 %v701, 7
  %v703 = vsub.s32 %v700, %v702
  %v704 = vrot.slane %v690, %v703
  %v705 = vcombine.high %v697, %v697
  %v706 = vcombine.high %v704, %v704
  %v708 = vunpack.c.l.s4 1966171168
  %v709 = vunpack.c.0.s8 %v708
  %v710 = vlaneseq
  %v711 = vshrl.u32 %v710, 7
  %v712 = vsub.s32 %v709, %v711
  %v713 = vrot.slane %v697, %v712
  %v715 = vunpack.c.l.s4 1966171168
  %v716 = vunpack.c.0.s8 %v715
  %v717 = vlaneseq
  %v718 = vshrl.u32 %v717, 7
  %v719 = vsub.s32 %v716, %v718
  %v720 = vrot.slane %v704, %v719
  %v722 = vunpack.c.l.s4 1966171168
  %v723 = vunpack.c.0.s8 %v722
  %v724 = vlaneseq
  %v725 = vshrl.u32 %v724, 7
  %v726 = vsub.s32 %v723, %v725
  %v727 = vrot.slane %v705, %v726
  %v729 = vunpack.c.l.s4 1966171168
  %v730 = vunpack.c.0.s8 %v729
  %v731 = vlaneseq
  %v732 = vshrl.u32 %v731, 7
  %v733 = vsub.s32 %v730, %v732
  %v734 = vrot.slane %v706, %v733
  %v735 = vcombine.high %v713, %v713
  %v736 = vcombine.high %v720, %v720
  %v737 = vcombine.high %v727, %v727
  %v738 = vcombine.high %v423, %v423
  %v740 = vunpack.c.l.s4 1966171168
  %v741 = vunpack.c.0.s8 %v740
  %v742 = vlaneseq
  %v743 = vshrl.u32 %v742, 7
  %v744 = vsub.s32 %v741, %v743
  %v745 = vrot.slane %v423, %v744
  %v747 = vunpack.c.l.s4 1966171168
  %v748 = vunpack.c.0.s8 %v747
  %v749 = vlaneseq
  %v750 = vshrl.u32 %v749, 7
  %v751 = vsub.s32 %v748, %v750
  %v752 = vrot.slane %v738, %v751
  %v753 = vcombine.high %v745, %v745
  %v754 = vcombine.high %v752, %v752
  %v756 = vunpack.c.l.s4 1966171168
  %v757 = vunpack.c.0.s8 %v756
  %v758 = vlaneseq
  %v759 = vshrl.u32 %v758, 7
  %v760 = vsub.s32 %v757, %v759
  %v761 = vrot.slane %v745, %v760
  %v763 = vunpack.c.l.s4 1966171168
  %v764 = vunpack.c.0.s8 %v763
  %v765 = vlaneseq
  %v766 = vshrl.u32 %v765, 7
  %v767 = vsub.s32 %v764, %v766
  %v768 = vrot.slane %v752, %v767
  %v770 = vunpack.c.l.s4 1966171168
  %v771 = vunpack.c.0.s8 %v770
  %v772 = vlaneseq
  %v773 = vshrl.u32 %v772, 7
  %v774 = vsub.s32 %v771, %v773
  %v775 = vrot.slane %v753, %v774
  %v777 = vunpack.c.l.s4 1966171168
  %v778 = vunpack.c.0.s8 %v777
  %v779 = vlaneseq
  %v780 = vshrl.u32 %v779, 7
  %v781 = vsub.s32 %v778, %v780
  %v782 = vrot.slane %v754, %v781
  %v783 = vcombine.high %v761, %v761
  %v784 = vcombine.high %v768, %v768
  %v785 = vcombine.high %v775, %v775
  %v786 = vcombine.high %v424, %v424
  %v788 = vunpack.c.l.s4 1966171168
  %v789 = vunpack.c.0.s8 %v788
  %v790 = vlaneseq
  %v791 = vshrl.u32 %v790, 7
  %v792 = vsub.s32 %v789, %v791
  %v793 = vrot.slane %v424, %v792
  %v795 = vunpack.c.l.s4 1966171168
  %v796 = vunpack.c.0.s8 %v795
  %v797 = vlaneseq
  %v798 = vshrl.u32 %v797, 7
  %v799 = vsub.s32 %v796, %v798
  %v800 = vrot.slane %v786, %v799
  %v801 = vcombine.high %v793, %v793
  %v802 = vcombine.high %v800, %v800
  %v804 = vunpack.c.l.s4 1966171168
  %v805 = vunpack.c.0.s8 %v804
  %v806 = vlaneseq
  %v807 = vshrl.u32 %v806, 7
  %v808 = vsub.s32 %v805, %v807
  %v809 = vrot.slane %v793, %v808
  %v811 = vunpack.c.l.s4 1966171168
  %v812 = vunpack.c.0.s8 %v811
  %v813 = vlaneseq
  %v814 = vshrl.u32 %v813, 7
  %v815 = vsub.s32 %v812, %v814
  %v816 = vrot.slane %v800, %v815
  %v818 = vunpack.c.l.s4 1966171168
  %v819 = vunpack.c.0.s8 %v818
  %v820 = vlaneseq
  %v821 = vshrl.u32 %v820, 7
  %v822 = vsub.s32 %v819, %v821
  %v823 = vrot.slane %v801, %v822
  %v825 = vunpack.c.l.s4 1966171168
  %v826 = vunpack.c.0.s8 %v825
  %v827 = vlaneseq
  %v828 = vshrl.u32 %v827, 7
  %v829 = vsub.s32 %v826, %v828
  %v830 = vrot.slane %v802, %v829
  %v831 = vcombine.high %v809, %v809
  %v832 = vcombine.high %v816, %v816
  %v833 = vcombine.high %v823, %v823
  %v834 = vcombine.high %v441, %v441
  %v836 = vunpack.c.l.s4 1983009808
  %v837 = vunpack.c.0.s8 %v836
  %v838 = vlaneseq
  %v839 = vshrl.u32 %v838, 7
  %v840 = vsub.s32 %v837, %v839
  %v841 = vrot.slane %v441, %v840
  %v843 = vunpack.c.l.s4 1983009808
  %v844 = vunpack.c.0.s8 %v843
  %v845 = vlaneseq
  %v846 = vshrl.u32 %v845, 7
  %v847 = vsub.s32 %v844, %v846
  %v848 = vrot.slane %v834, %v847
  %v849 = vcombine.high %v841, %v841
  %v850 = vcombine.high %v848, %v848
  %v851 = vcombine.low %v473, %v487
  %v852 = vcombine.low %v495, %v497
  %v853 = vcombine.low %v480, %v494
  %v854 = vcombine.low %v496, %v521
  %v856 = vunpack.c.l.s4 1966171168
  %v857 = vunpack.c.0.s8 %v856
  %v858 = vlaneseq
  %v859 = vshrl.u32 %v858, 7
  %v860 = vsub.s32 %v857, %v859
  %v861 = vrot.slane %v851, %v860
  %v863 = vunpack.c.l.s4 1966171168
  %v864 = vunpack.c.0.s8 %v863
  %v865 = vlaneseq
  %v866 = vshrl.u32 %v865, 7
  %v867 = vsub.s32 %v864, %v866
  %v868 = vrot.slane %v852, %v867
  %v870 = vunpack.c.l.s4 1966171168
  %v871 = vunpack.c.0.s8 %v870
  %v872 = vlaneseq
  %v873 = vshrl.u32 %v872, 7
  %v874 = vsub.s32 %v871, %v873
  %v875 = vrot.slane %v853, %v874
  %v877 = vunpack.c.l.s4 1966171168
  %v878 = vunpack.c.0.s8 %v877
  %v879 = vlaneseq
  %v880 = vshrl.u32 %v879, 7
  %v881 = vsub.s32 %v878, %v880
  %v882 = vrot.slane %v854, %v881
  %v883 = vcombine.low %v861, %v868
  %v884 = vcombine.low %v875, %v882
  %v886 = vunpack.c.l.s4 1966171168
  %v887 = vunpack.c.0.s8 %v886
  %v888 = vlaneseq
  %v889 = vshrl.u32 %v888, 7
  %v890 = vsub.s32 %v887, %v889
  %v891 = vrot.slane %v883, %v890
  %v893 = vunpack.c.l.s4 1966171168
  %v894 = vunpack.c.0.s8 %v893
  %v895 = vlaneseq
  %v896 = vshrl.u32 %v895, 7
  %v897 = vsub.s32 %v894, %v896
  %v898 = vrot.slane %v884, %v897
  %v899 = vcombine.low %v891, %v898
  %v900 = vcombine.low %v535, %v543
  %v901 = vcombine.low %v545, %v528
  %v902 = vcombine.low %v542, %v544
  %v903 = vcombine.low %v569, %v583
  %v905 = vunpack.c.l.s4 1966171168
  %v906 = vunpack.c.0.s8 %v905
  %v907 = vlaneseq
  %v908 = vshrl.u32 %v907, 7
  %v909 = vsub.s32 %v906, %v908
  %v910 = vrot.slane %v900, %v909
  %v912 = vunpack.c.l.s4 1966171168
  %v913 = vunpack.c.0.s8 %v912
  %v914 = vlaneseq
  %v915 = vshrl.u32 %v914, 7
  %v916 = vsub.s32 %v913, %v915
  %v917 = vrot.slane %v901, %v916
  %v919 = vunpack.c.l.s4 1966171168
  %v920 = vunpack.c.0.s8 %v919
  %v921 = vlaneseq
  %v922 = vshrl.u32 %v921, 7
  %v923 = vsub.s32 %v920, %v922
  %v924 = vrot.slane %v902, %v923
  %v926 = vunpack.c.l.s4 1966171168
  %v927 = vunpack.c.0.s8 %v926
  %v928 = vlaneseq
  %v929 = vshrl.u32 %v928, 7
  %v930 = vsub.s32 %v927, %v929
  %v931 = vrot.slane %v903, %v930
  %v932 = vcombine.low %v910, %v917
  %v933 = vcombine.low %v924, %v931
  %v935 = vunpack.c.l.s4 1966171168
  %v936 = vunpack.c.0.s8 %v935
  %v937 = vlaneseq
  %v938 = vshrl.u32 %v937, 7
  %v939 = vsub.s32 %v936, %v938
  %v940 = vrot.slane %v932, %v939
  %v942 = vunpack.c.l.s4 1966171168
  %v943 = vunpack.c.0.s8 %v942
  %v944 = vlaneseq
  %v945 = vshrl.u32 %v944, 7
  %v946 = vsub.s32 %v943, %v945
  %v947 = vrot.slane %v933, %v946
  %v948 = vcombine.low %v940, %v947
  %v949 = vcombine.low %v591, %v593
  %v950 = vcombine.low %v576, %v590
  %v951 = vcombine.low %v592, %v617
  %v952 = vcombine.low %v631, %v639
  %v954 = vunpack.c.l.s4 1966171168
  %v955 = vunpack.c.0.s8 %v954
  %v956 = vlaneseq
  %v957 = vshrl.u32 %v956, 7
  %v958 = vsub.s32 %v955, %v957
  %v959 = vrot.slane %v949, %v958
  %v961 = vunpack.c.l.s4 1966171168
  %v962 = vunpack.c.0.s8 %v961
  %v963 = vlaneseq
  %v964 = vshrl.u32 %v963, 7
  %v965 = vsub.s32 %v962, %v964
  %v966 = vrot.slane %v950, %v965
  %v968 = vunpack.c.l.s4 1966171168
  %v969 = vunpack.c.0.s8 %v968
  %v970 = vlaneseq
  %v971 = vshrl.u32 %v970, 7
  %v972 = vsub.s32 %v969, %v971
  %v973 = vrot.slane %v951, %v972
  %v975 = vunpack.c.l.s4 1966171168
  %v976 = vunpack.c.0.s8 %v975
  %v977 = vlaneseq
  %v978 = vshrl.u32 %v977, 7
  %v979 = vsub.s32 %v976, %v978
  %v980 = vrot.slane %v952, %v979
  %v981 = vcombine.low %v959, %v966
  %v982 = vcombine.low %v973, %v980
  %v984 = vunpack.c.l.s4 1966171168
  %v985 = vunpack.c.0.s8 %v984
  %v986 = vlaneseq
  %v987 = vshrl.u32 %v986, 7
  %v988 = vsub.s32 %v985, %v987
  %v989 = vrot.slane %v981, %v988
  %v991 = vunpack.c.l.s4 1966171168
  %v992 = vunpack.c.0.s8 %v991
  %v993 = vlaneseq
  %v994 = vshrl.u32 %v993, 7
  %v995 = vsub.s32 %v992, %v994
  %v996 = vrot.slane %v982, %v995
  %v997 = vcombine.low %v989, %v996
  %v998 = vcombine.low %v641, %v624
  %v999 = vcombine.low %v638, %v640
  %v1000 = vcombine.low %v665, %v679
  %v1001 = vcombine.low %v687, %v689
  %v1003 = vunpack.c.l.s4 1966171168
  %v1004 = vunpack.c.0.s8 %v1003
  %v1005 = vlaneseq
  %v1006 = vshrl.u32 %v1005, 7
  %v1007 = vsub.s32 %v1004, %v1006
  %v1008 = vrot.slane %v998, %v1007
  %v1010 = vunpack.c.l.s4 1966171168
  %v1011 = vunpack.c.0.s8 %v1010
  %v1012 = vlaneseq
  %v1013 = vshrl.u32 %v1012, 7
  %v1014 = vsub.s32 %v1011, %v1013
  %v1015 = vrot.slane %v999, %v1014
  %v1017 = vunpack.c.l.s4 1966171168
  %v1018 = vunpack.c.0.s8 %v1017
  %v1019 = vlaneseq
  %v1020 = vshrl.u32 %v1019, 7
  %v1021 = vsub.s32 %v1018, %v1020
  %v1022 = vrot.slane %v1000, %v1021
  %v1024 = vunpack.c.l.s4 1966171168
  %v1025 = vunpack.c.0.s8 %v1024
  %v1026 = vlaneseq
  %v1027 = vshrl.u32 %v1026, 7
  %v1028 = vsub.s32 %v1025, %v1027
  %v1029 = vrot.slane %v1001, %v1028
  %v1030 = vcombine.low %v1008, %v1015
  %v1031 = vcombine.low %v1022, %v1029
  %v1033 = vunpack.c.l.s4 1966171168
  %v1034 = vunpack.c.0.s8 %v1033
  %v1035 = vlaneseq
  %v1036 = vshrl.u32 %v1035, 7
  %v1037 = vsub.s32 %v1034, %v1036
  %v1038 = vrot.slane %v1030, %v1037
  %v1040 = vunpack.c.l.s4 1966171168
  %v1041 = vunpack.c.0.s8 %v1040
  %v1042 = vlaneseq
  %v1043 = vshrl.u32 %v1042, 7
  %v1044 = vsub.s32 %v1041, %v1043
  %v1045 = vrot.slane %v1031, %v1044
  %v1046 = vcombine.low %v1038, %v1045
  %v1047 = vcombine.low %v672, %v686
  %v1048 = vcombine.low %v688, %v713
  %v1049 = vcombine.low %v727, %v735
  %v1050 = vcombine.low %v737, %v720
  %v1052 = vunpack.c.l.s4 1966171168
  %v1053 = vunpack.c.0.s8 %v1052
  %v1054 = vlaneseq
  %v1055 = vshrl.u32 %v1054, 7
  %v1056 = vsub.s32 %v1053, %v1055
  %v1057 = vrot.slane %v1047, %v1056
  %v1059 = vunpack.c.l.s4 1966171168
  %v1060 = vunpack.c.0.s8 %v1059
  %v1061 = vlaneseq
  %v1062 = vshrl.u32 %v1061, 7
  %v1063 = vsub.s32 %v1060, %v1062
  %v1064 = vrot.slane %v1048, %v1063
  %v1066 = vunpack.c.l.s4 1966171168
  %v1067 = vunpack.c.0.s8 %v1066
  %v1068 = vlaneseq
  %v1069 = vshrl.u32 %v1068, 7
  %v1070 = vsub.s32 %v1067, %v1069
  %v1071 = vrot.slane %v1049, %v1070
  %v1073 = vunpack.c.l.s4 1966171168
  %v1074 = vunpack.c.0.s8 %v1073
  %v1075 = vlaneseq
  %v1076 = vshrl.u32 %v1075, 7
  %v1077 = vsub.s32 %v1074, %v1076
  %v1078 = vrot.slane %v1050, %v1077
  %v1079 = vcombine.low %v1057, %v1064
  %v1080 = vcombine.low %v1071, %v1078
  %v1082 = vunpack.c.l.s4 1966171168
  %v1083 = vunpack.c.0.s8 %v1082
  %v1084 = vlaneseq
  %v1085 = vshrl.u32 %v1084, 7
  %v1086 = vsub.s32 %v1083, %v1085
  %v1087 = vrot.slane %v1079, %v1086
  %v1089 = vunpack.c.l.s4 1966171168
  %v1090 = vunpack.c.0.s8 %v1089
  %v1091 = vlaneseq
  %v1092 = vshrl.u32 %v1091, 7
  %v1093 = vsub.s32 %v1090, %v1092
  %v1094 = vrot.slane %v1080, %v1093
  %v1095 = vcombine.low %v1087, %v1094
  %v1096 = vcombine.low %v734, %v736
  %v1097 = vcombine.low %v761, %v775
  %v1098 = vcombine.low %v783, %v785
  %v1099 = vcombine.low %v768, %v782
  %v1101 = vunpack.c.l.s4 1966171168
  %v1102 = vunpack.c.0.s8 %v1101
  %v1103 = vlaneseq
  %v1104 = vshrl.u32 %v1103, 7
  %v1105 = vsub.s32 %v1102, %v1104
  %v1106 = vrot.slane %v1096, %v1105
  %v1108 = vunpack.c.l.s4 1966171168
  %v1109 = vunpack.c.0.s8 %v1108
  %v1110 = vlaneseq
  %v1111 = vshrl.u32 %v1110, 7
  %v1112 = vsub.s32 %v1109, %v1111
  %v1113 = vrot.slane %v1097, %v1112
  %v1115 = vunpack.c.l.s4 1966171168
  %v1116 = vunpack.c.0.s8 %v1115
  %v1117 = vlaneseq
  %v1118 = vshrl.u32 %v1117, 7
  %v1119 = vsub.s32 %v1116, %v1118
  %v1120 = vrot.slane %v1098, %v1119
  %v1122 = vunpack.c.l.s4 1966171168
  %v1123 = vunpack.c.0.s8 %v1122
  %v1124 = vlaneseq
  %v1125 = vshrl.u32 %v1124, 7
  %v1126 = vsub.s32 %v1123, %v1125
  %v1127 = vrot.slane %v1099, %v1126
  %v1128 = vcombine.low %v1106, %v1113
  %v1129 = vcombine.low %v1120, %v1127
  %v1131 = vunpack.c.l.s4 1966171168
  %v1132 = vunpack.c.0.s8 %v1131
  %v1133 = vlaneseq
  %v1134 = vshrl.u32 %v1133, 7
  %v1135 = vsub.s32 %v1132, %v1134
  %v1136 = vrot.slane %v1128, %v1135
  %v1138 = vunpack.c.l.s4 1966171168
  %v1139 = vunpack.c.0.s8 %v1138
  %v1140 = vlaneseq
  %v1141 = vshrl.u32 %v1140, 7
  %v1142 = vsub.s32 %v1139, %v1141
  %v1143 = vrot.slane %v1129, %v1142
  %v1144 = vcombine.low %v1136, %v1143
  %v1145 = vcombine.low %v784, %v809
  %v1146 = vcombine.low %v823, %v831
  %v1147 = vcombine.low %v833, %v816
  %v1148 = vcombine.low %v830, %v832
  %v1150 = vunpack.c.l.s4 1966171168
  %v1151 = vunpack.c.0.s8 %v1150
  %v1152 = vlaneseq
  %v1153 = vshrl.u32 %v1152, 7
  %v1154 = vsub.s32 %v1151, %v1153
  %v1155 = vrot.slane %v1145, %v1154
  %v1157 = vunpack.c.l.s4 1966171168
  %v1158 = vunpack.c.0.s8 %v1157
  %v1159 = vlaneseq
  %v1160 = vshrl.u32 %v1159, 7
  %v1161 = vsub.s32 %v1158, %v1160
  %v1162 = vrot.slane %v1146, %v1161
  %v1164 = vunpack.c.l.s4 1966171168
  %v1165 = vunpack.c.0.s8 %v1164
  %v1166 = vlaneseq
  %v1167 = vshrl.u32 %v1166, 7
  %v1168 = vsub.s32 %v1165, %v1167
  %v1169 = vrot.slane %v1147, %v1168
  %v1171 = vunpack.c.l.s4 1966171168
  %v1172 = vunpack.c.0.s8 %v1171
  %v1173 = vlaneseq
  %v1174 = vshrl.u32 %v1173, 7
  %v1175 = vsub.s32 %v1172, %v1174
  %v1176 = vrot.slane %v1148, %v1175
  %v1177 = vcombine.low %v1155, %v1162
  %v1178 = vcombine.low %v1169, %v1176
  %v1180 = vunpack.c.l.s4 1966171168
  %v1181 = vunpack.c.0.s8 %v1180
  %v1182 = vlaneseq
  %v1183 = vshrl.u32 %v1182, 7
  %v1184 = vsub.s32 %v1181, %v1183
  %v1185 = vrot.slane %v1177, %v1184
  %v1187 = vunpack.c.l.s4 1966171168
  %v1188 = vunpack.c.0.s8 %v1187
  %v1189 = vlaneseq
  %v1190 = vshrl.u32 %v1189, 7
  %v1191 = vsub.s32 %v1188, %v1190
  %v1192 = vrot.slane %v1178, %v1191
  %v1193 = vcombine.low %v1185, %v1192
  %v1205 = vunpack.c.l.b16 %v425
  %v1206 = vunpack.c.l.b16 %v426
  %v1207 = vunpack.c.l.b16 %v427
  %v1208 = vunpack.c.l.b16 %v428
  %v1209 = vunpack.c.l.b16 %v429
  %v1210 = vunpack.c.l.b16 %v430
  %v1211 = vunpack.c.l.b16 %v431
  %v1212 = vunpack.c.l.b16 %v432
  %v1213 = vunpack.c.l.b16 %v433
  %v1214 = vunpack.c.l.b16 %v434
  %v1215 = vunpack.c.l.b16 %v435
  %v1216 = vpack.c.b16 %v1206, %v1205
  %v1217 = vpack.c.b16 %v1208, %v1207
  %v1218 = vpack.c.b16 %v1210, %v1209
  %v1219 = vpack.c.b16 %v1212, %v1211
  %v1220 = vpack.c.b16 %v1214, %v1213
  %v1221 = vpack.c.b16 %v1215, %v1215
  %v1227 = vcombine.low %v841, %v849
  %v1228 = vcombine.low %v848, %v850
  %v1230 = vunpack.c.l.s4 1983009808
  %v1231 = vunpack.c.0.s8 %v1230
  %v1232 = vlaneseq
  %v1233 = vshrl.u32 %v1232, 7
  %v1234 = vsub.s32 %v1231, %v1233
  %v1235 = vrot.slane %v1227, %v1234
  %v1237 = vunpack.c.l.s4 1983009808
  %v1238 = vunpack.c.0.s8 %v1237
  %v1239 = vlaneseq
  %v1240 = vshrl.u32 %v1239, 7
  %v1241 = vsub.s32 %v1238, %v1240
  %v1242 = vrot.slane %v1228, %v1241
  %v1243 = vcombine.low %v1235, %v1242
  %v1244 = vcombine.low %v848, %v841
  %v1246 = vunpack.c.l.s4 1983009808
  %v1247 = vunpack.c.0.s8 %v1246
  %v1248 = vlaneseq
  %v1249 = vshrl.u32 %v1248, 7
  %v1250 = vsub.s32 %v1247, %v1249
  %v1251 = vrot.slane %v1244, %v1250
  %v1252 = vcombine.low %v1235, %v1251
  %v1253 = vcombine.low %v849, %v848
  %v1254 = vcombine.low %v850, %v841
  %v1256 = vunpack.c.l.s4 1983009808
  %v1257 = vunpack.c.0.s8 %v1256
  %v1258 = vlaneseq
  %v1259 = vshrl.u32 %v1258, 7
  %v1260 = vsub.s32 %v1257, %v1259
  %v1261 = vrot.slane %v1253, %v1260
  %v1263 = vunpack.c.l.s4 1983009808
  %v1264 = vunpack.c.0.s8 %v1263
  %v1265 = vlaneseq
  %v1266 = vshrl.u32 %v1265, 7
  %v1267 = vsub.s32 %v1264, %v1266
  %v1268 = vrot.slane %v1254, %v1267
  %v1269 = vcombine.low %v1261, %v1268
  %v1270 = vcombine.low %v1261, %v1235
  %v1271 = vcombine.low %v1242, %v1235
  %v1272 = vcombine.low %v1251, %v1261
  %v1273 = vcombine.low %v1268, %v1261
  %vm1281 = vcmask 662528
  %v1283 = vsel %vm1281, %v899, 0
  %v1286 = vsel %vm1281, %v948, 0
  %v1289 = vsel %vm1281, %v997, 0
  %v1292 = vsel %vm1281, %v1046, 0
  %v1295 = vsel %vm1281, %v1095, 0
  %v1298 = vsel %vm1281, %v1144, 0
  %v1301 = vsel %vm1281, %v1193, 0
  %vm1303 = vcmask 1040384
  %v1304 = vsel 0, 4294967295, 65535
  %v1305 = vsel %vm1303, %v1304, 0
  %v1307 = vand.u32 %v1221, %v1305
  %1309 = vmatprep.subr.bf16.mxu0 0
  %1310 = vmatpush1.bf16.msra.mxu0 %v1216
  %1311 = vmatprep.subr.bf16.mxu0 0
  %1312 = vmatpush1.bf16.msra.mxu0 %v1217
  %1313 = vmatprep.subr.bf16.mxu0 0
  %1314 = vmatpush1.bf16.msra.mxu0 %v1218
  %1315 = vmatprep.subr.bf16.mxu0 0
  %1316 = vmatpush1.bf16.msra.mxu0 %v1219
  %1317 = vmatprep.subr.bf16.mxu0 0
  %1318 = vmatpush1.bf16.msra.mxu0 %v1220
  %1319 = vmatprep.subr.bf16.mxu0 0
  %1320 = vmatpush1.bf16.msra.mxu0 %v1307
  %1321 = vmatprep.subr.bf16.mxu0 0
  %1322 = vmatpush1.bf16.msra.mxu0 0
  %1323 = vmatprep.subr.bf16.mxu0 0
  %1324 = vmatpush1.bf16.msra.mxu0 0
  %1325 = vmatprep.subr.bf16.mxu0 0
  %1326 = vmatpush1.bf16.msra.mxu0 0
  %1327 = vmatprep.subr.bf16.mxu0 0
  %1328 = vmatpush1.bf16.msra.mxu0 0
  %1329 = vmatprep.subr.bf16.mxu0 0
  %1330 = vmatpush1.bf16.msra.mxu0 0
  %1331 = vmatprep.subr.bf16.mxu0 0
  %1332 = vmatpush1.bf16.msra.mxu0 0
  %1333 = vmatprep.subr.bf16.mxu0 0
  %1334 = vmatpush1.bf16.msra.mxu0 0
  %1335 = vmatprep.subr.bf16.mxu0 0
  %1336 = vmatpush1.bf16.msra.mxu0 0
  %1337 = vmatprep.subr.bf16.mxu0 0
  %1338 = vmatpush1.bf16.msra.mxu0 0
  %1339 = vmatprep.subr.bf16.mxu0 0
  %1340 = vmatpush1.bf16.msra.mxu0 0
  %1341 = vmatprep.mubr.bf16.mxu0 0
  %1342 = vmatmul.mubr.bf16.gmra.mrb[0].mxu0 %v1283
  %v1343 = vpop.f32.mrb[0].mxu0
  %v1344 = vadd.f32 %v1243, %v1343
  %v1345 = vpop.f32.mrb[0].mxu0
  %v1346 = vpop.f32.mrb[0].mxu0
  %v1347 = vadd.f32 %v1252, %v1346
  %v1348 = vpop.f32.mrb[0].mxu0
  %1349 = vmatprep.mubr.bf16.mxu0 0
  %1350 = vmatmul.mubr.bf16.gmra.mrb[0].mxu0 %v1286
  %v1351 = vpop.f32.mrb[0].mxu0
  %v1352 = vadd.f32 %v1269, %v1351
  %v1353 = vpop.f32.mrb[0].mxu0
  %v1354 = vpop.f32.mrb[0].mxu0
  %v1355 = vadd.f32 %v1270, %v1354
  %v1356 = vpop.f32.mrb[0].mxu0
  %1357 = vmatprep.mubr.bf16.mxu0 0
  %1358 = vmatmul.mubr.bf16.gmra.mrb[0].mxu0 %v1289
  %v1359 = vpop.f32.mrb[0].mxu0
  %v1360 = vadd.f32 %v1271, %v1359
  %v1361 = vpop.f32.mrb[0].mxu0
  %v1362 = vpop.f32.mrb[0].mxu0
  %v1363 = vadd.f32 %v1272, %v1362
  %v1364 = vpop.f32.mrb[0].mxu0
  %1365 = vmatprep.mubr.bf16.mxu0 0
  %1366 = vmatmul.mubr.bf16.gmra.mrb[0].mxu0 %v1292
  %v1367 = vpop.f32.mrb[0].mxu0
  %v1368 = vadd.f32 %v1273, %v1367
  %v1369 = vpop.f32.mrb[0].mxu0
  %v1370 = vpop.f32.mrb[0].mxu0
  %v1371 = vadd.f32 %v1243, %v1370
  %v1372 = vpop.f32.mrb[0].mxu0
  %1373 = vmatprep.mubr.bf16.mxu0 0
  %1374 = vmatmul.mubr.bf16.gmra.mrb[0].mxu0 %v1295
  %v1375 = vpop.f32.mrb[0].mxu0
  %v1376 = vadd.f32 %v1252, %v1375
  %v1377 = vpop.f32.mrb[0].mxu0
  %v1378 = vpop.f32.mrb[0].mxu0
  %v1379 = vadd.f32 %v1269, %v1378
  %v1380 = vpop.f32.mrb[0].mxu0
  %1381 = vmatprep.mubr.bf16.mxu0 0
  %1382 = vmatmul.mubr.bf16.gmra.mrb[0].mxu0 %v1298
  %v1383 = vpop.f32.mrb[0].mxu0
  %v1384 = vadd.f32 %v1270, %v1383
  %v1385 = vpop.f32.mrb[0].mxu0
  %v1386 = vpop.f32.mrb[0].mxu0
  %v1387 = vadd.f32 %v1271, %v1386
  %v1388 = vpop.f32.mrb[0].mxu0
  %1389 = vmatprep.mubr.bf16.mxu0 0
  %1390 = vmatmul.mubr.bf16.gmra.mrb[0].mxu0 %v1301
  %v1391 = vpop.f32.mrb[0].mxu0
  %v1392 = vadd.f32 %v1272, %v1391
  %v1393 = vpop.f32.mrb[0].mxu0
  %v1394 = vpop.f32.mrb[0].mxu0
  %v1395 = vadd.f32 %v1273, %v1394
  %v1396 = vpop.f32.mrb[0].mxu0
  %1397 = vdwg.mxu0
  %v1412 = vcombine.high %v1344, %v1344
  %v1414 = vunpack.c.l.s4 1983009808
  %v1415 = vunpack.c.0.s8 %v1414
  %v1416 = vlaneseq
  %v1417 = vshrl.u32 %v1416, 7
  %v1418 = vsub.s32 %v1415, %v1417
  %v1419 = vrot.slane %v1344, %v1418
  %v1421 = vunpack.c.l.s4 1983009808
  %v1422 = vunpack.c.0.s8 %v1421
  %v1423 = vlaneseq
  %v1424 = vshrl.u32 %v1423, 7
  %v1425 = vsub.s32 %v1422, %v1424
  %v1426 = vrot.slane %v1412, %v1425
  %v1427 = vcombine.high %v1419, %v1419
  %v1428 = vcombine.high %v1426, %v1426
  %v1429 = vcombine.high %v1347, %v1347
  %v1431 = vunpack.c.l.s4 1983009808
  %v1432 = vunpack.c.0.s8 %v1431
  %v1433 = vlaneseq
  %v1434 = vshrl.u32 %v1433, 7
  %v1435 = vsub.s32 %v1432, %v1434
  %v1436 = vrot.slane %v1347, %v1435
  %v1438 = vunpack.c.l.s4 1983009808
  %v1439 = vunpack.c.0.s8 %v1438
  %v1440 = vlaneseq
  %v1441 = vshrl.u32 %v1440, 7
  %v1442 = vsub.s32 %v1439, %v1441
  %v1443 = vrot.slane %v1429, %v1442
  %v1444 = vcombine.high %v1436, %v1436
  %v1445 = vcombine.high %v1443, %v1443
  %v1446 = vcombine.high %v1352, %v1352
  %v1448 = vunpack.c.l.s4 1983009808
  %v1449 = vunpack.c.0.s8 %v1448
  %v1450 = vlaneseq
  %v1451 = vshrl.u32 %v1450, 7
  %v1452 = vsub.s32 %v1449, %v1451
  %v1453 = vrot.slane %v1352, %v1452
  %v1455 = vunpack.c.l.s4 1983009808
  %v1456 = vunpack.c.0.s8 %v1455
  %v1457 = vlaneseq
  %v1458 = vshrl.u32 %v1457, 7
  %v1459 = vsub.s32 %v1456, %v1458
  %v1460 = vrot.slane %v1446, %v1459
  %v1461 = vcombine.high %v1453, %v1453
  %v1462 = vcombine.high %v1460, %v1460
  %v1463 = vcombine.high %v1355, %v1355
  %v1465 = vunpack.c.l.s4 1983009808
  %v1466 = vunpack.c.0.s8 %v1465
  %v1467 = vlaneseq
  %v1468 = vshrl.u32 %v1467, 7
  %v1469 = vsub.s32 %v1466, %v1468
  %v1470 = vrot.slane %v1355, %v1469
  %v1472 = vunpack.c.l.s4 1983009808
  %v1473 = vunpack.c.0.s8 %v1472
  %v1474 = vlaneseq
  %v1475 = vshrl.u32 %v1474, 7
  %v1476 = vsub.s32 %v1473, %v1475
  %v1477 = vrot.slane %v1463, %v1476
  %v1478 = vcombine.high %v1470, %v1470
  %v1479 = vcombine.high %v1477, %v1477
  %v1480 = vcombine.high %v1360, %v1360
  %v1482 = vunpack.c.l.s4 1983009808
  %v1483 = vunpack.c.0.s8 %v1482
  %v1484 = vlaneseq
  %v1485 = vshrl.u32 %v1484, 7
  %v1486 = vsub.s32 %v1483, %v1485
  %v1487 = vrot.slane %v1360, %v1486
  %v1489 = vunpack.c.l.s4 1983009808
  %v1490 = vunpack.c.0.s8 %v1489
  %v1491 = vlaneseq
  %v1492 = vshrl.u32 %v1491, 7
  %v1493 = vsub.s32 %v1490, %v1492
  %v1494 = vrot.slane %v1480, %v1493
  %v1495 = vcombine.high %v1487, %v1487
  %v1496 = vcombine.high %v1494, %v1494
  %v1497 = vcombine.high %v1363, %v1363
  %v1499 = vunpack.c.l.s4 1983009808
  %v1500 = vunpack.c.0.s8 %v1499
  %v1501 = vlaneseq
  %v1502 = vshrl.u32 %v1501, 7
  %v1503 = vsub.s32 %v1500, %v1502
  %v1504 = vrot.slane %v1363, %v1503
  %v1506 = vunpack.c.l.s4 1983009808
  %v1507 = vunpack.c.0.s8 %v1506
  %v1508 = vlaneseq
  %v1509 = vshrl.u32 %v1508, 7
  %v1510 = vsub.s32 %v1507, %v1509
  %v1511 = vrot.slane %v1497, %v1510
  %v1512 = vcombine.high %v1504, %v1504
  %v1513 = vcombine.high %v1511, %v1511
  %v1514 = vcombine.high %v1368, %v1368
  %v1516 = vunpack.c.l.s4 1983009808
  %v1517 = vunpack.c.0.s8 %v1516
  %v1518 = vlaneseq
  %v1519 = vshrl.u32 %v1518, 7
  %v1520 = vsub.s32 %v1517, %v1519
  %v1521 = vrot.slane %v1368, %v1520
  %v1523 = vunpack.c.l.s4 1983009808
  %v1524 = vunpack.c.0.s8 %v1523
  %v1525 = vlaneseq
  %v1526 = vshrl.u32 %v1525, 7
  %v1527 = vsub.s32 %v1524, %v1526
  %v1528 = vrot.slane %v1514, %v1527
  %v1529 = vcombine.high %v1521, %v1521
  %v1530 = vcombine.high %v1528, %v1528
  %v1531 = vcombine.high %v1371, %v1371
  %v1533 = vunpack.c.l.s4 1983009808
  %v1534 = vunpack.c.0.s8 %v1533
  %v1535 = vlaneseq
  %v1536 = vshrl.u32 %v1535, 7
  %v1537 = vsub.s32 %v1534, %v1536
  %v1538 = vrot.slane %v1371, %v1537
  %v1540 = vunpack.c.l.s4 1983009808
  %v1541 = vunpack.c.0.s8 %v1540
  %v1542 = vlaneseq
  %v1543 = vshrl.u32 %v1542, 7
  %v1544 = vsub.s32 %v1541, %v1543
  %v1545 = vrot.slane %v1531, %v1544
  %v1546 = vcombine.high %v1538, %v1538
  %v1547 = vcombine.high %v1545, %v1545
  %v1548 = vcombine.high %v1376, %v1376
  %v1550 = vunpack.c.l.s4 1983009808
  %v1551 = vunpack.c.0.s8 %v1550
  %v1552 = vlaneseq
  %v1553 = vshrl.u32 %v1552, 7
  %v1554 = vsub.s32 %v1551, %v1553
  %v1555 = vrot.slane %v1376, %v1554
  %v1557 = vunpack.c.l.s4 1983009808
  %v1558 = vunpack.c.0.s8 %v1557
  %v1559 = vlaneseq
  %v1560 = vshrl.u32 %v1559, 7
  %v1561 = vsub.s32 %v1558, %v1560
  %v1562 = vrot.slane %v1548, %v1561
  %v1563 = vcombine.high %v1555, %v1555
  %v1564 = vcombine.high %v1562, %v1562
  %v1565 = vcombine.high %v1379, %v1379
  %v1567 = vunpack.c.l.s4 1983009808
  %v1568 = vunpack.c.0.s8 %v1567
  %v1569 = vlaneseq
  %v1570 = vshrl.u32 %v1569, 7
  %v1571 = vsub.s32 %v1568, %v1570
  %v1572 = vrot.slane %v1379, %v1571
  %v1574 = vunpack.c.l.s4 1983009808
  %v1575 = vunpack.c.0.s8 %v1574
  %v1576 = vlaneseq
  %v1577 = vshrl.u32 %v1576, 7
  %v1578 = vsub.s32 %v1575, %v1577
  %v1579 = vrot.slane %v1565, %v1578
  %v1580 = vcombine.high %v1572, %v1572
  %v1581 = vcombine.high %v1579, %v1579
  %v1582 = vcombine.high %v1384, %v1384
  %v1584 = vunpack.c.l.s4 1983009808
  %v1585 = vunpack.c.0.s8 %v1584
  %v1586 = vlaneseq
  %v1587 = vshrl.u32 %v1586, 7
  %v1588 = vsub.s32 %v1585, %v1587
  %v1589 = vrot.slane %v1384, %v1588
  %v1591 = vunpack.c.l.s4 1983009808
  %v1592 = vunpack.c.0.s8 %v1591
  %v1593 = vlaneseq
  %v1594 = vshrl.u32 %v1593, 7
  %v1595 = vsub.s32 %v1592, %v1594
  %v1596 = vrot.slane %v1582, %v1595
  %v1597 = vcombine.high %v1589, %v1589
  %v1598 = vcombine.high %v1596, %v1596
  %v1599 = vcombine.high %v1387, %v1387
  %v1601 = vunpack.c.l.s4 1983009808
  %v1602 = vunpack.c.0.s8 %v1601
  %v1603 = vlaneseq
  %v1604 = vshrl.u32 %v1603, 7
  %v1605 = vsub.s32 %v1602, %v1604
  %v1606 = vrot.slane %v1387, %v1605
  %v1608 = vunpack.c.l.s4 1983009808
  %v1609 = vunpack.c.0.s8 %v1608
  %v1610 = vlaneseq
  %v1611 = vshrl.u32 %v1610, 7
  %v1612 = vsub.s32 %v1609, %v1611
  %v1613 = vrot.slane %v1599, %v1612
  %v1614 = vcombine.high %v1606, %v1606
  %v1615 = vcombine.high %v1613, %v1613
  %v1616 = vcombine.high %v1392, %v1392
  %v1618 = vunpack.c.l.s4 1983009808
  %v1619 = vunpack.c.0.s8 %v1618
  %v1620 = vlaneseq
  %v1621 = vshrl.u32 %v1620, 7
  %v1622 = vsub.s32 %v1619, %v1621
  %v1623 = vrot.slane %v1392, %v1622
  %v1625 = vunpack.c.l.s4 1983009808
  %v1626 = vunpack.c.0.s8 %v1625
  %v1627 = vlaneseq
  %v1628 = vshrl.u32 %v1627, 7
  %v1629 = vsub.s32 %v1626, %v1628
  %v1630 = vrot.slane %v1616, %v1629
  %v1631 = vcombine.high %v1623, %v1623
  %v1632 = vcombine.high %v1630, %v1630
  %v1633 = vcombine.high %v1395, %v1395
  %v1635 = vunpack.c.l.s4 1983009808
  %v1636 = vunpack.c.0.s8 %v1635
  %v1637 = vlaneseq
  %v1638 = vshrl.u32 %v1637, 7
  %v1639 = vsub.s32 %v1636, %v1638
  %v1640 = vrot.slane %v1395, %v1639
  %v1642 = vunpack.c.l.s4 1983009808
  %v1643 = vunpack.c.0.s8 %v1642
  %v1644 = vlaneseq
  %v1645 = vshrl.u32 %v1644, 7
  %v1646 = vsub.s32 %v1643, %v1645
  %v1647 = vrot.slane %v1633, %v1646
  %v1648 = vcombine.high %v1640, %v1640
  %v1649 = vcombine.high %v1647, %v1647
  %v1706 = vmax.f32 %v1419, 0.0
  %v1707 = vmax.f32 %v1427, 0.0
  %v1708 = vmax.f32 %v1426, 0.0
  %v1709 = vmax.f32 %v1428, 0.0
  %v1710 = vmax.f32 %v1436, 0.0
  %v1711 = vmax.f32 %v1444, 0.0
  %v1712 = vmax.f32 %v1443, 0.0
  %v1713 = vmax.f32 %v1445, 0.0
  %v1714 = vmax.f32 %v1453, 0.0
  %v1715 = vmax.f32 %v1461, 0.0
  %v1716 = vmax.f32 %v1460, 0.0
  %v1717 = vmax.f32 %v1462, 0.0
  %v1718 = vmax.f32 %v1470, 0.0
  %v1719 = vmax.f32 %v1478, 0.0
  %v1720 = vmax.f32 %v1477, 0.0
  %v1721 = vmax.f32 %v1479, 0.0
  %v1722 = vmax.f32 %v1487, 0.0
  %v1723 = vmax.f32 %v1495, 0.0
  %v1724 = vmax.f32 %v1494, 0.0
  %v1725 = vmax.f32 %v1496, 0.0
  %v1726 = vmax.f32 %v1504, 0.0
  %v1727 = vmax.f32 %v1512, 0.0
  %v1728 = vmax.f32 %v1511, 0.0
  %v1729 = vmax.f32 %v1513, 0.0
  %v1730 = vmax.f32 %v1521, 0.0
  %v1731 = vmax.f32 %v1529, 0.0
  %v1732 = vmax.f32 %v1528, 0.0
  %v1733 = vmax.f32 %v1530, 0.0
  %v1734 = vmax.f32 %v1538, 0.0
  %v1735 = vmax.f32 %v1546, 0.0
  %v1736 = vmax.f32 %v1545, 0.0
  %v1737 = vmax.f32 %v1547, 0.0
  %v1738 = vmax.f32 %v1555, 0.0
  %v1739 = vmax.f32 %v1563, 0.0
  %v1740 = vmax.f32 %v1562, 0.0
  %v1741 = vmax.f32 %v1564, 0.0
  %v1742 = vmax.f32 %v1572, 0.0
  %v1743 = vmax.f32 %v1580, 0.0
  %v1744 = vmax.f32 %v1579, 0.0
  %v1745 = vmax.f32 %v1581, 0.0
  %v1746 = vmax.f32 %v1589, 0.0
  %v1747 = vmax.f32 %v1597, 0.0
  %v1748 = vmax.f32 %v1596, 0.0
  %v1749 = vmax.f32 %v1598, 0.0
  %v1750 = vmax.f32 %v1606, 0.0
  %v1751 = vmax.f32 %v1614, 0.0
  %v1752 = vmax.f32 %v1613, 0.0
  %v1753 = vmax.f32 %v1615, 0.0
  %v1754 = vmax.f32 %v1623, 0.0
  %v1755 = vmax.f32 %v1631, 0.0
  %v1756 = vmax.f32 %v1630, 0.0
  %v1757 = vmax.f32 %v1632, 0.0
  %v1758 = vmax.f32 %v1640, 0.0
  %v1759 = vmax.f32 %v1648, 0.0
  %v1760 = vmax.f32 %v1647, 0.0
  %v1761 = vmax.f32 %v1649, 0.0
  %v1762 = vld [vmem:[#allocation2] sm:$0xff]
  %v1819 = vcombine.low %v1706, %v1707
  %v1820 = vcombine.low %v1708, %v1709
  %v1822 = vunpack.c.l.s4 1983009808
  %v1823 = vunpack.c.0.s8 %v1822
  %v1824 = vlaneseq
  %v1825 = vshrl.u32 %v1824, 7
  %v1826 = vsub.s32 %v1823, %v1825
  %v1827 = vrot.slane %v1819, %v1826
  %v1829 = vunpack.c.l.s4 1983009808
  %v1830 = vunpack.c.0.s8 %v1829
  %v1831 = vlaneseq
  %v1832 = vshrl.u32 %v1831, 7
  %v1833 = vsub.s32 %v1830, %v1832
  %v1834 = vrot.slane %v1820, %v1833
  %v1835 = vcombine.low %v1827, %v1834
  %v1836 = vcombine.low %v1710, %v1711
  %v1838 = vunpack.c.l.s4 1983009808
  %v1839 = vunpack.c.0.s8 %v1838
  %v1840 = vlaneseq
  %v1841 = vshrl.u32 %v1840, 7
  %v1842 = vsub.s32 %v1839, %v1841
  %v1843 = vrot.slane %v1836, %v1842
  %v1845 = vunpack.c.l.s4 1983009808
  %v1846 = vunpack.c.0.s8 %v1845
  %v1847 = vlaneseq
  %v1848 = vshrl.u32 %v1847, 7
  %v1849 = vsub.s32 %v1846, %v1848
  %v1850 = vrot.slane %v1712, %v1849
  %v1851 = vcombine.low %v1843, %v1850
  %v1852 = vcombine.low %v1713, %v1714
  %v1853 = vcombine.low %v1715, %v1716
  %v1855 = vunpack.c.l.s4 1983009808
  %v1856 = vunpack.c.0.s8 %v1855
  %v1857 = vlaneseq
  %v1858 = vshrl.u32 %v1857, 7
  %v1859 = vsub.s32 %v1856, %v1858
  %v1860 = vrot.slane %v1852, %v1859
  %v1862 = vunpack.c.l.s4 1983009808
  %v1863 = vunpack.c.0.s8 %v1862
  %v1864 = vlaneseq
  %v1865 = vshrl.u32 %v1864, 7
  %v1866 = vsub.s32 %v1863, %v1865
  %v1867 = vrot.slane %v1853, %v1866
  %v1868 = vcombine.low %v1860, %v1867
  %v1869 = vcombine.low %v1717, %v1718
  %v1871 = vunpack.c.l.s4 1983009808
  %v1872 = vunpack.c.0.s8 %v1871
  %v1873 = vlaneseq
  %v1874 = vshrl.u32 %v1873, 7
  %v1875 = vsub.s32 %v1872, %v1874
  %v1876 = vrot.slane %v1869, %v1875
  %v1878 = vunpack.c.l.s4 1983009808
  %v1879 = vunpack.c.0.s8 %v1878
  %v1880 = vlaneseq
  %v1881 = vshrl.u32 %v1880, 7
  %v1882 = vsub.s32 %v1879, %v1881
  %v1883 = vrot.slane %v1719, %v1882
  %v1884 = vcombine.low %v1876, %v1883
  %v1885 = vcombine.low %v1720, %v1721
  %v1886 = vcombine.low %v1722, %v1723
  %v1888 = vunpack.c.l.s4 1983009808
  %v1889 = vunpack.c.0.s8 %v1888
  %v1890 = vlaneseq
  %v1891 = vshrl.u32 %v1890, 7
  %v1892 = vsub.s32 %v1889, %v1891
  %v1893 = vrot.slane %v1885, %v1892
  %v1895 = vunpack.c.l.s4 1983009808
  %v1896 = vunpack.c.0.s8 %v1895
  %v1897 = vlaneseq
  %v1898 = vshrl.u32 %v1897, 7
  %v1899 = vsub.s32 %v1896, %v1898
  %v1900 = vrot.slane %v1886, %v1899
  %v1901 = vcombine.low %v1893, %v1900
  %v1902 = vcombine.low %v1724, %v1725
  %v1904 = vunpack.c.l.s4 1983009808
  %v1905 = vunpack.c.0.s8 %v1904
  %v1906 = vlaneseq
  %v1907 = vshrl.u32 %v1906, 7
  %v1908 = vsub.s32 %v1905, %v1907
  %v1909 = vrot.slane %v1902, %v1908
  %v1911 = vunpack.c.l.s4 1983009808
  %v1912 = vunpack.c.0.s8 %v1911
  %v1913 = vlaneseq
  %v1914 = vshrl.u32 %v1913, 7
  %v1915 = vsub.s32 %v1912, %v1914
  %v1916 = vrot.slane %v1726, %v1915
  %v1917 = vcombine.low %v1909, %v1916
  %v1918 = vcombine.low %v1727, %v1728
  %v1919 = vcombine.low %v1729, %v1730
  %v1921 = vunpack.c.l.s4 1983009808
  %v1922 = vunpack.c.0.s8 %v1921
  %v1923 = vlaneseq
  %v1924 = vshrl.u32 %v1923, 7
  %v1925 = vsub.s32 %v1922, %v1924
  %v1926 = vrot.slane %v1918, %v1925
  %v1928 = vunpack.c.l.s4 1983009808
  %v1929 = vunpack.c.0.s8 %v1928
  %v1930 = vlaneseq
  %v1931 = vshrl.u32 %v1930, 7
  %v1932 = vsub.s32 %v1929, %v1931
  %v1933 = vrot.slane %v1919, %v1932
  %v1934 = vcombine.low %v1926, %v1933
  %v1935 = vcombine.low %v1731, %v1732
  %v1937 = vunpack.c.l.s4 1983009808
  %v1938 = vunpack.c.0.s8 %v1937
  %v1939 = vlaneseq
  %v1940 = vshrl.u32 %v1939, 7
  %v1941 = vsub.s32 %v1938, %v1940
  %v1942 = vrot.slane %v1935, %v1941
  %v1944 = vunpack.c.l.s4 1983009808
  %v1945 = vunpack.c.0.s8 %v1944
  %v1946 = vlaneseq
  %v1947 = vshrl.u32 %v1946, 7
  %v1948 = vsub.s32 %v1945, %v1947
  %v1949 = vrot.slane %v1733, %v1948
  %v1950 = vcombine.low %v1942, %v1949
  %v1951 = vcombine.low %v1734, %v1735
  %v1952 = vcombine.low %v1736, %v1737
  %v1954 = vunpack.c.l.s4 1983009808
  %v1955 = vunpack.c.0.s8 %v1954
  %v1956 = vlaneseq
  %v1957 = vshrl.u32 %v1956, 7
  %v1958 = vsub.s32 %v1955, %v1957
  %v1959 = vrot.slane %v1951, %v1958
  %v1961 = vunpack.c.l.s4 1983009808
  %v1962 = vunpack.c.0.s8 %v1961
  %v1963 = vlaneseq
  %v1964 = vshrl.u32 %v1963, 7
  %v1965 = vsub.s32 %v1962, %v1964
  %v1966 = vrot.slane %v1952, %v1965
  %v1967 = vcombine.low %v1959, %v1966
  %v1968 = vcombine.low %v1738, %v1739
  %v1970 = vunpack.c.l.s4 1983009808
  %v1971 = vunpack.c.0.s8 %v1970
  %v1972 = vlaneseq
  %v1973 = vshrl.u32 %v1972, 7
  %v1974 = vsub.s32 %v1971, %v1973
  %v1975 = vrot.slane %v1968, %v1974
  %v1977 = vunpack.c.l.s4 1983009808
  %v1978 = vunpack.c.0.s8 %v1977
  %v1979 = vlaneseq
  %v1980 = vshrl.u32 %v1979, 7
  %v1981 = vsub.s32 %v1978, %v1980
  %v1982 = vrot.slane %v1740, %v1981
  %v1983 = vcombine.low %v1975, %v1982
  %v1984 = vcombine.low %v1741, %v1742
  %v1985 = vcombine.low %v1743, %v1744
  %v1987 = vunpack.c.l.s4 1983009808
  %v1988 = vunpack.c.0.s8 %v1987
  %v1989 = vlaneseq
  %v1990 = vshrl.u32 %v1989, 7
  %v1991 = vsub.s32 %v1988, %v1990
  %v1992 = vrot.slane %v1984, %v1991
  %v1994 = vunpack.c.l.s4 1983009808
  %v1995 = vunpack.c.0.s8 %v1994
  %v1996 = vlaneseq
  %v1997 = vshrl.u32 %v1996, 7
  %v1998 = vsub.s32 %v1995, %v1997
  %v1999 = vrot.slane %v1985, %v1998
  %v2000 = vcombine.low %v1992, %v1999
  %v2001 = vcombine.low %v1745, %v1746
  %v2003 = vunpack.c.l.s4 1983009808
  %v2004 = vunpack.c.0.s8 %v2003
  %v2005 = vlaneseq
  %v2006 = vshrl.u32 %v2005, 7
  %v2007 = vsub.s32 %v2004, %v2006
  %v2008 = vrot.slane %v2001, %v2007
  %v2010 = vunpack.c.l.s4 1983009808
  %v2011 = vunpack.c.0.s8 %v2010
  %v2012 = vlaneseq
  %v2013 = vshrl.u32 %v2012, 7
  %v2014 = vsub.s32 %v2011, %v2013
  %v2015 = vrot.slane %v1747, %v2014
  %v2016 = vcombine.low %v2008, %v2015
  %v2017 = vcombine.low %v1748, %v1749
  %v2018 = vcombine.low %v1750, %v1751
  %v2020 = vunpack.c.l.s4 1983009808
  %v2021 = vunpack.c.0.s8 %v2020
  %v2022 = vlaneseq
  %v2023 = vshrl.u32 %v2022, 7
  %v2024 = vsub.s32 %v2021, %v2023
  %v2025 = vrot.slane %v2017, %v2024
  %v2027 = vunpack.c.l.s4 1983009808
  %v2028 = vunpack.c.0.s8 %v2027
  %v2029 = vlaneseq
  %v2030 = vshrl.u32 %v2029, 7
  %v2031 = vsub.s32 %v2028, %v2030
  %v2032 = vrot.slane %v2018, %v2031
  %v2033 = vcombine.low %v2025, %v2032
  %v2034 = vcombine.low %v1752, %v1753
  %v2036 = vunpack.c.l.s4 1983009808
  %v2037 = vunpack.c.0.s8 %v2036
  %v2038 = vlaneseq
  %v2039 = vshrl.u32 %v2038, 7
  %v2040 = vsub.s32 %v2037, %v2039
  %v2041 = vrot.slane %v2034, %v2040
  %v2043 = vunpack.c.l.s4 1983009808
  %v2044 = vunpack.c.0.s8 %v2043
  %v2045 = vlaneseq
  %v2046 = vshrl.u32 %v2045, 7
  %v2047 = vsub.s32 %v2044, %v2046
  %v2048 = vrot.slane %v1754, %v2047
  %v2049 = vcombine.low %v2041, %v2048
  %v2050 = vcombine.low %v1755, %v1756
  %v2051 = vcombine.low %v1757, %v1758
  %v2053 = vunpack.c.l.s4 1983009808
  %v2054 = vunpack.c.0.s8 %v2053
  %v2055 = vlaneseq
  %v2056 = vshrl.u32 %v2055, 7
  %v2057 = vsub.s32 %v2054, %v2056
  %v2058 = vrot.slane %v2050, %v2057
  %v2060 = vunpack.c.l.s4 1983009808
  %v2061 = vunpack.c.0.s8 %v2060
  %v2062 = vlaneseq
  %v2063 = vshrl.u32 %v2062, 7
  %v2064 = vsub.s32 %v2061, %v2063
  %v2065 = vrot.slane %v2051, %v2064
  %v2066 = vcombine.low %v2058, %v2065
  %v2067 = vcombine.low %v1759, %v1760
  %v2069 = vunpack.c.l.s4 1983009808
  %v2070 = vunpack.c.0.s8 %v2069
  %v2071 = vlaneseq
  %v2072 = vshrl.u32 %v2071, 7
  %v2073 = vsub.s32 %v2070, %v2072
  %v2074 = vrot.slane %v2067, %v2073
  %v2076 = vunpack.c.l.s4 1983009808
  %v2077 = vunpack.c.0.s8 %v2076
  %v2078 = vlaneseq
  %v2079 = vshrl.u32 %v2078, 7
  %v2080 = vsub.s32 %v2077, %v2079
  %v2081 = vrot.slane %v1761, %v2080
  %v2082 = vcombine.low %v2074, %v2081
  %vm2099 = vcmask 523264
  %v2100 = vsel %vm2099, %v1835, -inf
  %vm2101 = vcmask 521216
  %v2102 = vsel %vm2101, %v1851, -inf
  %v2103 = vmax.f32 %v2100, %v2102
  %v2104 = vrot.slane %v2103, 4
  %v2105 = vmax.f32 %v2103, %v2104
  %v2106 = vrot.slane %v2105, 2
  %v2107 = vmax.f32 %v2105, %v2106
  %v2108 = vrot.slane %v2107, 1
  %v2109 = vmax.f32 %v2107, %v2108
  %v2110 = vsel %vm2099, %v1868, -inf
  %v2111 = vsel %vm2101, %v1884, -inf
  %v2112 = vmax.f32 %v2110, %v2111
  %v2113 = vrot.slane %v2112, 4
  %v2114 = vmax.f32 %v2112, %v2113
  %v2115 = vrot.slane %v2114, 2
  %v2116 = vmax.f32 %v2114, %v2115
  %v2117 = vrot.slane %v2116, 1
  %v2118 = vmax.f32 %v2116, %v2117
  %v2119 = vsel %vm2099, %v1901, -inf
  %v2120 = vsel %vm2101, %v1917, -inf
  %v2121 = vmax.f32 %v2119, %v2120
  %v2122 = vrot.slane %v2121, 4
  %v2123 = vmax.f32 %v2121, %v2122
  %v2124 = vrot.slane %v2123, 2
  %v2125 = vmax.f32 %v2123, %v2124
  %v2126 = vrot.slane %v2125, 1
  %v2127 = vmax.f32 %v2125, %v2126
  %v2128 = vsel %vm2099, %v1934, -inf
  %v2129 = vsel %vm2101, %v1950, -inf
  %v2130 = vmax.f32 %v2128, %v2129
  %v2131 = vrot.slane %v2130, 4
  %v2132 = vmax.f32 %v2130, %v2131
  %v2133 = vrot.slane %v2132, 2
  %v2134 = vmax.f32 %v2132, %v2133
  %v2135 = vrot.slane %v2134, 1
  %v2136 = vmax.f32 %v2134, %v2135
  %v2137 = vsel %vm2099, %v1967, -inf
  %v2138 = vsel %vm2101, %v1983, -inf
  %v2139 = vmax.f32 %v2137, %v2138
  %v2140 = vrot.slane %v2139, 4
  %v2141 = vmax.f32 %v2139, %v2140
  %v2142 = vrot.slane %v2141, 2
  %v2143 = vmax.f32 %v2141, %v2142
  %v2144 = vrot.slane %v2143, 1
  %v2145 = vmax.f32 %v2143, %v2144
  %v2146 = vsel %vm2099, %v2000, -inf
  %v2147 = vsel %vm2101, %v2016, -inf
  %v2148 = vmax.f32 %v2146, %v2147
  %v2149 = vrot.slane %v2148, 4
  %v2150 = vmax.f32 %v2148, %v2149
  %v2151 = vrot.slane %v2150, 2
  %v2152 = vmax.f32 %v2150, %v2151
  %v2153 = vrot.slane %v2152, 1
  %v2154 = vmax.f32 %v2152, %v2153
  %v2155 = vsel %vm2099, %v2033, -inf
  %v2156 = vsel %vm2101, %v2049, -inf
  %v2157 = vmax.f32 %v2155, %v2156
  %v2158 = vrot.slane %v2157, 4
  %v2159 = vmax.f32 %v2157, %v2158
  %v2160 = vrot.slane %v2159, 2
  %v2161 = vmax.f32 %v2159, %v2160
  %v2162 = vrot.slane %v2161, 1
  %v2163 = vmax.f32 %v2161, %v2162
  %v2164 = vsel %vm2099, %v2066, -inf
  %v2165 = vsel %vm2101, %v2082, -inf
  %v2166 = vmax.f32 %v2164, %v2165
  %v2167 = vrot.slane %v2166, 4
  %v2168 = vmax.f32 %v2166, %v2167
  %v2169 = vrot.slane %v2168, 2
  %v2170 = vmax.f32 %v2168, %v2169
  %v2171 = vrot.slane %v2170, 1
  %v2172 = vmax.f32 %v2170, %v2171
  %vm2181 = vcmask 1041409
  %v2182 = vsel %vm2181, %v2118, %v2109
  %vm2183 = vcmask 1042434
  %v2184 = vsel %vm2183, %v2127, %v2182
  %vm2185 = vcmask 1043459
  %v2186 = vsel %vm2185, %v2136, %v2184
  %vm2187 = vcmask 1044484
  %v2188 = vsel %vm2187, %v2145, %v2186
  %vm2189 = vcmask 1045509
  %v2190 = vsel %vm2189, %v2154, %v2188
  %vm2191 = vcmask 1046534
  %v2192 = vsel %vm2191, %v2163, %v2190
  %vm2193 = vcmask 1047559
  %v2194 = vsel %vm2193, %v2172, %v2192
  %v2196 = vmax.f32 %v1762, %v2194
  %2197 = vst.msk [vmem:[#allocation2] sm:$0xff] %vm2099, %v2196
  %s2198 = scalar_lea.vmem %s0, 8
  %v2199 = vld [vmem:[%s2198] sm:$0xff]
  %v2200 = vlaneseq
  %v2201 = vshrl.u32 %v2200, 7
  %v2202 = vsub.s32 0, %v2201
  %v2203 = vrot.slane %v2199, %v2202
  %2205 = vbcast.lane.b32.xlu0 %v2203, 256
  %v2206 = vpop.permute.xlu0 %2205
  %s2208 = sor.u32 256, 8
  %2209 = vbcast.lane.b32.xlu0 %v2203, %s2208
  %v2210 = vpop.permute.xlu0 %2209
  %v2211 = vlaneseq
  %v2212 = vshrl.u32 %v2211, 7
  %v2213 = vsub.s32 1, %v2212
  %v2214 = vrot.slane %v2199, %v2213
  %2216 = vbcast.lane.b32.xlu0 %v2214, 256
  %v2217 = vpop.permute.xlu0 %2216
  %s2219 = sor.u32 256, 8
  %2220 = vbcast.lane.b32.xlu0 %v2214, %s2219
  %v2221 = vpop.permute.xlu0 %2220
  %v2222 = vlaneseq
  %v2223 = vshrl.u32 %v2222, 7
  %v2224 = vsub.s32 2, %v2223
  %v2225 = vrot.slane %v2199, %v2224
  %2227 = vbcast.lane.b32.xlu0 %v2225, 256
  %v2228 = vpop.permute.xlu0 %2227
  %s2230 = sor.u32 256, 8
  %2231 = vbcast.lane.b32.xlu0 %v2225, %s2230
  %v2232 = vpop.permute.xlu0 %2231
  %v2233 = vlaneseq
  %v2234 = vshrl.u32 %v2233, 7
  %v2235 = vsub.s32 3, %v2234
  %v2236 = vrot.slane %v2199, %v2235
  %2238 = vbcast.lane.b32.xlu0 %v2236, 256
  %v2239 = vpop.permute.xlu0 %2238
  %s2241 = sor.u32 256, 8
  %2242 = vbcast.lane.b32.xlu0 %v2236, %s2241
  %v2243 = vpop.permute.xlu0 %2242
  %v2244 = vlaneseq
  %v2245 = vshrl.u32 %v2244, 7
  %v2246 = vsub.s32 4, %v2245
  %v2247 = vrot.slane %v2199, %v2246
  %2249 = vbcast.lane.b32.xlu0 %v2247, 256
  %v2250 = vpop.permute.xlu0 %2249
  %s2252 = sor.u32 256, 8
  %2253 = vbcast.lane.b32.xlu0 %v2247, %s2252
  %v2254 = vpop.permute.xlu0 %2253
  %v2255 = vlaneseq
  %v2256 = vshrl.u32 %v2255, 7
  %v2257 = vsub.s32 5, %v2256
  %v2258 = vrot.slane %v2199, %v2257
  %2260 = vbcast.lane.b32.xlu0 %v2258, 256
  %v2261 = vpop.permute.xlu0 %2260
  %s2263 = sor.u32 256, 8
  %2264 = vbcast.lane.b32.xlu0 %v2258, %s2263
  %v2265 = vpop.permute.xlu0 %2264
  %v2266 = vlaneseq
  %v2267 = vshrl.u32 %v2266, 7
  %v2268 = vsub.s32 6, %v2267
  %v2269 = vrot.slane %v2199, %v2268
  %2271 = vbcast.lane.b32.xlu0 %v2269, 256
  %v2272 = vpop.permute.xlu0 %2271
  %s2274 = sor.u32 256, 8
  %2275 = vbcast.lane.b32.xlu0 %v2269, %s2274
  %v2276 = vpop.permute.xlu0 %2275
  %v2277 = vlaneseq
  %v2278 = vshrl.u32 %v2277, 7
  %v2279 = vsub.s32 7, %v2278
  %v2280 = vrot.slane %v2199, %v2279
  %2282 = vbcast.lane.b32.xlu0 %v2280, 256
  %v2283 = vpop.permute.xlu0 %2282
  %s2285 = sor.u32 256, 8
  %2286 = vbcast.lane.b32.xlu0 %v2280, %s2285
  %v2287 = vpop.permute.xlu0 %2286
  %vm2288 = vcmp.eq.s32.totalorder %v2206, %v35
  %vm2289 = vcmp.eq.s32.totalorder %v2210, %v35
  %vm2290 = vcmp.eq.s32.totalorder %v2217, %v35
  %vm2291 = vcmp.eq.s32.totalorder %v2221, %v35
  %vm2292 = vcmp.eq.s32.totalorder %v2228, %v35
  %vm2293 = vcmp.eq.s32.totalorder %v2232, %v35
  %vm2294 = vcmp.eq.s32.totalorder %v2239, %v35
  %vm2295 = vcmp.eq.s32.totalorder %v2243, %v35
  %vm2296 = vcmp.eq.s32.totalorder %v2250, %v35
  %vm2297 = vcmp.eq.s32.totalorder %v2254, %v35
  %vm2298 = vcmp.eq.s32.totalorder %v2261, %v35
  %vm2299 = vcmp.eq.s32.totalorder %v2265, %v35
  %vm2300 = vcmp.eq.s32.totalorder %v2272, %v35
  %vm2301 = vcmp.eq.s32.totalorder %v2276, %v35
  %vm2302 = vcmp.eq.s32.totalorder %v2283, %v35
  %vm2303 = vcmp.eq.s32.totalorder %v2287, %v35
  %s2304 = scalar_lea.vmem %s0, 24
  %v2305 = vld [vmem:[%s2304] sm:$0xff]
  %v2306 = vlaneseq
  %v2307 = vshrl.u32 %v2306, 7
  %v2308 = vsub.s32 0, %v2307
  %v2309 = vrot.slane %v2305, %v2308
  %2311 = vbcast.lane.b32.xlu0 %v2309, 256
  %v2312 = vpop.permute.xlu0 %2311
  %s2314 = sor.u32 256, 8
  %2315 = vbcast.lane.b32.xlu0 %v2309, %s2314
  %v2316 = vpop.permute.xlu0 %2315
  %v2317 = vlaneseq
  %v2318 = vshrl.u32 %v2317, 7
  %v2319 = vsub.s32 1, %v2318
  %v2320 = vrot.slane %v2305, %v2319
  %2322 = vbcast.lane.b32.xlu0 %v2320, 256
  %v2323 = vpop.permute.xlu0 %2322
  %s2325 = sor.u32 256, 8
  %2326 = vbcast.lane.b32.xlu0 %v2320, %s2325
  %v2327 = vpop.permute.xlu0 %2326
  %v2328 = vlaneseq
  %v2329 = vshrl.u32 %v2328, 7
  %v2330 = vsub.s32 2, %v2329
  %v2331 = vrot.slane %v2305, %v2330
  %2333 = vbcast.lane.b32.xlu0 %v2331, 256
  %v2334 = vpop.permute.xlu0 %2333
  %s2336 = sor.u32 256, 8
  %2337 = vbcast.lane.b32.xlu0 %v2331, %s2336
  %v2338 = vpop.permute.xlu0 %2337
  %v2339 = vlaneseq
  %v2340 = vshrl.u32 %v2339, 7
  %v2341 = vsub.s32 3, %v2340
  %v2342 = vrot.slane %v2305, %v2341
  %2344 = vbcast.lane.b32.xlu0 %v2342, 256
  %v2345 = vpop.permute.xlu0 %2344
  %s2347 = sor.u32 256, 8
  %2348 = vbcast.lane.b32.xlu0 %v2342, %s2347
  %v2349 = vpop.permute.xlu0 %2348
  %v2350 = vlaneseq
  %v2351 = vshrl.u32 %v2350, 7
  %v2352 = vsub.s32 4, %v2351
  %v2353 = vrot.slane %v2305, %v2352
  %2355 = vbcast.lane.b32.xlu0 %v2353, 256
  %v2356 = vpop.permute.xlu0 %2355
  %s2358 = sor.u32 256, 8
  %2359 = vbcast.lane.b32.xlu0 %v2353, %s2358
  %v2360 = vpop.permute.xlu0 %2359
  %v2361 = vlaneseq
  %v2362 = vshrl.u32 %v2361, 7
  %v2363 = vsub.s32 5, %v2362
  %v2364 = vrot.slane %v2305, %v2363
  %2366 = vbcast.lane.b32.xlu0 %v2364, 256
  %v2367 = vpop.permute.xlu0 %2366
  %s2369 = sor.u32 256, 8
  %2370 = vbcast.lane.b32.xlu0 %v2364, %s2369
  %v2371 = vpop.permute.xlu0 %2370
  %v2372 = vlaneseq
  %v2373 = vshrl.u32 %v2372, 7
  %v2374 = vsub.s32 6, %v2373
  %v2375 = vrot.slane %v2305, %v2374
  %2377 = vbcast.lane.b32.xlu0 %v2375, 256
  %v2378 = vpop.permute.xlu0 %2377
  %s2380 = sor.u32 256, 8
  %2381 = vbcast.lane.b32.xlu0 %v2375, %s2380
  %v2382 = vpop.permute.xlu0 %2381
  %v2383 = vlaneseq
  %v2384 = vshrl.u32 %v2383, 7
  %v2385 = vsub.s32 7, %v2384
  %v2386 = vrot.slane %v2305, %v2385
  %2388 = vbcast.lane.b32.xlu0 %v2386, 256
  %v2389 = vpop.permute.xlu0 %2388
  %s2391 = sor.u32 256, 8
  %2392 = vbcast.lane.b32.xlu0 %v2386, %s2391
  %v2393 = vpop.permute.xlu0 %2392
  %vm2394 = vcmp.eq.s32.totalorder %v2312, %v35
  %vm2395 = vcmp.eq.s32.totalorder %v2316, %v35
  %vm2396 = vcmp.eq.s32.totalorder %v2323, %v35
  %vm2397 = vcmp.eq.s32.totalorder %v2327, %v35
  %vm2398 = vcmp.eq.s32.totalorder %v2334, %v35
  %vm2399 = vcmp.eq.s32.totalorder %v2338, %v35
  %vm2400 = vcmp.eq.s32.totalorder %v2345, %v35
  %vm2401 = vcmp.eq.s32.totalorder %v2349, %v35
  %vm2402 = vcmp.eq.s32.totalorder %v2356, %v35
  %vm2403 = vcmp.eq.s32.totalorder %v2360, %v35
  %vm2404 = vcmp.eq.s32.totalorder %v2367, %v35
  %vm2405 = vcmp.eq.s32.totalorder %v2371, %v35
  %vm2406 = vcmp.eq.s32.totalorder %v2378, %v35
  %vm2407 = vcmp.eq.s32.totalorder %v2382, %v35
  %vm2408 = vcmp.eq.s32.totalorder %v2389, %v35
  %vm2409 = vcmp.eq.s32.totalorder %v2393, %v35
  %vm2410 = vmor %vm2288, %vm2394
  %vm2411 = vmor %vm2289, %vm2395
  %vm2412 = vmor %vm2290, %vm2396
  %vm2413 = vmor %vm2291, %vm2397
  %vm2414 = vmor %vm2292, %vm2398
  %vm2415 = vmor %vm2293, %vm2399
  %vm2416 = vmor %vm2294, %vm2400
  %vm2417 = vmor %vm2295, %vm2401
  %vm2418 = vmor %vm2296, %vm2402
  %vm2419 = vmor %vm2297, %vm2403
  %vm2420 = vmor %vm2298, %vm2404
  %vm2421 = vmor %vm2299, %vm2405
  %vm2422 = vmor %vm2300, %vm2406
  %vm2423 = vmor %vm2301, %vm2407
  %vm2424 = vmor %vm2302, %vm2408
  %vm2425 = vmor %vm2303, %vm2409
  %s2426 = scalar_lea.vmem %s0, 40
  %v2427 = vld [vmem:[%s2426] sm:$0xff]
  %v2428 = vlaneseq
  %v2429 = vshrl.u32 %v2428, 7
  %v2430 = vsub.s32 0, %v2429
  %v2431 = vrot.slane %v2427, %v2430
  %2433 = vbcast.lane.b32.xlu0 %v2431, 256
  %v2434 = vpop.permute.xlu0 %2433
  %s2436 = sor.u32 256, 8
  %2437 = vbcast.lane.b32.xlu0 %v2431, %s2436
  %v2438 = vpop.permute.xlu0 %2437
  %v2439 = vlaneseq
  %v2440 = vshrl.u32 %v2439, 7
  %v2441 = vsub.s32 1, %v2440
  %v2442 = vrot.slane %v2427, %v2441
  %2444 = vbcast.lane.b32.xlu0 %v2442, 256
  %v2445 = vpop.permute.xlu0 %2444
  %s2447 = sor.u32 256, 8
  %2448 = vbcast.lane.b32.xlu0 %v2442, %s2447
  %v2449 = vpop.permute.xlu0 %2448
  %v2450 = vlaneseq
  %v2451 = vshrl.u32 %v2450, 7
  %v2452 = vsub.s32 2, %v2451
  %v2453 = vrot.slane %v2427, %v2452
  %2455 = vbcast.lane.b32.xlu0 %v2453, 256
  %v2456 = vpop.permute.xlu0 %2455
  %s2458 = sor.u32 256, 8
  %2459 = vbcast.lane.b32.xlu0 %v2453, %s2458
  %v2460 = vpop.permute.xlu0 %2459
  %v2461 = vlaneseq
  %v2462 = vshrl.u32 %v2461, 7
  %v2463 = vsub.s32 3, %v2462
  %v2464 = vrot.slane %v2427, %v2463
  %2466 = vbcast.lane.b32.xlu0 %v2464, 256
  %v2467 = vpop.permute.xlu0 %2466
  %s2469 = sor.u32 256, 8
  %2470 = vbcast.lane.b32.xlu0 %v2464, %s2469
  %v2471 = vpop.permute.xlu0 %2470
  %v2472 = vlaneseq
  %v2473 = vshrl.u32 %v2472, 7
  %v2474 = vsub.s32 4, %v2473
  %v2475 = vrot.slane %v2427, %v2474
  %2477 = vbcast.lane.b32.xlu0 %v2475, 256
  %v2478 = vpop.permute.xlu0 %2477
  %s2480 = sor.u32 256, 8
  %2481 = vbcast.lane.b32.xlu0 %v2475, %s2480
  %v2482 = vpop.permute.xlu0 %2481
  %v2483 = vlaneseq
  %v2484 = vshrl.u32 %v2483, 7
  %v2485 = vsub.s32 5, %v2484
  %v2486 = vrot.slane %v2427, %v2485
  %2488 = vbcast.lane.b32.xlu0 %v2486, 256
  %v2489 = vpop.permute.xlu0 %2488
  %s2491 = sor.u32 256, 8
  %2492 = vbcast.lane.b32.xlu0 %v2486, %s2491
  %v2493 = vpop.permute.xlu0 %2492
  %v2494 = vlaneseq
  %v2495 = vshrl.u32 %v2494, 7
  %v2496 = vsub.s32 6, %v2495
  %v2497 = vrot.slane %v2427, %v2496
  %2499 = vbcast.lane.b32.xlu0 %v2497, 256
  %v2500 = vpop.permute.xlu0 %2499
  %s2502 = sor.u32 256, 8
  %2503 = vbcast.lane.b32.xlu0 %v2497, %s2502
  %v2504 = vpop.permute.xlu0 %2503
  %v2505 = vlaneseq
  %v2506 = vshrl.u32 %v2505, 7
  %v2507 = vsub.s32 7, %v2506
  %v2508 = vrot.slane %v2427, %v2507
  %2510 = vbcast.lane.b32.xlu0 %v2508, 256
  %v2511 = vpop.permute.xlu0 %2510
  %s2513 = sor.u32 256, 8
  %2514 = vbcast.lane.b32.xlu0 %v2508, %s2513
  %v2515 = vpop.permute.xlu0 %2514
  %vm2516 = vcmp.eq.s32.totalorder %v2434, %v35
  %vm2517 = vcmp.eq.s32.totalorder %v2438, %v35
  %vm2518 = vcmp.eq.s32.totalorder %v2445, %v35
  %vm2519 = vcmp.eq.s32.totalorder %v2449, %v35
  %vm2520 = vcmp.eq.s32.totalorder %v2456, %v35
  %vm2521 = vcmp.eq.s32.totalorder %v2460, %v35
  %vm2522 = vcmp.eq.s32.totalorder %v2467, %v35
  %vm2523 = vcmp.eq.s32.totalorder %v2471, %v35
  %vm2524 = vcmp.eq.s32.totalorder %v2478, %v35
  %vm2525 = vcmp.eq.s32.totalorder %v2482, %v35
  %vm2526 = vcmp.eq.s32.totalorder %v2489, %v35
  %vm2527 = vcmp.eq.s32.totalorder %v2493, %v35
  %vm2528 = vcmp.eq.s32.totalorder %v2500, %v35
  %vm2529 = vcmp.eq.s32.totalorder %v2504, %v35
  %vm2530 = vcmp.eq.s32.totalorder %v2511, %v35
  %vm2531 = vcmp.eq.s32.totalorder %v2515, %v35
  %vm2532 = vmor %vm2410, %vm2516
  %vm2533 = vmor %vm2411, %vm2517
  %vm2534 = vmor %vm2412, %vm2518
  %vm2535 = vmor %vm2413, %vm2519
  %vm2536 = vmor %vm2414, %vm2520
  %vm2537 = vmor %vm2415, %vm2521
  %vm2538 = vmor %vm2416, %vm2522
  %vm2539 = vmor %vm2417, %vm2523
  %vm2540 = vmor %vm2418, %vm2524
  %vm2541 = vmor %vm2419, %vm2525
  %vm2542 = vmor %vm2420, %vm2526
  %vm2543 = vmor %vm2421, %vm2527
  %vm2544 = vmor %vm2422, %vm2528
  %vm2545 = vmor %vm2423, %vm2529
  %vm2546 = vmor %vm2424, %vm2530
  %vm2547 = vmor %vm2425, %vm2531
  %v2548 = vsel %vm2532, 1, 0
  %v2549 = vsel %vm2533, 1, 0
  %v2550 = vsel %vm2534, 1, 0
  %v2551 = vsel %vm2535, 1, 0
  %v2552 = vsel %vm2536, 1, 0
  %v2553 = vsel %vm2537, 1, 0
  %v2554 = vsel %vm2538, 1, 0
  %v2555 = vsel %vm2539, 1, 0
  %v2556 = vsel %vm2540, 1, 0
  %v2557 = vsel %vm2541, 1, 0
  %v2558 = vsel %vm2542, 1, 0
  %v2559 = vsel %vm2543, 1, 0
  %v2560 = vsel %vm2544, 1, 0
  %v2561 = vsel %vm2545, 1, 0
  %v2562 = vsel %vm2546, 1, 0
  %v2563 = vsel %vm2547, 1, 0
  %v2564 = vcvt.s32.f32 %v2548
  %v2565 = vcvt.s32.f32 %v2549
  %v2566 = vcvt.s32.f32 %v2550
  %v2567 = vcvt.s32.f32 %v2551
  %v2568 = vcvt.s32.f32 %v2552
  %v2569 = vcvt.s32.f32 %v2553
  %v2570 = vcvt.s32.f32 %v2554
  %v2571 = vcvt.s32.f32 %v2555
  %v2572 = vcvt.s32.f32 %v2556
  %v2573 = vcvt.s32.f32 %v2557
  %v2574 = vcvt.s32.f32 %v2558
  %v2575 = vcvt.s32.f32 %v2559
  %v2576 = vcvt.s32.f32 %v2560
  %v2577 = vcvt.s32.f32 %v2561
  %v2578 = vcvt.s32.f32 %v2562
  %v2579 = vcvt.s32.f32 %v2563
  %v2580 = vpack.c.bf16 %v2565, %v2564
  %v2581 = vpack.c.bf16 %v2567, %v2566
  %v2582 = vpack.c.bf16 %v2569, %v2568
  %v2583 = vpack.c.bf16 %v2571, %v2570
  %v2584 = vpack.c.bf16 %v2573, %v2572
  %v2585 = vpack.c.bf16 %v2575, %v2574
  %v2586 = vpack.c.bf16 %v2577, %v2576
  %v2587 = vpack.c.bf16 %v2579, %v2578
  %v2588 = vld [vmem:[%s1] sm:$0xf]
  %v2589 = vld [vmem:[%s1 + $0x4] sm:$0xf]
  %v2590 = vld [vmem:[%s1 + $0x8] sm:$0xf]
  %v2591 = vld [vmem:[%s1 + $0xc] sm:$0xf]
  %v2592 = vld [vmem:[%s1 + $0x10] sm:$0xf]
  %v2593 = vld [vmem:[%s1 + $0x14] sm:$0xf]
  %v2594 = vld [vmem:[%s1 + $0x18] sm:$0xf]
  %v2595 = vld [vmem:[%s1 + $0x1c] sm:$0xf]
  %v2596 = vld [vmem:[%s1 + $0x20] sm:$0xf]
  %v2597 = vld [vmem:[%s1 + $0x24] sm:$0xf]
  %v2598 = vld [vmem:[%s1 + $0x28] sm:$0x1]
  %v2599 = vld [vmem:[%s2] sm:$0x1]
  %v2601 = vlaneseq
  %v2602 = vshrl.u32 %v2601, 7
  %v2603 = vsub.s32 0, %v2602
  %v2604 = vrot.slane %v2599, %v2603
  %v2613 = vcombine.high %v2580, %v2580
  %v2615 = vunpack.c.l.s4 1966171168
  %v2616 = vunpack.c.0.s8 %v2615
  %v2617 = vlaneseq
  %v2618 = vshrl.u32 %v2617, 7
  %v2619 = vsub.s32 %v2616, %v2618
  %v2620 = vrot.slane %v2580, %v2619
  %v2622 = vunpack.c.l.s4 1966171168
  %v2623 = vunpack.c.0.s8 %v2622
  %v2624 = vlaneseq
  %v2625 = vshrl.u32 %v2624, 7
  %v2626 = vsub.s32 %v2623, %v2625
  %v2627 = vrot.slane %v2613, %v2626
  %v2628 = vcombine.high %v2620, %v2620
  %v2629 = vcombine.high %v2627, %v2627
  %v2631 = vunpack.c.l.s4 1966171168
  %v2632 = vunpack.c.0.s8 %v2631
  %v2633 = vlaneseq
  %v2634 = vshrl.u32 %v2633, 7
  %v2635 = vsub.s32 %v2632, %v2634
  %v2636 = vrot.slane %v2620, %v2635
  %v2638 = vunpack.c.l.s4 1966171168
  %v2639 = vunpack.c.0.s8 %v2638
  %v2640 = vlaneseq
  %v2641 = vshrl.u32 %v2640, 7
  %v2642 = vsub.s32 %v2639, %v2641
  %v2643 = vrot.slane %v2627, %v2642
  %v2645 = vunpack.c.l.s4 1966171168
  %v2646 = vunpack.c.0.s8 %v2645
  %v2647 = vlaneseq
  %v2648 = vshrl.u32 %v2647, 7
  %v2649 = vsub.s32 %v2646, %v2648
  %v2650 = vrot.slane %v2628, %v2649
  %v2652 = vunpack.c.l.s4 1966171168
  %v2653 = vunpack.c.0.s8 %v2652
  %v2654 = vlaneseq
  %v2655 = vshrl.u32 %v2654, 7
  %v2656 = vsub.s32 %v2653, %v2655
  %v2657 = vrot.slane %v2629, %v2656
  %v2658 = vcombine.high %v2636, %v2636
  %v2659 = vcombine.high %v2643, %v2643
  %v2660 = vcombine.high %v2650, %v2650
  %v2661 = vcombine.high %v2581, %v2581
  %v2663 = vunpack.c.l.s4 1966171168
  %v2664 = vunpack.c.0.s8 %v2663
  %v2665 = vlaneseq
  %v2666 = vshrl.u32 %v2665, 7
  %v2667 = vsub.s32 %v2664, %v2666
  %v2668 = vrot.slane %v2581, %v2667
  %v2670 = vunpack.c.l.s4 1966171168
  %v2671 = vunpack.c.0.s8 %v2670
  %v2672 = vlaneseq
  %v2673 = vshrl.u32 %v2672, 7
  %v2674 = vsub.s32 %v2671, %v2673
  %v2675 = vrot.slane %v2661, %v2674
  %v2676 = vcombine.high %v2668, %v2668
  %v2677 = vcombine.high %v2675, %v2675
  %v2679 = vunpack.c.l.s4 1966171168
  %v2680 = vunpack.c.0.s8 %v2679
  %v2681 = vlaneseq
  %v2682 = vshrl.u32 %v2681, 7
  %v2683 = vsub.s32 %v2680, %v2682
  %v2684 = vrot.slane %v2668, %v2683
  %v2686 = vunpack.c.l.s4 1966171168
  %v2687 = vunpack.c.0.s8 %v2686
  %v2688 = vlaneseq
  %v2689 = vshrl.u32 %v2688, 7
  %v2690 = vsub.s32 %v2687, %v2689
  %v2691 = vrot.slane %v2675, %v2690
  %v2693 = vunpack.c.l.s4 1966171168
  %v2694 = vunpack.c.0.s8 %v2693
  %v2695 = vlaneseq
  %v2696 = vshrl.u32 %v2695, 7
  %v2697 = vsub.s32 %v2694, %v2696
  %v2698 = vrot.slane %v2676, %v2697
  %v2700 = vunpack.c.l.s4 1966171168
  %v2701 = vunpack.c.0.s8 %v2700
  %v2702 = vlaneseq
  %v2703 = vshrl.u32 %v2702, 7
  %v2704 = vsub.s32 %v2701, %v2703
  %v2705 = vrot.slane %v2677, %v2704
  %v2706 = vcombine.high %v2684, %v2684
  %v2707 = vcombine.high %v2691, %v2691
  %v2708 = vcombine.high %v2698, %v2698
  %v2709 = vcombine.high %v2582, %v2582
  %v2711 = vunpack.c.l.s4 1966171168
  %v2712 = vunpack.c.0.s8 %v2711
  %v2713 = vlaneseq
  %v2714 = vshrl.u32 %v2713, 7
  %v2715 = vsub.s32 %v2712, %v2714
  %v2716 = vrot.slane %v2582, %v2715
  %v2718 = vunpack.c.l.s4 1966171168
  %v2719 = vunpack.c.0.s8 %v2718
  %v2720 = vlaneseq
  %v2721 = vshrl.u32 %v2720, 7
  %v2722 = vsub.s32 %v2719, %v2721
  %v2723 = vrot.slane %v2709, %v2722
  %v2724 = vcombine.high %v2716, %v2716
  %v2725 = vcombine.high %v2723, %v2723
  %v2727 = vunpack.c.l.s4 1966171168
  %v2728 = vunpack.c.0.s8 %v2727
  %v2729 = vlaneseq
  %v2730 = vshrl.u32 %v2729, 7
  %v2731 = vsub.s32 %v2728, %v2730
  %v2732 = vrot.slane %v2716, %v2731
  %v2734 = vunpack.c.l.s4 1966171168
  %v2735 = vunpack.c.0.s8 %v2734
  %v2736 = vlaneseq
  %v2737 = vshrl.u32 %v2736, 7
  %v2738 = vsub.s32 %v2735, %v2737
  %v2739 = vrot.slane %v2723, %v2738
  %v2741 = vunpack.c.l.s4 1966171168
  %v2742 = vunpack.c.0.s8 %v2741
  %v2743 = vlaneseq
  %v2744 = vshrl.u32 %v2743, 7
  %v2745 = vsub.s32 %v2742, %v2744
  %v2746 = vrot.slane %v2724, %v2745
  %v2748 = vunpack.c.l.s4 1966171168
  %v2749 = vunpack.c.0.s8 %v2748
  %v2750 = vlaneseq
  %v2751 = vshrl.u32 %v2750, 7
  %v2752 = vsub.s32 %v2749, %v2751
  %v2753 = vrot.slane %v2725, %v2752
  %v2754 = vcombine.high %v2732, %v2732
  %v2755 = vcombine.high %v2739, %v2739
  %v2756 = vcombine.high %v2746, %v2746
  %v2757 = vcombine.high %v2583, %v2583
  %v2759 = vunpack.c.l.s4 1966171168
  %v2760 = vunpack.c.0.s8 %v2759
  %v2761 = vlaneseq
  %v2762 = vshrl.u32 %v2761, 7
  %v2763 = vsub.s32 %v2760, %v2762
  %v2764 = vrot.slane %v2583, %v2763
  %v2766 = vunpack.c.l.s4 1966171168
  %v2767 = vunpack.c.0.s8 %v2766
  %v2768 = vlaneseq
  %v2769 = vshrl.u32 %v2768, 7
  %v2770 = vsub.s32 %v2767, %v2769
  %v2771 = vrot.slane %v2757, %v2770
  %v2772 = vcombine.high %v2764, %v2764
  %v2773 = vcombine.high %v2771, %v2771
  %v2775 = vunpack.c.l.s4 1966171168
  %v2776 = vunpack.c.0.s8 %v2775
  %v2777 = vlaneseq
  %v2778 = vshrl.u32 %v2777, 7
  %v2779 = vsub.s32 %v2776, %v2778
  %v2780 = vrot.slane %v2764, %v2779
  %v2782 = vunpack.c.l.s4 1966171168
  %v2783 = vunpack.c.0.s8 %v2782
  %v2784 = vlaneseq
  %v2785 = vshrl.u32 %v2784, 7
  %v2786 = vsub.s32 %v2783, %v2785
  %v2787 = vrot.slane %v2771, %v2786
  %v2789 = vunpack.c.l.s4 1966171168
  %v2790 = vunpack.c.0.s8 %v2789
  %v2791 = vlaneseq
  %v2792 = vshrl.u32 %v2791, 7
  %v2793 = vsub.s32 %v2790, %v2792
  %v2794 = vrot.slane %v2772, %v2793
  %v2796 = vunpack.c.l.s4 1966171168
  %v2797 = vunpack.c.0.s8 %v2796
  %v2798 = vlaneseq
  %v2799 = vshrl.u32 %v2798, 7
  %v2800 = vsub.s32 %v2797, %v2799
  %v2801 = vrot.slane %v2773, %v2800
  %v2802 = vcombine.high %v2780, %v2780
  %v2803 = vcombine.high %v2787, %v2787
  %v2804 = vcombine.high %v2794, %v2794
  %v2805 = vcombine.high %v2584, %v2584
  %v2807 = vunpack.c.l.s4 1966171168
  %v2808 = vunpack.c.0.s8 %v2807
  %v2809 = vlaneseq
  %v2810 = vshrl.u32 %v2809, 7
  %v2811 = vsub.s32 %v2808, %v2810
  %v2812 = vrot.slane %v2584, %v2811
  %v2814 = vunpack.c.l.s4 1966171168
  %v2815 = vunpack.c.0.s8 %v2814
  %v2816 = vlaneseq
  %v2817 = vshrl.u32 %v2816, 7
  %v2818 = vsub.s32 %v2815, %v2817
  %v2819 = vrot.slane %v2805, %v2818
  %v2820 = vcombine.high %v2812, %v2812
  %v2821 = vcombine.high %v2819, %v2819
  %v2823 = vunpack.c.l.s4 1966171168
  %v2824 = vunpack.c.0.s8 %v2823
  %v2825 = vlaneseq
  %v2826 = vshrl.u32 %v2825, 7
  %v2827 = vsub.s32 %v2824, %v2826
  %v2828 = vrot.slane %v2812, %v2827
  %v2830 = vunpack.c.l.s4 1966171168
  %v2831 = vunpack.c.0.s8 %v2830
  %v2832 = vlaneseq
  %v2833 = vshrl.u32 %v2832, 7
  %v2834 = vsub.s32 %v2831, %v2833
  %v2835 = vrot.slane %v2819, %v2834
  %v2837 = vunpack.c.l.s4 1966171168
  %v2838 = vunpack.c.0.s8 %v2837
  %v2839 = vlaneseq
  %v2840 = vshrl.u32 %v2839, 7
  %v2841 = vsub.s32 %v2838, %v2840
  %v2842 = vrot.slane %v2820, %v2841
  %v2844 = vunpack.c.l.s4 1966171168
  %v2845 = vunpack.c.0.s8 %v2844
  %v2846 = vlaneseq
  %v2847 = vshrl.u32 %v2846, 7
  %v2848 = vsub.s32 %v2845, %v2847
  %v2849 = vrot.slane %v2821, %v2848
  %v2850 = vcombine.high %v2828, %v2828
  %v2851 = vcombine.high %v2835, %v2835
  %v2852 = vcombine.high %v2842, %v2842
  %v2853 = vcombine.high %v2585, %v2585
  %v2855 = vunpack.c.l.s4 1966171168
  %v2856 = vunpack.c.0.s8 %v2855
  %v2857 = vlaneseq
  %v2858 = vshrl.u32 %v2857, 7
  %v2859 = vsub.s32 %v2856, %v2858
  %v2860 = vrot.slane %v2585, %v2859
  %v2862 = vunpack.c.l.s4 1966171168
  %v2863 = vunpack.c.0.s8 %v2862
  %v2864 = vlaneseq
  %v2865 = vshrl.u32 %v2864, 7
  %v2866 = vsub.s32 %v2863, %v2865
  %v2867 = vrot.slane %v2853, %v2866
  %v2868 = vcombine.high %v2860, %v2860
  %v2869 = vcombine.high %v2867, %v2867
  %v2871 = vunpack.c.l.s4 1966171168
  %v2872 = vunpack.c.0.s8 %v2871
  %v2873 = vlaneseq
  %v2874 = vshrl.u32 %v2873, 7
  %v2875 = vsub.s32 %v2872, %v2874
  %v2876 = vrot.slane %v2860, %v2875
  %v2878 = vunpack.c.l.s4 1966171168
  %v2879 = vunpack.c.0.s8 %v2878
  %v2880 = vlaneseq
  %v2881 = vshrl.u32 %v2880, 7
  %v2882 = vsub.s32 %v2879, %v2881
  %v2883 = vrot.slane %v2867, %v2882
  %v2885 = vunpack.c.l.s4 1966171168
  %v2886 = vunpack.c.0.s8 %v2885
  %v2887 = vlaneseq
  %v2888 = vshrl.u32 %v2887, 7
  %v2889 = vsub.s32 %v2886, %v2888
  %v2890 = vrot.slane %v2868, %v2889
  %v2892 = vunpack.c.l.s4 1966171168
  %v2893 = vunpack.c.0.s8 %v2892
  %v2894 = vlaneseq
  %v2895 = vshrl.u32 %v2894, 7
  %v2896 = vsub.s32 %v2893, %v2895
  %v2897 = vrot.slane %v2869, %v2896
  %v2898 = vcombine.high %v2876, %v2876
  %v2899 = vcombine.high %v2883, %v2883
  %v2900 = vcombine.high %v2890, %v2890
  %v2901 = vcombine.high %v2586, %v2586
  %v2903 = vunpack.c.l.s4 1966171168
  %v2904 = vunpack.c.0.s8 %v2903
  %v2905 = vlaneseq
  %v2906 = vshrl.u32 %v2905, 7
  %v2907 = vsub.s32 %v2904, %v2906
  %v2908 = vrot.slane %v2586, %v2907
  %v2910 = vunpack.c.l.s4 1966171168
  %v2911 = vunpack.c.0.s8 %v2910
  %v2912 = vlaneseq
  %v2913 = vshrl.u32 %v2912, 7
  %v2914 = vsub.s32 %v2911, %v2913
  %v2915 = vrot.slane %v2901, %v2914
  %v2916 = vcombine.high %v2908, %v2908
  %v2917 = vcombine.high %v2915, %v2915
  %v2919 = vunpack.c.l.s4 1966171168
  %v2920 = vunpack.c.0.s8 %v2919
  %v2921 = vlaneseq
  %v2922 = vshrl.u32 %v2921, 7
  %v2923 = vsub.s32 %v2920, %v2922
  %v2924 = vrot.slane %v2908, %v2923
  %v2926 = vunpack.c.l.s4 1966171168
  %v2927 = vunpack.c.0.s8 %v2926
  %v2928 = vlaneseq
  %v2929 = vshrl.u32 %v2928, 7
  %v2930 = vsub.s32 %v2927, %v2929
  %v2931 = vrot.slane %v2915, %v2930
  %v2933 = vunpack.c.l.s4 1966171168
  %v2934 = vunpack.c.0.s8 %v2933
  %v2935 = vlaneseq
  %v2936 = vshrl.u32 %v2935, 7
  %v2937 = vsub.s32 %v2934, %v2936
  %v2938 = vrot.slane %v2916, %v2937
  %v2940 = vunpack.c.l.s4 1966171168
  %v2941 = vunpack.c.0.s8 %v2940
  %v2942 = vlaneseq
  %v2943 = vshrl.u32 %v2942, 7
  %v2944 = vsub.s32 %v2941, %v2943
  %v2945 = vrot.slane %v2917, %v2944
  %v2946 = vcombine.high %v2924, %v2924
  %v2947 = vcombine.high %v2931, %v2931
  %v2948 = vcombine.high %v2938, %v2938
  %v2949 = vcombine.high %v2587, %v2587
  %v2951 = vunpack.c.l.s4 1966171168
  %v2952 = vunpack.c.0.s8 %v2951
  %v2953 = vlaneseq
  %v2954 = vshrl.u32 %v2953, 7
  %v2955 = vsub.s32 %v2952, %v2954
  %v2956 = vrot.slane %v2587, %v2955
  %v2958 = vunpack.c.l.s4 1966171168
  %v2959 = vunpack.c.0.s8 %v2958
  %v2960 = vlaneseq
  %v2961 = vshrl.u32 %v2960, 7
  %v2962 = vsub.s32 %v2959, %v2961
  %v2963 = vrot.slane %v2949, %v2962
  %v2964 = vcombine.high %v2956, %v2956
  %v2965 = vcombine.high %v2963, %v2963
  %v2967 = vunpack.c.l.s4 1966171168
  %v2968 = vunpack.c.0.s8 %v2967
  %v2969 = vlaneseq
  %v2970 = vshrl.u32 %v2969, 7
  %v2971 = vsub.s32 %v2968, %v2970
  %v2972 = vrot.slane %v2956, %v2971
  %v2974 = vunpack.c.l.s4 1966171168
  %v2975 = vunpack.c.0.s8 %v2974
  %v2976 = vlaneseq
  %v2977 = vshrl.u32 %v2976, 7
  %v2978 = vsub.s32 %v2975, %v2977
  %v2979 = vrot.slane %v2963, %v2978
  %v2981 = vunpack.c.l.s4 1966171168
  %v2982 = vunpack.c.0.s8 %v2981
  %v2983 = vlaneseq
  %v2984 = vshrl.u32 %v2983, 7
  %v2985 = vsub.s32 %v2982, %v2984
  %v2986 = vrot.slane %v2964, %v2985
  %v2988 = vunpack.c.l.s4 1966171168
  %v2989 = vunpack.c.0.s8 %v2988
  %v2990 = vlaneseq
  %v2991 = vshrl.u32 %v2990, 7
  %v2992 = vsub.s32 %v2989, %v2991
  %v2993 = vrot.slane %v2965, %v2992
  %v2994 = vcombine.high %v2972, %v2972
  %v2995 = vcombine.high %v2979, %v2979
  %v2996 = vcombine.high %v2986, %v2986
  %v2997 = vcombine.high %v2604, %v2604
  %v2999 = vunpack.c.l.s4 1983009808
  %v3000 = vunpack.c.0.s8 %v2999
  %v3001 = vlaneseq
  %v3002 = vshrl.u32 %v3001, 7
  %v3003 = vsub.s32 %v3000, %v3002
  %v3004 = vrot.slane %v2604, %v3003
  %v3006 = vunpack.c.l.s4 1983009808
  %v3007 = vunpack.c.0.s8 %v3006
  %v3008 = vlaneseq
  %v3009 = vshrl.u32 %v3008, 7
  %v3010 = vsub.s32 %v3007, %v3009
  %v3011 = vrot.slane %v2997, %v3010
  %v3012 = vcombine.high %v3004, %v3004
  %v3013 = vcombine.high %v3011, %v3011
  %v3014 = vcombine.low %v2636, %v2650
  %v3015 = vcombine.low %v2658, %v2660
  %v3016 = vcombine.low %v2643, %v2657
  %v3017 = vcombine.low %v2659, %v2684
  %v3019 = vunpack.c.l.s4 1966171168
  %v3020 = vunpack.c.0.s8 %v3019
  %v3021 = vlaneseq
  %v3022 = vshrl.u32 %v3021, 7
  %v3023 = vsub.s32 %v3020, %v3022
  %v3024 = vrot.slane %v3014, %v3023
  %v3026 = vunpack.c.l.s4 1966171168
  %v3027 = vunpack.c.0.s8 %v3026
  %v3028 = vlaneseq
  %v3029 = vshrl.u32 %v3028, 7
  %v3030 = vsub.s32 %v3027, %v3029
  %v3031 = vrot.slane %v3015, %v3030
  %v3033 = vunpack.c.l.s4 1966171168
  %v3034 = vunpack.c.0.s8 %v3033
  %v3035 = vlaneseq
  %v3036 = vshrl.u32 %v3035, 7
  %v3037 = vsub.s32 %v3034, %v3036
  %v3038 = vrot.slane %v3016, %v3037
  %v3040 = vunpack.c.l.s4 1966171168
  %v3041 = vunpack.c.0.s8 %v3040
  %v3042 = vlaneseq
  %v3043 = vshrl.u32 %v3042, 7
  %v3044 = vsub.s32 %v3041, %v3043
  %v3045 = vrot.slane %v3017, %v3044
  %v3046 = vcombine.low %v3024, %v3031
  %v3047 = vcombine.low %v3038, %v3045
  %v3049 = vunpack.c.l.s4 1966171168
  %v3050 = vunpack.c.0.s8 %v3049
  %v3051 = vlaneseq
  %v3052 = vshrl.u32 %v3051, 7
  %v3053 = vsub.s32 %v3050, %v3052
  %v3054 = vrot.slane %v3046, %v3053
  %v3056 = vunpack.c.l.s4 1966171168
  %v3057 = vunpack.c.0.s8 %v3056
  %v3058 = vlaneseq
  %v3059 = vshrl.u32 %v3058, 7
  %v3060 = vsub.s32 %v3057, %v3059
  %v3061 = vrot.slane %v3047, %v3060
  %v3062 = vcombine.low %v3054, %v3061
  %v3063 = vcombine.low %v2698, %v2706
  %v3064 = vcombine.low %v2708, %v2691
  %v3065 = vcombine.low %v2705, %v2707
  %v3066 = vcombine.low %v2732, %v2746
  %v3068 = vunpack.c.l.s4 1966171168
  %v3069 = vunpack.c.0.s8 %v3068
  %v3070 = vlaneseq
  %v3071 = vshrl.u32 %v3070, 7
  %v3072 = vsub.s32 %v3069, %v3071
  %v3073 = vrot.slane %v3063, %v3072
  %v3075 = vunpack.c.l.s4 1966171168
  %v3076 = vunpack.c.0.s8 %v3075
  %v3077 = vlaneseq
  %v3078 = vshrl.u32 %v3077, 7
  %v3079 = vsub.s32 %v3076, %v3078
  %v3080 = vrot.slane %v3064, %v3079
  %v3082 = vunpack.c.l.s4 1966171168
  %v3083 = vunpack.c.0.s8 %v3082
  %v3084 = vlaneseq
  %v3085 = vshrl.u32 %v3084, 7
  %v3086 = vsub.s32 %v3083, %v3085
  %v3087 = vrot.slane %v3065, %v3086
  %v3089 = vunpack.c.l.s4 1966171168
  %v3090 = vunpack.c.0.s8 %v3089
  %v3091 = vlaneseq
  %v3092 = vshrl.u32 %v3091, 7
  %v3093 = vsub.s32 %v3090, %v3092
  %v3094 = vrot.slane %v3066, %v3093
  %v3095 = vcombine.low %v3073, %v3080
  %v3096 = vcombine.low %v3087, %v3094
  %v3098 = vunpack.c.l.s4 1966171168
  %v3099 = vunpack.c.0.s8 %v3098
  %v3100 = vlaneseq
  %v3101 = vshrl.u32 %v3100, 7
  %v3102 = vsub.s32 %v3099, %v3101
  %v3103 = vrot.slane %v3095, %v3102
  %v3105 = vunpack.c.l.s4 1966171168
  %v3106 = vunpack.c.0.s8 %v3105
  %v3107 = vlaneseq
  %v3108 = vshrl.u32 %v3107, 7
  %v3109 = vsub.s32 %v3106, %v3108
  %v3110 = vrot.slane %v3096, %v3109
  %v3111 = vcombine.low %v3103, %v3110
  %v3112 = vcombine.low %v2754, %v2756
  %v3113 = vcombine.low %v2739, %v2753
  %v3114 = vcombine.low %v2755, %v2780
  %v3115 = vcombine.low %v2794, %v2802
  %v3117 = vunpack.c.l.s4 1966171168
  %v3118 = vunpack.c.0.s8 %v3117
  %v3119 = vlaneseq
  %v3120 = vshrl.u32 %v3119, 7
  %v3121 = vsub.s32 %v3118, %v3120
  %v3122 = vrot.slane %v3112, %v3121
  %v3124 = vunpack.c.l.s4 1966171168
  %v3125 = vunpack.c.0.s8 %v3124
  %v3126 = vlaneseq
  %v3127 = vshrl.u32 %v3126, 7
  %v3128 = vsub.s32 %v3125, %v3127
  %v3129 = vrot.slane %v3113, %v3128
  %v3131 = vunpack.c.l.s4 1966171168
  %v3132 = vunpack.c.0.s8 %v3131
  %v3133 = vlaneseq
  %v3134 = vshrl.u32 %v3133, 7
  %v3135 = vsub.s32 %v3132, %v3134
  %v3136 = vrot.slane %v3114, %v3135
  %v3138 = vunpack.c.l.s4 1966171168
  %v3139 = vunpack.c.0.s8 %v3138
  %v3140 = vlaneseq
  %v3141 = vshrl.u32 %v3140, 7
  %v3142 = vsub.s32 %v3139, %v3141
  %v3143 = vrot.slane %v3115, %v3142
  %v3144 = vcombine.low %v3122, %v3129
  %v3145 = vcombine.low %v3136, %v3143
  %v3147 = vunpack.c.l.s4 1966171168
  %v3148 = vunpack.c.0.s8 %v3147
  %v3149 = vlaneseq
  %v3150 = vshrl.u32 %v3149, 7
  %v3151 = vsub.s32 %v3148, %v3150
  %v3152 = vrot.slane %v3144, %v3151
  %v3154 = vunpack.c.l.s4 1966171168
  %v3155 = vunpack.c.0.s8 %v3154
  %v3156 = vlaneseq
  %v3157 = vshrl.u32 %v3156, 7
  %v3158 = vsub.s32 %v3155, %v3157
  %v3159 = vrot.slane %v3145, %v3158
  %v3160 = vcombine.low %v3152, %v3159
  %v3161 = vcombine.low %v2804, %v2787
  %v3162 = vcombine.low %v2801, %v2803
  %v3163 = vcombine.low %v2828, %v2842
  %v3164 = vcombine.low %v2850, %v2852
  %v3166 = vunpack.c.l.s4 1966171168
  %v3167 = vunpack.c.0.s8 %v3166
  %v3168 = vlaneseq
  %v3169 = vshrl.u32 %v3168, 7
  %v3170 = vsub.s32 %v3167, %v3169
  %v3171 = vrot.slane %v3161, %v3170
  %v3173 = vunpack.c.l.s4 1966171168
  %v3174 = vunpack.c.0.s8 %v3173
  %v3175 = vlaneseq
  %v3176 = vshrl.u32 %v3175, 7
  %v3177 = vsub.s32 %v3174, %v3176
  %v3178 = vrot.slane %v3162, %v3177
  %v3180 = vunpack.c.l.s4 1966171168
  %v3181 = vunpack.c.0.s8 %v3180
  %v3182 = vlaneseq
  %v3183 = vshrl.u32 %v3182, 7
  %v3184 = vsub.s32 %v3181, %v3183
  %v3185 = vrot.slane %v3163, %v3184
  %v3187 = vunpack.c.l.s4 1966171168
  %v3188 = vunpack.c.0.s8 %v3187
  %v3189 = vlaneseq
  %v3190 = vshrl.u32 %v3189, 7
  %v3191 = vsub.s32 %v3188, %v3190
  %v3192 = vrot.slane %v3164, %v3191
  %v3193 = vcombine.low %v3171, %v3178
  %v3194 = vcombine.low %v3185, %v3192
  %v3196 = vunpack.c.l.s4 1966171168
  %v3197 = vunpack.c.0.s8 %v3196
  %v3198 = vlaneseq
  %v3199 = vshrl.u32 %v3198, 7
  %v3200 = vsub.s32 %v3197, %v3199
  %v3201 = vrot.slane %v3193, %v3200
  %v3203 = vunpack.c.l.s4 1966171168
  %v3204 = vunpack.c.0.s8 %v3203
  %v3205 = vlaneseq
  %v3206 = vshrl.u32 %v3205, 7
  %v3207 = vsub.s32 %v3204, %v3206
  %v3208 = vrot.slane %v3194, %v3207
  %v3209 = vcombine.low %v3201, %v3208
  %v3210 = vcombine.low %v2835, %v2849
  %v3211 = vcombine.low %v2851, %v2876
  %v3212 = vcombine.low %v2890, %v2898
  %v3213 = vcombine.low %v2900, %v2883
  %v3215 = vunpack.c.l.s4 1966171168
  %v3216 = vunpack.c.0.s8 %v3215
  %v3217 = vlaneseq
  %v3218 = vshrl.u32 %v3217, 7
  %v3219 = vsub.s32 %v3216, %v3218
  %v3220 = vrot.slane %v3210, %v3219
  %v3222 = vunpack.c.l.s4 1966171168
  %v3223 = vunpack.c.0.s8 %v3222
  %v3224 = vlaneseq
  %v3225 = vshrl.u32 %v3224, 7
  %v3226 = vsub.s32 %v3223, %v3225
  %v3227 = vrot.slane %v3211, %v3226
  %v3229 = vunpack.c.l.s4 1966171168
  %v3230 = vunpack.c.0.s8 %v3229
  %v3231 = vlaneseq
  %v3232 = vshrl.u32 %v3231, 7
  %v3233 = vsub.s32 %v3230, %v3232
  %v3234 = vrot.slane %v3212, %v3233
  %v3236 = vunpack.c.l.s4 1966171168
  %v3237 = vunpack.c.0.s8 %v3236
  %v3238 = vlaneseq
  %v3239 = vshrl.u32 %v3238, 7
  %v3240 = vsub.s32 %v3237, %v3239
  %v3241 = vrot.slane %v3213, %v3240
  %v3242 = vcombine.low %v3220, %v3227
  %v3243 = vcombine.low %v3234, %v3241
  %v3245 = vunpack.c.l.s4 1966171168
  %v3246 = vunpack.c.0.s8 %v3245
  %v3247 = vlaneseq
  %v3248 = vshrl.u32 %v3247, 7
  %v3249 = vsub.s32 %v3246, %v3248
  %v3250 = vrot.slane %v3242, %v3249
  %v3252 = vunpack.c.l.s4 1966171168
  %v3253 = vunpack.c.0.s8 %v3252
  %v3254 = vlaneseq
  %v3255 = vshrl.u32 %v3254, 7
  %v3256 = vsub.s32 %v3253, %v3255
  %v3257 = vrot.slane %v3243, %v3256
  %v3258 = vcombine.low %v3250, %v3257
  %v3259 = vcombine.low %v2897, %v2899
  %v3260 = vcombine.low %v2924, %v2938
  %v3261 = vcombine.low %v2946, %v2948
  %v3262 = vcombine.low %v2931, %v2945
  %v3264 = vunpack.c.l.s4 1966171168
  %v3265 = vunpack.c.0.s8 %v3264
  %v3266 = vlaneseq
  %v3267 = vshrl.u32 %v3266, 7
  %v3268 = vsub.s32 %v3265, %v3267
  %v3269 = vrot.slane %v3259, %v3268
  %v3271 = vunpack.c.l.s4 1966171168
  %v3272 = vunpack.c.0.s8 %v3271
  %v3273 = vlaneseq
  %v3274 = vshrl.u32 %v3273, 7
  %v3275 = vsub.s32 %v3272, %v3274
  %v3276 = vrot.slane %v3260, %v3275
  %v3278 = vunpack.c.l.s4 1966171168
  %v3279 = vunpack.c.0.s8 %v3278
  %v3280 = vlaneseq
  %v3281 = vshrl.u32 %v3280, 7
  %v3282 = vsub.s32 %v3279, %v3281
  %v3283 = vrot.slane %v3261, %v3282
  %v3285 = vunpack.c.l.s4 1966171168
  %v3286 = vunpack.c.0.s8 %v3285
  %v3287 = vlaneseq
  %v3288 = vshrl.u32 %v3287, 7
  %v3289 = vsub.s32 %v3286, %v3288
  %v3290 = vrot.slane %v3262, %v3289
  %v3291 = vcombine.low %v3269, %v3276
  %v3292 = vcombine.low %v3283, %v3290
  %v3294 = vunpack.c.l.s4 1966171168
  %v3295 = vunpack.c.0.s8 %v3294
  %v3296 = vlaneseq
  %v3297 = vshrl.u32 %v3296, 7
  %v3298 = vsub.s32 %v3295, %v3297
  %v3299 = vrot.slane %v3291, %v3298
  %v3301 = vunpack.c.l.s4 1966171168
  %v3302 = vunpack.c.0.s8 %v3301
  %v3303 = vlaneseq
  %v3304 = vshrl.u32 %v3303, 7
  %v3305 = vsub.s32 %v3302, %v3304
  %v3306 = vrot.slane %v3292, %v3305
  %v3307 = vcombine.low %v3299, %v3306
  %v3308 = vcombine.low %v2947, %v2972
  %v3309 = vcombine.low %v2986, %v2994
  %v3310 = vcombine.low %v2996, %v2979
  %v3311 = vcombine.low %v2993, %v2995
  %v3313 = vunpack.c.l.s4 1966171168
  %v3314 = vunpack.c.0.s8 %v3313
  %v3315 = vlaneseq
  %v3316 = vshrl.u32 %v3315, 7
  %v3317 = vsub.s32 %v3314, %v3316
  %v3318 = vrot.slane %v3308, %v3317
  %v3320 = vunpack.c.l.s4 1966171168
  %v3321 = vunpack.c.0.s8 %v3320
  %v3322 = vlaneseq
  %v3323 = vshrl.u32 %v3322, 7
  %v3324 = vsub.s32 %v3321, %v3323
  %v3325 = vrot.slane %v3309, %v3324
  %v3327 = vunpack.c.l.s4 1966171168
  %v3328 = vunpack.c.0.s8 %v3327
  %v3329 = vlaneseq
  %v3330 = vshrl.u32 %v3329, 7
  %v3331 = vsub.s32 %v3328, %v3330
  %v3332 = vrot.slane %v3310, %v3331
  %v3334 = vunpack.c.l.s4 1966171168
  %v3335 = vunpack.c.0.s8 %v3334
  %v3336 = vlaneseq
  %v3337 = vshrl.u32 %v3336, 7
  %v3338 = vsub.s32 %v3335, %v3337
  %v3339 = vrot.slane %v3311, %v3338
  %v3340 = vcombine.low %v3318, %v3325
  %v3341 = vcombine.low %v3332, %v3339
  %v3343 = vunpack.c.l.s4 1966171168
  %v3344 = vunpack.c.0.s8 %v3343
  %v3345 = vlaneseq
  %v3346 = vshrl.u32 %v3345, 7
  %v3347 = vsub.s32 %v3344, %v3346
  %v3348 = vrot.slane %v3340, %v3347
  %v3350 = vunpack.c.l.s4 1966171168
  %v3351 = vunpack.c.0.s8 %v3350
  %v3352 = vlaneseq
  %v3353 = vshrl.u32 %v3352, 7
  %v3354 = vsub.s32 %v3351, %v3353
  %v3355 = vrot.slane %v3341, %v3354
  %v3356 = vcombine.low %v3348, %v3355
  %v3368 = vunpack.c.l.b16 %v2588
  %v3369 = vunpack.c.l.b16 %v2589
  %v3370 = vunpack.c.l.b16 %v2590
  %v3371 = vunpack.c.l.b16 %v2591
  %v3372 = vunpack.c.l.b16 %v2592
  %v3373 = vunpack.c.l.b16 %v2593
  %v3374 = vunpack.c.l.b16 %v2594
  %v3375 = vunpack.c.l.b16 %v2595
  %v3376 = vunpack.c.l.b16 %v2596
  %v3377 = vunpack.c.l.b16 %v2597
  %v3378 = vunpack.c.l.b16 %v2598
  %v3379 = vpack.c.b16 %v3369, %v3368
  %v3380 = vpack.c.b16 %v3371, %v3370
  %v3381 = vpack.c.b16 %v3373, %v3372
  %v3382 = vpack.c.b16 %v3375, %v3374
  %v3383 = vpack.c.b16 %v3377, %v3376
  %v3384 = vpack.c.b16 %v3378, %v3378
  %v3390 = vcombine.low %v3004, %v3012
  %v3391 = vcombine.low %v3011, %v3013
  %v3393 = vunpack.c.l.s4 1983009808
  %v3394 = vunpack.c.0.s8 %v3393
  %v3395 = vlaneseq
  %v3396 = vshrl.u32 %v3395, 7
  %v3397 = vsub.s32 %v3394, %v3396
  %v3398 = vrot.slane %v3390, %v3397
  %v3400 = vunpack.c.l.s4 1983009808
  %v3401 = vunpack.c.0.s8 %v3400
  %v3402 = vlaneseq
  %v3403 = vshrl.u32 %v3402, 7
  %v3404 = vsub.s32 %v3401, %v3403
  %v3405 = vrot.slane %v3391, %v3404
  %v3406 = vcombine.low %v3398, %v3405
  %v3407 = vcombine.low %v3011, %v3004
  %v3409 = vunpack.c.l.s4 1983009808
  %v3410 = vunpack.c.0.s8 %v3409
  %v3411 = vlaneseq
  %v3412 = vshrl.u32 %v3411, 7
  %v3413 = vsub.s32 %v3410, %v3412
  %v3414 = vrot.slane %v3407, %v3413
  %v3415 = vcombine.low %v3398, %v3414
  %v3416 = vcombine.low %v3012, %v3011
  %v3417 = vcombine.low %v3013, %v3004
  %v3419 = vunpack.c.l.s4 1983009808
  %v3420 = vunpack.c.0.s8 %v3419
  %v3421 = vlaneseq
  %v3422 = vshrl.u32 %v3421, 7
  %v3423 = vsub.s32 %v3420, %v3422
  %v3424 = vrot.slane %v3416, %v3423
  %v3426 = vunpack.c.l.s4 1983009808
  %v3427 = vunpack.c.0.s8 %v3426
  %v3428 = vlaneseq
  %v3429 = vshrl.u32 %v3428, 7
  %v3430 = vsub.s32 %v3427, %v3429
  %v3431 = vrot.slane %v3417, %v3430
  %v3432 = vcombine.low %v3424, %v3431
  %v3433 = vcombine.low %v3424, %v3398
  %v3434 = vcombine.low %v3405, %v3398
  %v3435 = vcombine.low %v3414, %v3424
  %v3436 = vcombine.low %v3431, %v3424
  %v3445 = vsel %vm1281, %v3062, 0
  %v3448 = vsel %vm1281, %v3111, 0
  %v3451 = vsel %vm1281, %v3160, 0
  %v3454 = vsel %vm1281, %v3209, 0
  %v3457 = vsel %vm1281, %v3258, 0
  %v3460 = vsel %vm1281, %v3307, 0
  %v3463 = vsel %vm1281, %v3356, 0
  %v3466 = vand.u32 %v3384, %v1305
  %3468 = vmatprep.subr.bf16.mxu0 0
  %3469 = vmatpush1.bf16.msra.mxu0 %v3379
  %3470 = vmatprep.subr.bf16.mxu0 0
  %3471 = vmatpush1.bf16.msra.mxu0 %v3380
  %3472 = vmatprep.subr.bf16.mxu0 0
  %3473 = vmatpush1.bf16.msra.mxu0 %v3381
  %3474 = vmatprep.subr.bf16.mxu0 0
  %3475 = vmatpush1.bf16.msra.mxu0 %v3382
  %3476 = vmatprep.subr.bf16.mxu0 0
  %3477 = vmatpush1.bf16.msra.mxu0 %v3383
  %3478 = vmatprep.subr.bf16.mxu0 0
  %3479 = vmatpush1.bf16.msra.mxu0 %v3466
  %3480 = vmatprep.subr.bf16.mxu0 0
  %3481 = vmatpush1.bf16.msra.mxu0 0
  %3482 = vmatprep.subr.bf16.mxu0 0
  %3483 = vmatpush1.bf16.msra.mxu0 0
  %3484 = vmatprep.subr.bf16.mxu0 0
  %3485 = vmatpush1.bf16.msra.mxu0 0
  %3486 = vmatprep.subr.bf16.mxu0 0
  %3487 = vmatpush1.bf16.msra.mxu0 0
  %3488 = vmatprep.subr.bf16.mxu0 0
  %3489 = vmatpush1.bf16.msra.mxu0 0
  %3490 = vmatprep.subr.bf16.mxu0 0
  %3491 = vmatpush1.bf16.msra.mxu0 0
  %3492 = vmatprep.subr.bf16.mxu0 0
  %3493 = vmatpush1.bf16.msra.mxu0 0
  %3494 = vmatprep.subr.bf16.mxu0 0
  %3495 = vmatpush1.bf16.msra.mxu0 0
  %3496 = vmatprep.subr.bf16.mxu0 0
  %3497 = vmatpush1.bf16.msra.mxu0 0
  %3498 = vmatprep.subr.bf16.mxu0 0
  %3499 = vmatpush1.bf16.msra.mxu0 0
  %3500 = vmatprep.mubr.bf16.mxu0 0
  %3501 = vmatmul.mubr.bf16.gmra.mrb[0].mxu0 %v3445
  %v3502 = vpop.f32.mrb[0].mxu0
  %v3503 = vadd.f32 %v3406, %v3502
  %v3504 = vpop.f32.mrb[0].mxu0
  %v3505 = vpop.f32.mrb[0].mxu0
  %v3506 = vadd.f32 %v3415, %v3505
  %v3507 = vpop.f32.mrb[0].mxu0
  %3508 = vmatprep.mubr.bf16.mxu0 0
  %3509 = vmatmul.mubr.bf16.gmra.mrb[0].mxu0 %v3448
  %v3510 = vpop.f32.mrb[0].mxu0
  %v3511 = vadd.f32 %v3432, %v3510
  %v3512 = vpop.f32.mrb[0].mxu0
  %v3513 = vpop.f32.mrb[0].mxu0
  %v3514 = vadd.f32 %v3433, %v3513
  %v3515 = vpop.f32.mrb[0].mxu0
  %3516 = vmatprep.mubr.bf16.mxu0 0
  %3517 = vmatmul.mubr.bf16.gmra.mrb[0].mxu0 %v3451
  %v3518 = vpop.f32.mrb[0].mxu0
  %v3519 = vadd.f32 %v3434, %v3518
  %v3520 = vpop.f32.mrb[0].mxu0
  %v3521 = vpop.f32.mrb[0].mxu0
  %v3522 = vadd.f32 %v3435, %v3521
  %v3523 = vpop.f32.mrb[0].mxu0
  %3524 = vmatprep.mubr.bf16.mxu0 0
  %3525 = vmatmul.mubr.bf16.gmra.mrb[0].mxu0 %v3454
  %v3526 = vpop.f32.mrb[0].mxu0
  %v3527 = vadd.f32 %v3436, %v3526
  %v3528 = vpop.f32.mrb[0].mxu0
  %v3529 = vpop.f32.mrb[0].mxu0
  %v3530 = vadd.f32 %v3406, %v3529
  %v3531 = vpop.f32.mrb[0].mxu0
  %3532 = vmatprep.mubr.bf16.mxu0 0
  %3533 = vmatmul.mubr.bf16.gmra.mrb[0].mxu0 %v3457
  %v3534 = vpop.f32.mrb[0].mxu0
  %v3535 = vadd.f32 %v3415, %v3534
  %v3536 = vpop.f32.mrb[0].mxu0
  %v3537 = vpop.f32.mrb[0].mxu0
  %v3538 = vadd.f32 %v3432, %v3537
  %v3539 = vpop.f32.mrb[0].mxu0
  %3540 = vmatprep.mubr.bf16.mxu0 0
  %3541 = vmatmul.mubr.bf16.gmra.mrb[0].mxu0 %v3460
  %v3542 = vpop.f32.mrb[0].mxu0
  %v3543 = vadd.f32 %v3433, %v3542
  %v3544 = vpop.f32.mrb[0].mxu0
  %v3545 = vpop.f32.mrb[0].mxu0
  %v3546 = vadd.f32 %v3434, %v3545
  %v3547 = vpop.f32.mrb[0].mxu0
  %3548 = vmatprep.mubr.bf16.mxu0 0
  %3549 = vmatmul.mubr.bf16.gmra.mrb[0].mxu0 %v3463
  %v3550 = vpop.f32.mrb[0].mxu0
  %v3551 = vadd.f32 %v3435, %v3550
  %v3552 = vpop.f32.mrb[0].mxu0
  %v3553 = vpop.f32.mrb[0].mxu0
  %v3554 = vadd.f32 %v3436, %v3553
  %v3555 = vpop.f32.mrb[0].mxu0
  %3556 = vdwg.mxu0
  %v3571 = vcombine.high %v3503, %v3503
  %v3573 = vunpack.c.l.s4 1983009808
  %v3574 = vunpack.c.0.s8 %v3573
  %v3575 = vlaneseq
  %v3576 = vshrl.u32 %v3575, 7
  %v3577 = vsub.s32 %v3574, %v3576
  %v3578 = vrot.slane %v3503, %v3577
  %v3580 = vunpack.c.l.s4 1983009808
  %v3581 = vunpack.c.0.s8 %v3580
  %v3582 = vlaneseq
  %v3583 = vshrl.u32 %v3582, 7
  %v3584 = vsub.s32 %v3581, %v3583
  %v3585 = vrot.slane %v3571, %v3584
  %v3586 = vcombine.high %v3578, %v3578
  %v3587 = vcombine.high %v3585, %v3585
  %v3588 = vcombine.high %v3506, %v3506
  %v3590 = vunpack.c.l.s4 1983009808
  %v3591 = vunpack.c.0.s8 %v3590
  %v3592 = vlaneseq
  %v3593 = vshrl.u32 %v3592, 7
  %v3594 = vsub.s32 %v3591, %v3593
  %v3595 = vrot.slane %v3506, %v3594
  %v3597 = vunpack.c.l.s4 1983009808
  %v3598 = vunpack.c.0.s8 %v3597
  %v3599 = vlaneseq
  %v3600 = vshrl.u32 %v3599, 7
  %v3601 = vsub.s32 %v3598, %v3600
  %v3602 = vrot.slane %v3588, %v3601
  %v3603 = vcombine.high %v3595, %v3595
  %v3604 = vcombine.high %v3602, %v3602
  %v3605 = vcombine.high %v3511, %v3511
  %v3607 = vunpack.c.l.s4 1983009808
  %v3608 = vunpack.c.0.s8 %v3607
  %v3609 = vlaneseq
  %v3610 = vshrl.u32 %v3609, 7
  %v3611 = vsub.s32 %v3608, %v3610
  %v3612 = vrot.slane %v3511, %v3611
  %v3614 = vunpack.c.l.s4 1983009808
  %v3615 = vunpack.c.0.s8 %v3614
  %v3616 = vlaneseq
  %v3617 = vshrl.u32 %v3616, 7
  %v3618 = vsub.s32 %v3615, %v3617
  %v3619 = vrot.slane %v3605, %v3618
  %v3620 = vcombine.high %v3612, %v3612
  %v3621 = vcombine.high %v3619, %v3619
  %v3622 = vcombine.high %v3514, %v3514
  %v3624 = vunpack.c.l.s4 1983009808
  %v3625 = vunpack.c.0.s8 %v3624
  %v3626 = vlaneseq
  %v3627 = vshrl.u32 %v3626, 7
  %v3628 = vsub.s32 %v3625, %v3627
  %v3629 = vrot.slane %v3514, %v3628
  %v3631 = vunpack.c.l.s4 1983009808
  %v3632 = vunpack.c.0.s8 %v3631
  %v3633 = vlaneseq
  %v3634 = vshrl.u32 %v3633, 7
  %v3635 = vsub.s32 %v3632, %v3634
  %v3636 = vrot.slane %v3622, %v3635
  %v3637 = vcombine.high %v3629, %v3629
  %v3638 = vcombine.high %v3636, %v3636
  %v3639 = vcombine.high %v3519, %v3519
  %v3641 = vunpack.c.l.s4 1983009808
  %v3642 = vunpack.c.0.s8 %v3641
  %v3643 = vlaneseq
  %v3644 = vshrl.u32 %v3643, 7
  %v3645 = vsub.s32 %v3642, %v3644
  %v3646 = vrot.slane %v3519, %v3645
  %v3648 = vunpack.c.l.s4 1983009808
  %v3649 = vunpack.c.0.s8 %v3648
  %v3650 = vlaneseq
  %v3651 = vshrl.u32 %v3650, 7
  %v3652 = vsub.s32 %v3649, %v3651
  %v3653 = vrot.slane %v3639, %v3652
  %v3654 = vcombine.high %v3646, %v3646
  %v3655 = vcombine.high %v3653, %v3653
  %v3656 = vcombine.high %v3522, %v3522
  %v3658 = vunpack.c.l.s4 1983009808
  %v3659 = vunpack.c.0.s8 %v3658
  %v3660 = vlaneseq
  %v3661 = vshrl.u32 %v3660, 7
  %v3662 = vsub.s32 %v3659, %v3661
  %v3663 = vrot.slane %v3522, %v3662
  %v3665 = vunpack.c.l.s4 1983009808
  %v3666 = vunpack.c.0.s8 %v3665
  %v3667 = vlaneseq
  %v3668 = vshrl.u32 %v3667, 7
  %v3669 = vsub.s32 %v3666, %v3668
  %v3670 = vrot.slane %v3656, %v3669
  %v3671 = vcombine.high %v3663, %v3663
  %v3672 = vcombine.high %v3670, %v3670
  %v3673 = vcombine.high %v3527, %v3527
  %v3675 = vunpack.c.l.s4 1983009808
  %v3676 = vunpack.c.0.s8 %v3675
  %v3677 = vlaneseq
  %v3678 = vshrl.u32 %v3677, 7
  %v3679 = vsub.s32 %v3676, %v3678
  %v3680 = vrot.slane %v3527, %v3679
  %v3682 = vunpack.c.l.s4 1983009808
  %v3683 = vunpack.c.0.s8 %v3682
  %v3684 = vlaneseq
  %v3685 = vshrl.u32 %v3684, 7
  %v3686 = vsub.s32 %v3683, %v3685
  %v3687 = vrot.slane %v3673, %v3686
  %v3688 = vcombine.high %v3680, %v3680
  %v3689 = vcombine.high %v3687, %v3687
  %v3690 = vcombine.high %v3530, %v3530
  %v3692 = vunpack.c.l.s4 1983009808
  %v3693 = vunpack.c.0.s8 %v3692
  %v3694 = vlaneseq
  %v3695 = vshrl.u32 %v3694, 7
  %v3696 = vsub.s32 %v3693, %v3695
  %v3697 = vrot.slane %v3530, %v3696
  %v3699 = vunpack.c.l.s4 1983009808
  %v3700 = vunpack.c.0.s8 %v3699
  %v3701 = vlaneseq
  %v3702 = vshrl.u32 %v3701, 7
  %v3703 = vsub.s32 %v3700, %v3702
  %v3704 = vrot.slane %v3690, %v3703
  %v3705 = vcombine.high %v3697, %v3697
  %v3706 = vcombine.high %v3704, %v3704
  %v3707 = vcombine.high %v3535, %v3535
  %v3709 = vunpack.c.l.s4 1983009808
  %v3710 = vunpack.c.0.s8 %v3709
  %v3711 = vlaneseq
  %v3712 = vshrl.u32 %v3711, 7
  %v3713 = vsub.s32 %v3710, %v3712
  %v3714 = vrot.slane %v3535, %v3713
  %v3716 = vunpack.c.l.s4 1983009808
  %v3717 = vunpack.c.0.s8 %v3716
  %v3718 = vlaneseq
  %v3719 = vshrl.u32 %v3718, 7
  %v3720 = vsub.s32 %v3717, %v3719
  %v3721 = vrot.slane %v3707, %v3720
  %v3722 = vcombine.high %v3714, %v3714
  %v3723 = vcombine.high %v3721, %v3721
  %v3724 = vcombine.high %v3538, %v3538
  %v3726 = vunpack.c.l.s4 1983009808
  %v3727 = vunpack.c.0.s8 %v3726
  %v3728 = vlaneseq
  %v3729 = vshrl.u32 %v3728, 7
  %v3730 = vsub.s32 %v3727, %v3729
  %v3731 = vrot.slane %v3538, %v3730
  %v3733 = vunpack.c.l.s4 1983009808
  %v3734 = vunpack.c.0.s8 %v3733
  %v3735 = vlaneseq
  %v3736 = vshrl.u32 %v3735, 7
  %v3737 = vsub.s32 %v3734, %v3736
  %v3738 = vrot.slane %v3724, %v3737
  %v3739 = vcombine.high %v3731, %v3731
  %v3740 = vcombine.high %v3738, %v3738
  %v3741 = vcombine.high %v3543, %v3543
  %v3743 = vunpack.c.l.s4 1983009808
  %v3744 = vunpack.c.0.s8 %v3743
  %v3745 = vlaneseq
  %v3746 = vshrl.u32 %v3745, 7
  %v3747 = vsub.s32 %v3744, %v3746
  %v3748 = vrot.slane %v3543, %v3747
  %v3750 = vunpack.c.l.s4 1983009808
  %v3751 = vunpack.c.0.s8 %v3750
  %v3752 = vlaneseq
  %v3753 = vshrl.u32 %v3752, 7
  %v3754 = vsub.s32 %v3751, %v3753
  %v3755 = vrot.slane %v3741, %v3754
  %v3756 = vcombine.high %v3748, %v3748
  %v3757 = vcombine.high %v3755, %v3755
  %v3758 = vcombine.high %v3546, %v3546
  %v3760 = vunpack.c.l.s4 1983009808
  %v3761 = vunpack.c.0.s8 %v3760
  %v3762 = vlaneseq
  %v3763 = vshrl.u32 %v3762, 7
  %v3764 = vsub.s32 %v3761, %v3763
  %v3765 = vrot.slane %v3546, %v3764
  %v3767 = vunpack.c.l.s4 1983009808
  %v3768 = vunpack.c.0.s8 %v3767
  %v3769 = vlaneseq
  %v3770 = vshrl.u32 %v3769, 7
  %v3771 = vsub.s32 %v3768, %v3770
  %v3772 = vrot.slane %v3758, %v3771
  %v3773 = vcombine.high %v3765, %v3765
  %v3774 = vcombine.high %v3772, %v3772
  %v3775 = vcombine.high %v3551, %v3551
  %v3777 = vunpack.c.l.s4 1983009808
  %v3778 = vunpack.c.0.s8 %v3777
  %v3779 = vlaneseq
  %v3780 = vshrl.u32 %v3779, 7
  %v3781 = vsub.s32 %v3778, %v3780
  %v3782 = vrot.slane %v3551, %v3781
  %v3784 = vunpack.c.l.s4 1983009808
  %v3785 = vunpack.c.0.s8 %v3784
  %v3786 = vlaneseq
  %v3787 = vshrl.u32 %v3786, 7
  %v3788 = vsub.s32 %v3785, %v3787
  %v3789 = vrot.slane %v3775, %v3788
  %v3790 = vcombine.high %v3782, %v3782
  %v3791 = vcombine.high %v3789, %v3789
  %v3792 = vcombine.high %v3554, %v3554
  %v3794 = vunpack.c.l.s4 1983009808
  %v3795 = vunpack.c.0.s8 %v3794
  %v3796 = vlaneseq
  %v3797 = vshrl.u32 %v3796, 7
  %v3798 = vsub.s32 %v3795, %v3797
  %v3799 = vrot.slane %v3554, %v3798
  %v3801 = vunpack.c.l.s4 1983009808
  %v3802 = vunpack.c.0.s8 %v3801
  %v3803 = vlaneseq
  %v3804 = vshrl.u32 %v3803, 7
  %v3805 = vsub.s32 %v3802, %v3804
  %v3806 = vrot.slane %v3792, %v3805
  %v3807 = vcombine.high %v3799, %v3799
  %v3808 = vcombine.high %v3806, %v3806
  %v3865 = vmax.f32 %v3578, 0.0
  %v3866 = vmax.f32 %v3586, 0.0
  %v3867 = vmax.f32 %v3585, 0.0
  %v3868 = vmax.f32 %v3587, 0.0
  %v3869 = vmax.f32 %v3595, 0.0
  %v3870 = vmax.f32 %v3603, 0.0
  %v3871 = vmax.f32 %v3602, 0.0
  %v3872 = vmax.f32 %v3604, 0.0
  %v3873 = vmax.f32 %v3612, 0.0
  %v3874 = vmax.f32 %v3620, 0.0
  %v3875 = vmax.f32 %v3619, 0.0
  %v3876 = vmax.f32 %v3621, 0.0
  %v3877 = vmax.f32 %v3629, 0.0
  %v3878 = vmax.f32 %v3637, 0.0
  %v3879 = vmax.f32 %v3636, 0.0
  %v3880 = vmax.f32 %v3638, 0.0
  %v3881 = vmax.f32 %v3646, 0.0
  %v3882 = vmax.f32 %v3654, 0.0
  %v3883 = vmax.f32 %v3653, 0.0
  %v3884 = vmax.f32 %v3655, 0.0
  %v3885 = vmax.f32 %v3663, 0.0
  %v3886 = vmax.f32 %v3671, 0.0
  %v3887 = vmax.f32 %v3670, 0.0
  %v3888 = vmax.f32 %v3672, 0.0
  %v3889 = vmax.f32 %v3680, 0.0
  %v3890 = vmax.f32 %v3688, 0.0
  %v3891 = vmax.f32 %v3687, 0.0
  %v3892 = vmax.f32 %v3689, 0.0
  %v3893 = vmax.f32 %v3697, 0.0
  %v3894 = vmax.f32 %v3705, 0.0
  %v3895 = vmax.f32 %v3704, 0.0
  %v3896 = vmax.f32 %v3706, 0.0
  %v3897 = vmax.f32 %v3714, 0.0
  %v3898 = vmax.f32 %v3722, 0.0
  %v3899 = vmax.f32 %v3721, 0.0
  %v3900 = vmax.f32 %v3723, 0.0
  %v3901 = vmax.f32 %v3731, 0.0
  %v3902 = vmax.f32 %v3739, 0.0
  %v3903 = vmax.f32 %v3738, 0.0
  %v3904 = vmax.f32 %v3740, 0.0
  %v3905 = vmax.f32 %v3748, 0.0
  %v3906 = vmax.f32 %v3756, 0.0
  %v3907 = vmax.f32 %v3755, 0.0
  %v3908 = vmax.f32 %v3757, 0.0
  %v3909 = vmax.f32 %v3765, 0.0
  %v3910 = vmax.f32 %v3773, 0.0
  %v3911 = vmax.f32 %v3772, 0.0
  %v3912 = vmax.f32 %v3774, 0.0
  %v3913 = vmax.f32 %v3782, 0.0
  %v3914 = vmax.f32 %v3790, 0.0
  %v3915 = vmax.f32 %v3789, 0.0
  %v3916 = vmax.f32 %v3791, 0.0
  %v3917 = vmax.f32 %v3799, 0.0
  %v3918 = vmax.f32 %v3807, 0.0
  %v3919 = vmax.f32 %v3806, 0.0
  %v3920 = vmax.f32 %v3808, 0.0
  %s3921 = scalar_lea.vmem [#allocation2], 8
  %v3922 = vld [vmem:[%s3921] sm:$0xff]
  %v3979 = vcombine.low %v3865, %v3866
  %v3980 = vcombine.low %v3867, %v3868
  %v3982 = vunpack.c.l.s4 1983009808
  %v3983 = vunpack.c.0.s8 %v3982
  %v3984 = vlaneseq
  %v3985 = vshrl.u32 %v3984, 7
  %v3986 = vsub.s32 %v3983, %v3985
  %v3987 = vrot.slane %v3979, %v3986
  %v3989 = vunpack.c.l.s4 1983009808
  %v3990 = vunpack.c.0.s8 %v3989
  %v3991 = vlaneseq
  %v3992 = vshrl.u32 %v3991, 7
  %v3993 = vsub.s32 %v3990, %v3992
  %v3994 = vrot.slane %v3980, %v3993
  %v3995 = vcombine.low %v3987, %v3994
  %v3996 = vcombine.low %v3869, %v3870
  %v3998 = vunpack.c.l.s4 1983009808
  %v3999 = vunpack.c.0.s8 %v3998
  %v4000 = vlaneseq
  %v4001 = vshrl.u32 %v4000, 7
  %v4002 = vsub.s32 %v3999, %v4001
  %v4003 = vrot.slane %v3996, %v4002
  %v4005 = vunpack.c.l.s4 1983009808
  %v4006 = vunpack.c.0.s8 %v4005
  %v4007 = vlaneseq
  %v4008 = vshrl.u32 %v4007, 7
  %v4009 = vsub.s32 %v4006, %v4008
  %v4010 = vrot.slane %v3871, %v4009
  %v4011 = vcombine.low %v4003, %v4010
  %v4012 = vcombine.low %v3872, %v3873
  %v4013 = vcombine.low %v3874, %v3875
  %v4015 = vunpack.c.l.s4 1983009808
  %v4016 = vunpack.c.0.s8 %v4015
  %v4017 = vlaneseq
  %v4018 = vshrl.u32 %v4017, 7
  %v4019 = vsub.s32 %v4016, %v4018
  %v4020 = vrot.slane %v4012, %v4019
  %v4022 = vunpack.c.l.s4 1983009808
  %v4023 = vunpack.c.0.s8 %v4022
  %v4024 = vlaneseq
  %v4025 = vshrl.u32 %v4024, 7
  %v4026 = vsub.s32 %v4023, %v4025
  %v4027 = vrot.slane %v4013, %v4026
  %v4028 = vcombine.low %v4020, %v4027
  %v4029 = vcombine.low %v3876, %v3877
  %v4031 = vunpack.c.l.s4 1983009808
  %v4032 = vunpack.c.0.s8 %v4031
  %v4033 = vlaneseq
  %v4034 = vshrl.u32 %v4033, 7
  %v4035 = vsub.s32 %v4032, %v4034
  %v4036 = vrot.slane %v4029, %v4035
  %v4038 = vunpack.c.l.s4 1983009808
  %v4039 = vunpack.c.0.s8 %v4038
  %v4040 = vlaneseq
  %v4041 = vshrl.u32 %v4040, 7
  %v4042 = vsub.s32 %v4039, %v4041
  %v4043 = vrot.slane %v3878, %v4042
  %v4044 = vcombine.low %v4036, %v4043
  %v4045 = vcombine.low %v3879, %v3880
  %v4046 = vcombine.low %v3881, %v3882
  %v4048 = vunpack.c.l.s4 1983009808
  %v4049 = vunpack.c.0.s8 %v4048
  %v4050 = vlaneseq
  %v4051 = vshrl.u32 %v4050, 7
  %v4052 = vsub.s32 %v4049, %v4051
  %v4053 = vrot.slane %v4045, %v4052
  %v4055 = vunpack.c.l.s4 1983009808
  %v4056 = vunpack.c.0.s8 %v4055
  %v4057 = vlaneseq
  %v4058 = vshrl.u32 %v4057, 7
  %v4059 = vsub.s32 %v4056, %v4058
  %v4060 = vrot.slane %v4046, %v4059
  %v4061 = vcombine.low %v4053, %v4060
  %v4062 = vcombine.low %v3883, %v3884
  %v4064 = vunpack.c.l.s4 1983009808
  %v4065 = vunpack.c.0.s8 %v4064
  %v4066 = vlaneseq
  %v4067 = vshrl.u32 %v4066, 7
  %v4068 = vsub.s32 %v4065, %v4067
  %v4069 = vrot.slane %v4062, %v4068
  %v4071 = vunpack.c.l.s4 1983009808
  %v4072 = vunpack.c.0.s8 %v4071
  %v4073 = vlaneseq
  %v4074 = vshrl.u32 %v4073, 7
  %v4075 = vsub.s32 %v4072, %v4074
  %v4076 = vrot.slane %v3885, %v4075
  %v4077 = vcombine.low %v4069, %v4076
  %v4078 = vcombine.low %v3886, %v3887
  %v4079 = vcombine.low %v3888, %v3889
  %v4081 = vunpack.c.l.s4 1983009808
  %v4082 = vunpack.c.0.s8 %v4081
  %v4083 = vlaneseq
  %v4084 = vshrl.u32 %v4083, 7
  %v4085 = vsub.s32 %v4082, %v4084
  %v4086 = vrot.slane %v4078, %v4085
  %v4088 = vunpack.c.l.s4 1983009808
  %v4089 = vunpack.c.0.s8 %v4088
  %v4090 = vlaneseq
  %v4091 = vshrl.u32 %v4090, 7
  %v4092 = vsub.s32 %v4089, %v4091
  %v4093 = vrot.slane %v4079, %v4092
  %v4094 = vcombine.low %v4086, %v4093
  %v4095 = vcombine.low %v3890, %v3891
  %v4097 = vunpack.c.l.s4 1983009808
  %v4098 = vunpack.c.0.s8 %v4097
  %v4099 = vlaneseq
  %v4100 = vshrl.u32 %v4099, 7
  %v4101 = vsub.s32 %v4098, %v4100
  %v4102 = vrot.slane %v4095, %v4101
  %v4104 = vunpack.c.l.s4 1983009808
  %v4105 = vunpack.c.0.s8 %v4104
  %v4106 = vlaneseq
  %v4107 = vshrl.u32 %v4106, 7
  %v4108 = vsub.s32 %v4105, %v4107
  %v4109 = vrot.slane %v3892, %v4108
  %v4110 = vcombine.low %v4102, %v4109
  %v4111 = vcombine.low %v3893, %v3894
  %v4112 = vcombine.low %v3895, %v3896
  %v4114 = vunpack.c.l.s4 1983009808
  %v4115 = vunpack.c.0.s8 %v4114
  %v4116 = vlaneseq
  %v4117 = vshrl.u32 %v4116, 7
  %v4118 = vsub.s32 %v4115, %v4117
  %v4119 = vrot.slane %v4111, %v4118
  %v4121 = vunpack.c.l.s4 1983009808
  %v4122 = vunpack.c.0.s8 %v4121
  %v4123 = vlaneseq
  %v4124 = vshrl.u32 %v4123, 7
  %v4125 = vsub.s32 %v4122, %v4124
  %v4126 = vrot.slane %v4112, %v4125
  %v4127 = vcombine.low %v4119, %v4126
  %v4128 = vcombine.low %v3897, %v3898
  %v4130 = vunpack.c.l.s4 1983009808
  %v4131 = vunpack.c.0.s8 %v4130
  %v4132 = vlaneseq
  %v4133 = vshrl.u32 %v4132, 7
  %v4134 = vsub.s32 %v4131, %v4133
  %v4135 = vrot.slane %v4128, %v4134
  %v4137 = vunpack.c.l.s4 1983009808
  %v4138 = vunpack.c.0.s8 %v4137
  %v4139 = vlaneseq
  %v4140 = vshrl.u32 %v4139, 7
  %v4141 = vsub.s32 %v4138, %v4140
  %v4142 = vrot.slane %v3899, %v4141
  %v4143 = vcombine.low %v4135, %v4142
  %v4144 = vcombine.low %v3900, %v3901
  %v4145 = vcombine.low %v3902, %v3903
  %v4147 = vunpack.c.l.s4 1983009808
  %v4148 = vunpack.c.0.s8 %v4147
  %v4149 = vlaneseq
  %v4150 = vshrl.u32 %v4149, 7
  %v4151 = vsub.s32 %v4148, %v4150
  %v4152 = vrot.slane %v4144, %v4151
  %v4154 = vunpack.c.l.s4 1983009808
  %v4155 = vunpack.c.0.s8 %v4154
  %v4156 = vlaneseq
  %v4157 = vshrl.u32 %v4156, 7
  %v4158 = vsub.s32 %v4155, %v4157
  %v4159 = vrot.slane %v4145, %v4158
  %v4160 = vcombine.low %v4152, %v4159
  %v4161 = vcombine.low %v3904, %v3905
  %v4163 = vunpack.c.l.s4 1983009808
  %v4164 = vunpack.c.0.s8 %v4163
  %v4165 = vlaneseq
  %v4166 = vshrl.u32 %v4165, 7
  %v4167 = vsub.s32 %v4164, %v4166
  %v4168 = vrot.slane %v4161, %v4167
  %v4170 = vunpack.c.l.s4 1983009808
  %v4171 = vunpack.c.0.s8 %v4170
  %v4172 = vlaneseq
  %v4173 = vshrl.u32 %v4172, 7
  %v4174 = vsub.s32 %v4171, %v4173
  %v4175 = vrot.slane %v3906, %v4174
  %v4176 = vcombine.low %v4168, %v4175
  %v4177 = vcombine.low %v3907, %v3908
  %v4178 = vcombine.low %v3909, %v3910
  %v4180 = vunpack.c.l.s4 1983009808
  %v4181 = vunpack.c.0.s8 %v4180
  %v4182 = vlaneseq
  %v4183 = vshrl.u32 %v4182, 7
  %v4184 = vsub.s32 %v4181, %v4183
  %v4185 = vrot.slane %v4177, %v4184
  %v4187 = vunpack.c.l.s4 1983009808
  %v4188 = vunpack.c.0.s8 %v4187
  %v4189 = vlaneseq
  %v4190 = vshrl.u32 %v4189, 7
  %v4191 = vsub.s32 %v4188, %v4190
  %v4192 = vrot.slane %v4178, %v4191
  %v4193 = vcombine.low %v4185, %v4192
  %v4194 = vcombine.low %v3911, %v3912
  %v4196 = vunpack.c.l.s4 1983009808
  %v4197 = vunpack.c.0.s8 %v4196
  %v4198 = vlaneseq
  %v4199 = vshrl.u32 %v4198, 7
  %v4200 = vsub.s32 %v4197, %v4199
  %v4201 = vrot.slane %v4194, %v4200
  %v4203 = vunpack.c.l.s4 1983009808
  %v4204 = vunpack.c.0.s8 %v4203
  %v4205 = vlaneseq
  %v4206 = vshrl.u32 %v4205, 7
  %v4207 = vsub.s32 %v4204, %v4206
  %v4208 = vrot.slane %v3913, %v4207
  %v4209 = vcombine.low %v4201, %v4208
  %v4210 = vcombine.low %v3914, %v3915
  %v4211 = vcombine.low %v3916, %v3917
  %v4213 = vunpack.c.l.s4 1983009808
  %v4214 = vunpack.c.0.s8 %v4213
  %v4215 = vlaneseq
  %v4216 = vshrl.u32 %v4215, 7
  %v4217 = vsub.s32 %v4214, %v4216
  %v4218 = vrot.slane %v4210, %v4217
  %v4220 = vunpack.c.l.s4 1983009808
  %v4221 = vunpack.c.0.s8 %v4220
  %v4222 = vlaneseq
  %v4223 = vshrl.u32 %v4222, 7
  %v4224 = vsub.s32 %v4221, %v4223
  %v4225 = vrot.slane %v4211, %v4224
  %v4226 = vcombine.low %v4218, %v4225
  %v4227 = vcombine.low %v3918, %v3919
  %v4229 = vunpack.c.l.s4 1983009808
  %v4230 = vunpack.c.0.s8 %v4229
  %v4231 = vlaneseq
  %v4232 = vshrl.u32 %v4231, 7
  %v4233 = vsub.s32 %v4230, %v4232
  %v4234 = vrot.slane %v4227, %v4233
  %v4236 = vunpack.c.l.s4 1983009808
  %v4237 = vunpack.c.0.s8 %v4236
  %v4238 = vlaneseq
  %v4239 = vshrl.u32 %v4238, 7
  %v4240 = vsub.s32 %v4237, %v4239
  %v4241 = vrot.slane %v3920, %v4240
  %v4242 = vcombine.low %v4234, %v4241
  %v4259 = vsel %vm2099, %v3995, -inf
  %v4260 = vsel %vm2101, %v4011, -inf
  %v4261 = vmax.f32 %v4259, %v4260
  %v4262 = vrot.slane %v4261, 4
  %v4263 = vmax.f32 %v4261, %v4262
  %v4264 = vrot.slane %v4263, 2
  %v4265 = vmax.f32 %v4263, %v4264
  %v4266 = vrot.slane %v4265, 1
  %v4267 = vmax.f32 %v4265, %v4266
  %v4268 = vsel %vm2099, %v4028, -inf
  %v4269 = vsel %vm2101, %v4044, -inf
  %v4270 = vmax.f32 %v4268, %v4269
  %v4271 = vrot.slane %v4270, 4
  %v4272 = vmax.f32 %v4270, %v4271
  %v4273 = vrot.slane %v4272, 2
  %v4274 = vmax.f32 %v4272, %v4273
  %v4275 = vrot.slane %v4274, 1
  %v4276 = vmax.f32 %v4274, %v4275
  %v4277 = vsel %vm2099, %v4061, -inf
  %v4278 = vsel %vm2101, %v4077, -inf
  %v4279 = vmax.f32 %v4277, %v4278
  %v4280 = vrot.slane %v4279, 4
  %v4281 = vmax.f32 %v4279, %v4280
  %v4282 = vrot.slane %v4281, 2
  %v4283 = vmax.f32 %v4281, %v4282
  %v4284 = vrot.slane %v4283, 1
  %v4285 = vmax.f32 %v4283, %v4284
  %v4286 = vsel %vm2099, %v4094, -inf
  %v4287 = vsel %vm2101, %v4110, -inf
  %v4288 = vmax.f32 %v4286, %v4287
  %v4289 = vrot.slane %v4288, 4
  %v4290 = vmax.f32 %v4288, %v4289
  %v4291 = vrot.slane %v4290, 2
  %v4292 = vmax.f32 %v4290, %v4291
  %v4293 = vrot.slane %v4292, 1
  %v4294 = vmax.f32 %v4292, %v4293
  %v4295 = vsel %vm2099, %v4127, -inf
  %v4296 = vsel %vm2101, %v4143, -inf
  %v4297 = vmax.f32 %v4295, %v4296
  %v4298 = vrot.slane %v4297, 4
  %v4299 = vmax.f32 %v4297, %v4298
  %v4300 = vrot.slane %v4299, 2
  %v4301 = vmax.f32 %v4299, %v4300
  %v4302 = vrot.slane %v4301, 1
  %v4303 = vmax.f32 %v4301, %v4302
  %v4304 = vsel %vm2099, %v4160, -inf
  %v4305 = vsel %vm2101, %v4176, -inf
  %v4306 = vmax.f32 %v4304, %v4305
  %v4307 = vrot.slane %v4306, 4
  %v4308 = vmax.f32 %v4306, %v4307
  %v4309 = vrot.slane %v4308, 2
  %v4310 = vmax.f32 %v4308, %v4309
  %v4311 = vrot.slane %v4310, 1
  %v4312 = vmax.f32 %v4310, %v4311
  %v4313 = vsel %vm2099, %v4193, -inf
  %v4314 = vsel %vm2101, %v4209, -inf
  %v4315 = vmax.f32 %v4313, %v4314
  %v4316 = vrot.slane %v4315, 4
  %v4317 = vmax.f32 %v4315, %v4316
  %v4318 = vrot.slane %v4317, 2
  %v4319 = vmax.f32 %v4317, %v4318
  %v4320 = vrot.slane %v4319, 1
  %v4321 = vmax.f32 %v4319, %v4320
  %v4322 = vsel %vm2099, %v4226, -inf
  %v4323 = vsel %vm2101, %v4242, -inf
  %v4324 = vmax.f32 %v4322, %v4323
  %v4325 = vrot.slane %v4324, 4
  %v4326 = vmax.f32 %v4324, %v4325
  %v4327 = vrot.slane %v4326, 2
  %v4328 = vmax.f32 %v4326, %v4327
  %v4329 = vrot.slane %v4328, 1
  %v4330 = vmax.f32 %v4328, %v4329
  %v4339 = vsel %vm2181, %v4276, %v4267
  %v4340 = vsel %vm2183, %v4285, %v4339
  %v4341 = vsel %vm2185, %v4294, %v4340
  %v4342 = vsel %vm2187, %v4303, %v4341
  %v4343 = vsel %vm2189, %v4312, %v4342
  %v4344 = vsel %vm2191, %v4321, %v4343
  %v4345 = vsel %vm2193, %v4330, %v4344
  %v4347 = vmax.f32 %v3922, %v4345
  %4348 = vst.msk [vmem:[%s3921] sm:$0xff] %vm2099, %v4347
  // Predicated region
  $region34: #{tpu_custom_call.1} parent=0 // pred_check
    %p4349 = pneg %p27
  $region35: #{tpu_custom_call.1} parent=0 // pred_check_branch
    %4351 = sbr.rel (%p4349) target = $region37
  $region36: #{tpu_custom_call.1} parent=0 // pred_region
    %v4352 = vld [vmem:[#allocation2] sm:$0xff]
    %v4353 = vpack.c.bf16 %v4352, %v4352
    %vm4354 = vcmask 519168
    %4355 = vst.msk [vmem:[#allocation3] sm:$0xf] %vm4354, %v4353
    %v4356 = vld [vmem:[%s3921] sm:$0xff]
    %v4357 = vpack.c.bf16 %v4356, %v4356
    %v4359 = vunpack.c.l.b16 %v4357
    %v4360 = vpack.c.b16 %v4359, %v4359
    %4361 = vrot.lane.b32.xlu0 %v4360, 64
    %v4362 = vpop.permute.xlu0 %4361
    %vm4364 = vcmask 1043968
    %4365 = vst.msk [vmem:[#allocation3] sm:$0xf] %vm4364, %v4362
    %v4366 = vld [vmem:[#allocation3] sm:$0xf]
    %v4367 = vld [vmem:[%s3] sm:$0xf]
    %v4368 = vld [vmem:[%s3 + $0x4] sm:$0xf]
    %v4369 = vld [vmem:[%s3 + $0x8] sm:$0xf]
    %v4370 = vld [vmem:[%s3 + $0xc] sm:$0xf]
    %v4371 = vld [vmem:[%s3 + $0x10] sm:$0xf]
    %v4372 = vld [vmem:[%s3 + $0x14] sm:$0xf]
    %v4373 = vld [vmem:[%s3 + $0x18] sm:$0xf]
    %v4374 = vld [vmem:[%s3 + $0x1c] sm:$0xf]
    %v4375 = vld [vmem:[%s3 + $0x20] sm:$0xf]
    %v4376 = vld [vmem:[%s3 + $0x24] sm:$0xf]
    %v4377 = vld [vmem:[%s3 + $0x28] sm:$0xf]
    %v4378 = vld [vmem:[%s3 + $0x2c] sm:$0xf]
    %v4379 = vld [vmem:[%s3 + $0x30] sm:$0xf]
    %v4380 = vld [vmem:[%s3 + $0x34] sm:$0xf]
    %v4381 = vld [vmem:[%s3 + $0x38] sm:$0xf]
    %v4382 = vld [vmem:[%s3 + $0x3c] sm:$0xf]
    %v4383 = vld [vmem:[%s4] sm:$0x1]
    %v4385 = vlaneseq
    %v4386 = vshrl.u32 %v4385, 7
    %v4387 = vsub.s32 0, %v4386
    %v4388 = vrot.slane %v4383, %v4387
    %v4406 = vunpack.c.l.b16 %v4367
    %v4407 = vunpack.c.l.b16 %v4368
    %v4408 = vunpack.c.l.b16 %v4369
    %v4409 = vunpack.c.l.b16 %v4370
    %v4410 = vunpack.c.l.b16 %v4371
    %v4411 = vunpack.c.l.b16 %v4372
    %v4412 = vunpack.c.l.b16 %v4373
    %v4413 = vunpack.c.l.b16 %v4374
    %v4414 = vunpack.c.l.b16 %v4375
    %v4415 = vunpack.c.l.b16 %v4376
    %v4416 = vunpack.c.l.b16 %v4377
    %v4417 = vunpack.c.l.b16 %v4378
    %v4418 = vunpack.c.l.b16 %v4379
    %v4419 = vunpack.c.l.b16 %v4380
    %v4420 = vunpack.c.l.b16 %v4381
    %v4421 = vunpack.c.l.b16 %v4382
    %v4422 = vpack.c.b16 %v4407, %v4406
    %v4423 = vpack.c.b16 %v4409, %v4408
    %v4424 = vpack.c.b16 %v4411, %v4410
    %v4425 = vpack.c.b16 %v4413, %v4412
    %v4426 = vpack.c.b16 %v4415, %v4414
    %v4427 = vpack.c.b16 %v4417, %v4416
    %v4428 = vpack.c.b16 %v4419, %v4418
    %v4429 = vpack.c.b16 %v4421, %v4420
    %4438 = vmatprep.subr.bf16.mxu0 0
    %4439 = vmatpush1.bf16.msra.mxu0 %v4422
    %4440 = vmatprep.subr.bf16.mxu0 0
    %4441 = vmatpush1.bf16.msra.mxu0 %v4423
    %4442 = vmatprep.subr.bf16.mxu0 0
    %4443 = vmatpush1.bf16.msra.mxu0 %v4424
    %4444 = vmatprep.subr.bf16.mxu0 0
    %4445 = vmatpush1.bf16.msra.mxu0 %v4425
    %4446 = vmatprep.subr.bf16.mxu0 0
    %4447 = vmatpush1.bf16.msra.mxu0 %v4426
    %4448 = vmatprep.subr.bf16.mxu0 0
    %4449 = vmatpush1.bf16.msra.mxu0 %v4427
    %4450 = vmatprep.subr.bf16.mxu0 0
    %4451 = vmatpush1.bf16.msra.mxu0 %v4428
    %4452 = vmatprep.subr.bf16.mxu0 0
    %4453 = vmatpush1.bf16.msra.mxu0 %v4429
    %4454 = vmatprep.subr.bf16.mxu0 0
    %4455 = vmatpush1.bf16.msra.mxu0 0
    %4456 = vmatprep.subr.bf16.mxu0 0
    %4457 = vmatpush1.bf16.msra.mxu0 0
    %4458 = vmatprep.subr.bf16.mxu0 0
    %4459 = vmatpush1.bf16.msra.mxu0 0
    %4460 = vmatprep.subr.bf16.mxu0 0
    %4461 = vmatpush1.bf16.msra.mxu0 0
    %4462 = vmatprep.subr.bf16.mxu0 0
    %4463 = vmatpush1.bf16.msra.mxu0 0
    %4464 = vmatprep.subr.bf16.mxu0 0
    %4465 = vmatpush1.bf16.msra.mxu0 0
    %4466 = vmatprep.subr.bf16.mxu0 0
    %4467 = vmatpush1.bf16.msra.mxu0 0
    %4468 = vmatprep.subr.bf16.mxu0 0
    %4469 = vmatpush1.bf16.msra.mxu0 0
    %4470 = vmatprep.mubr.bf16.mxu0 0
    %4471 = vmatmul.mubr.bf16.gmra.mrb[0].mxu0 %v4366
    %v4472 = vpop.f32.mrb[0].mxu0
    %v4473 = vadd.f32 %v4388, %v4472
    %v4474 = vpop.f32.mrb[0].mxu0
    %v4475 = vpop.f32.mrb[0].mxu0
    %v4476 = vpop.f32.mrb[0].mxu0
    %4477 = vdwg.mxu0
    %v4478 = vmax.f32 %v4473, 0.0
    %v4479 = vpack.c.bf16 %v4478, %v4478
    %v4480 = vld [vmem:[%s5] sm:$0xf]
    %v4481 = vld [vmem:[%s5 + $0x4] sm:$0xf]
    %v4482 = vld [vmem:[%s5 + $0x8] sm:$0xf]
    %v4483 = vld [vmem:[%s5 + $0xc] sm:$0xf]
    %v4484 = vld [vmem:[%s6] sm:$0x1]
    %v4486 = vlaneseq
    %v4487 = vshrl.u32 %v4486, 7
    %v4488 = vsub.s32 0, %v4487
    %v4489 = vrot.slane %v4484, %v4488
    %v4495 = vunpack.c.l.b16 %v4480
    %v4496 = vunpack.c.l.b16 %v4481
    %v4497 = vunpack.c.l.b16 %v4482
    %v4498 = vunpack.c.l.b16 %v4483
    %v4499 = vpack.c.b16 %v4496, %v4495
    %v4500 = vpack.c.b16 %v4498, %v4497
    %vm4503 = vcmask 261120
    %v4505 = vsel %vm4503, %v4479, 0
    %4507 = vmatprep.subr.bf16.mxu0 0
    %4508 = vmatpush1.bf16.msra.mxu0 %v4499
    %4509 = vmatprep.subr.bf16.mxu0 0
    %4510 = vmatpush1.bf16.msra.mxu0 %v4500
    %4511 = vmatprep.subr.bf16.mxu0 0
    %4512 = vmatpush1.bf16.msra.mxu0 0
    %4513 = vmatprep.subr.bf16.mxu0 0
    %4514 = vmatpush1.bf16.msra.mxu0 0
    %4515 = vmatprep.subr.bf16.mxu0 0
    %4516 = vmatpush1.bf16.msra.mxu0 0
    %4517 = vmatprep.subr.bf16.mxu0 0
    %4518 = vmatpush1.bf16.msra.mxu0 0
    %4519 = vmatprep.subr.bf16.mxu0 0
    %4520 = vmatpush1.bf16.msra.mxu0 0
    %4521 = vmatprep.subr.bf16.mxu0 0
    %4522 = vmatpush1.bf16.msra.mxu0 0
    %4523 = vmatprep.subr.bf16.mxu0 0
    %4524 = vmatpush1.bf16.msra.mxu0 0
    %4525 = vmatprep.subr.bf16.mxu0 0
    %4526 = vmatpush1.bf16.msra.mxu0 0
    %4527 = vmatprep.subr.bf16.mxu0 0
    %4528 = vmatpush1.bf16.msra.mxu0 0
    %4529 = vmatprep.subr.bf16.mxu0 0
    %4530 = vmatpush1.bf16.msra.mxu0 0
    %4531 = vmatprep.subr.bf16.mxu0 0
    %4532 = vmatpush1.bf16.msra.mxu0 0
    %4533 = vmatprep.subr.bf16.mxu0 0
    %4534 = vmatpush1.bf16.msra.mxu0 0
    %4535 = vmatprep.subr.bf16.mxu0 0
    %4536 = vmatpush1.bf16.msra.mxu0 0
    %4537 = vmatprep.subr.bf16.mxu0 0
    %4538 = vmatpush1.bf16.msra.mxu0 0
    %4539 = vmatprep.mubr.bf16.mxu0 0
    %4540 = vmatmul.mubr.bf16.gmra.mrb[0].mxu0 %v4505
    %v4541 = vpop.f32.mrb[0].mxu0
    %v4542 = vadd.f32 %v4489, %v4541
    %v4543 = vpop.f32.mrb[0].mxu0
    %v4544 = vpop.f32.mrb[0].mxu0
    %v4545 = vpop.f32.mrb[0].mxu0
    %4546 = vdwg.mxu0
    %vm4547 = vcmask 15360
    %4548 = vst.msk [vmem:[%s7] sm:$0xff] %vm4547, %v4542
  $region37: #{tpu_custom_call.1} parent=0 // pred_fallthru
    _
  // Predicated region
  $region38: #{tpu_custom_call.1} parent=0 // pred_check
    _
  $region39: #{tpu_custom_call.1} parent=0 // pred_check_branch
    %4550 = sbr.rel (0) target = $region41
  $region40: #{tpu_custom_call.1} parent=0 // pred_region
    _
  $region41: #{tpu_custom_call.1} parent=0 // pred_fallthru
    _
  // Predicated region
  $region42: #{tpu_custom_call.1} parent=0 // pred_check
    _
  $region43: #{tpu_custom_call.1} parent=0 // pred_check_branch
    %4552 = sbr.rel (0) target = $region45
  $region44: #{tpu_custom_call.1} parent=0 // pred_region
    _
  $region45: #{tpu_custom_call.1} parent=0 // pred_fallthru
    _

</llo_original>
